<compile_context>
chip_gen: v6e
topology: v6e:2x2x1
jax: 0.10.0
libtpu: 0.0.40
codegen_flags: <defaults>
</compile_context>

<pallas_src>
import functools

import jax
import jax.numpy as jnp
from jax.experimental import pallas as pl
from jax.experimental.pallas import tpu as pltpu


# --------------------------------------------------------------------------
# Fused NetG kernel
# --------------------------------------------------------------------------
def _netg_kernel(*refs, T, B, H, L):
    # refs layout:
    #   [xp(TB,D), xf(TB,D), noise(L,B,H), fc_w(D,E), fc_b(1,E),
    #    L x encoder (wih(in,3H), whh(H,3H), bx(1,3H), bhn(1,H)),
    #    L x decoder (wih(in,3H), whh(H,3H), bx(1,3H), bhn(1,H)),
    #    fc2_w(H,D), fc2_b(1,D),
    #    out(TB,D),                      <- output ref
    #    seq_scr(TB,H)]                  <- VMEM scratch (per-layer sequence buffer)
    n_in = 5 + 8 * L + 2
    xp_ref, xf_ref, noise_ref, fcw_ref, fcb_ref = refs[:5]
    enc = [refs[5 + 4 * l: 5 + 4 * l + 4] for l in range(L)]
    dec = [refs[5 + 4 * L + 4 * l: 5 + 4 * L + 4 * l + 4] for l in range(L)]
    fc2w_ref, fc2b_ref = refs[5 + 8 * L: 5 + 8 * L + 2]
    out_ref = refs[n_in]
    seq_scr = refs[n_in + 1]

    f32 = jnp.float32
    TB = T * B
    H3 = 3 * H

    def gru_layer(gx_fn, whh_ref, bhn_ref, h0, store_seq):
        """Recurrence only: gx_fn(t) -> (B, 3H) precomputed input projection."""
        whh = whh_ref[...]          # (H, 3H) loaded once, reused every step
        bhn = bhn_ref[...]          # (1, H)
        h = h0
        for t in range(T):          # T is static & small -> fully unrolled
            gx = gx_fn(t)
            gh = jnp.dot(h, whh, preferred_element_type=f32)      # one MXU push / step
            r = jax.nn.sigmoid(gx[:, 0:H] + gh[:, 0:H])
            z = jax.nn.sigmoid(gx[:, H:2 * H] + gh[:, H:2 * H])
            n = jnp.tanh(gx[:, 2 * H:H3] + r * (gh[:, 2 * H:H3] + bhn))
            h = (1.0 - z) * n + z * h
            if store_seq:
                seq_scr[t * B:(t + 1) * B, :] = h
        return h

    fcw = fcw_ref[...]
    fcb = fcb_ref[...]

    # Hoisted fc + ReLU embedding of both sequences (parallel over all T time steps).
    emb_p = jnp.maximum(jnp.dot(xp_ref[...], fcw, preferred_element_type=f32) + fcb, 0.0)
    emb_f = jnp.maximum(jnp.dot(xf_ref[...], fcw, preferred_element_type=f32) + fcb, 0.0)

    # ------------------------------ encoder -------------------------------
    h0 = jnp.zeros((B, H), f32)
    seq_in = emb_p
    enc_h = []                       # final hidden per layer (torch h_t)
    for l in range(L):
        wih_ref, whh_ref, bx_ref, bhn_ref = enc[l]
        gx_all = jnp.dot(seq_in, wih_ref[...], preferred_element_type=f32) + bx_ref[...]
        last = (l == L - 1)
        h_fin = gru_layer(lambda t, g=gx_all: g[t * B:(t + 1) * B, :],
                          whh_ref, bhn_ref, h0, store_seq=not last)
        enc_h.append(h_fin)
        if not last:
            seq_in = seq_scr[...]    # snapshot before next layer overwrites it

    # ------------------------------ decoder -------------------------------
    for l in range(L):
        wih_ref, whh_ref, bx_ref, bhn_ref = dec[l]
        bx = bx_ref[...]
        if l == 0:
            # layer-0 input = embedded X_f shifted right one step (zeros at t=0);
            # the shift is applied purely by indexing the hoisted projection.
            gx_all = jnp.dot(emb_f, wih_ref[...], preferred_element_type=f32) + bx

            def gx_fn(t, g=gx_all, b=bx):
                if t == 0:
                    return jnp.broadcast_to(b, (B, H3))   # x_0 = 0  ->  proj = bias
                return g[(t - 1) * B:t * B, :]
        else:
            gx_all = (jnp.dot(seq_scr[...], wih_ref[...], preferred_element_type=f32)
                      + bx)

            def gx_fn(t, g=gx_all):
                return g[t * B:(t + 1) * B, :]

        h0_dec = enc_h[l] + noise_ref[l]                  # hidden = h_t + noise
        gru_layer(gx_fn, whh_ref, bhn_ref, h0_dec, store_seq=True)

    # --------------------- output linear (no ReLU in NetG) ----------------
    out_ref[...] = (jnp.dot(seq_scr[...], fc2w_ref[...], preferred_element_type=f32)
                    + fc2b_ref[...]).astype(out_ref.dtype)


# --------------------------------------------------------------------------
# Wrapper
# --------------------------------------------------------------------------
def netg_forward(X_p, X_f, noise, params):
    B, T, D = X_p.shape
    H = params["fc2_w"].shape[0]
    L = len(params["enc"])
    TB = T * B

    # Time-major flatten (row = t*B + b).  Only the tiny data_dim-wide tensors touch
    # HBM transposes; all wide intermediates live inside the fused kernel / VMEM.
    xp = jnp.transpose(X_p, (1, 0, 2)).reshape(TB, D)
    xf = jnp.transpose(X_f, (1, 0, 2)).reshape(TB, D)

    args = [xp, xf, noise, params["fc_w"], params["fc_b"]]
    for lyr in params["enc"]:
        args += [lyr["wih"], lyr["whh"], lyr["bx"], lyr["bhn"]]
    for lyr in params["dec"]:
        args += [lyr["wih"], lyr["whh"], lyr["bx"], lyr["bhn"]]
    args += [params["fc2_w"], params["fc2_b"]]

    kernel = functools.partial(_netg_kernel, T=T, B=B, H=H, L=L)
    out_flat = pl.pallas_call(
        kernel,
        out_shape=jax.ShapeDtypeStruct((TB, D), jnp.float32),
        scratch_shapes=[pltpu.VMEM((TB, H), jnp.float32)],   # per-layer sequence buffer
    )(*args)

    return jnp.transpose(out_flat.reshape(T, B, D), (1, 0, 2))       # (B, T, D)


# --------------------------------------------------------------------------
# Parameter init (PyTorch-like uniform ranges; concatenated gate layout r|z|n,
# with combined biases: bx = b_ih + [b_hr, b_hz, 0],  bhn = b_hn)
# --------------------------------------------------------------------------
def init_params(key, data_dim, emb_dim, hid_dim, num_layers):
    keys = iter(jax.random.split(key, 4 + 8 * num_layers))

    def u(k, shape, fan_in):
        bound = float(fan_in) ** -0.5
        return jax.random.uniform(k, shape, jnp.float32, -bound, bound)

    p = {}
    p["fc_w"] = u(next(keys), (data_dim, emb_dim), data_dim)      # fc: data_dim -> emb
    p["fc_b"] = u(next(keys), (1, emb_dim), data_dim)
    p["fc2_w"] = u(next(keys), (hid_dim, data_dim), hid_dim)      # fc_layer: hid -> data
    p["fc2_b"] = u(next(keys), (1, data_dim), hid_dim)

    def gru_stack(in_dim, h):
        layers = []
        for l in range(num_layers):
            d = in_dim if l == 0 else h
            layers.append(dict(
                wih=u(next(keys), (d, 3 * h), h),
                whh=u(next(keys), (h, 3 * h), h),
                bx=u(next(keys), (1, 3 * h), h),
                bhn=u(next(keys), (1, h), h),
            ))
        return layers

    p["enc"] = gru_stack(emb_dim, hid_dim)    # rnn_enc_layer: GRU(emb_dim, hid_dim)
    p["dec"] = gru_stack(emb_dim, hid_dim)    # rnn_dec_layer: GRU(emb_dim, hid_dim)
    return p


# --------------------------------------------------------------------------
# Pure-JAX reference (same math, lax.scan GRU) for correctness check
# --------------------------------------------------------------------------
def _gru_scan_ref(x_tm, wih, whh, bx, bhn, h0):
    H = whh.shape[0]

    def step(h, x_t):
        gx = x_t @ wih + bx
        gh = h @ whh
        r = jax.nn.sigmoid(gx[:, :H] + gh[:, :H])
        z = jax.nn.sigmoid(gx[:, H:2 * H] + gh[:, H:2 * H])
        n = jnp.tanh(gx[:, 2 * H:] + r * (gh[:, 2 * H:] + bhn))
        h_new = (1.0 - z) * n + z * h
        return h_new, h_new

    h_T, ys = jax.lax.scan(step, h0, x_tm)
    return ys, h_T


def netg_ref(X_p, X_f, noise, params):
    B, T, D = X_p.shape
    E = params["fc_w"].shape[1]
    H = params["fc2_w"].shape[0]
    emb_p = jnp.maximum(X_p @ params["fc_w"] + params["fc_b"], 0.0)
    emb_f = jnp.maximum(X_f @ params["fc_w"] + params["fc_b"], 0.0)

    seq = jnp.transpose(emb_p, (1, 0, 2))                 # (T, B, E)
    h0 = jnp.zeros((B, H), jnp.float32)
    h_finals = []
    for lyr in params["enc"]:
        seq, h_T = _gru_scan_ref(seq, lyr["wih"], lyr["whh"], lyr["bx"], lyr["bhn"], h0)
        h_finals.append(h_T)

    emb_f_tm = jnp.transpose(emb_f, (1, 0, 2))            # (T, B, E)
    seq = jnp.concatenate([jnp.zeros((1, B, E), jnp.float32), emb_f_tm[:-1]], axis=0)
    for l, lyr in enumerate(params["dec"]):
        seq, _ = _gru_scan_ref(seq, lyr["wih"], lyr["whh"], lyr["bx"], lyr["bhn"],
                               h_finals[l] + noise[l])

    out = seq @ params["fc2_w"] + params["fc2_b"]         # (T, B, D)
    return jnp.transpose(out, (1, 0, 2))                  # (B, T, D)


# --------------------------------------------------------------------------
if __name__ == "__main__":
    cfg = dict(data_dim=4, emb_dim=32, RNN_hid_dim=32, num_layers=1)
    B, T = 2, 8

    key = jax.random.PRNGKey(0)
    k_p, k_xp, k_xf, k_n = jax.random.split(key, 4)
    X_p = jax.random.normal(k_xp, (B, T, cfg["data_dim"]), jnp.float32)
    X_f = jax.random.normal(k_xf, (B, T, cfg["data_dim"]), jnp.float32)
    noise = 0.1 * jax.random.normal(
        k_n, (cfg["num_layers"], B, cfg["RNN_hid_dim"]), jnp.float32)
    params = init_params(k_p, cfg["data_dim"], cfg["emb_dim"],
                         cfg["RNN_hid_dim"], cfg["num_layers"])

    fwd = jax.jit(functools.partial(netg_forward, params=params))
    out = fwd(X_p, X_f, noise)
    jax.block_until_ready(out)

    out_ref = netg_ref(X_p, X_f, noise, params)
    assert out.shape == (B, T, cfg["data_dim"])
    err = float(jnp.max(jnp.abs(out - out_ref)))
    assert jnp.allclose(out, out_ref, rtol=1e-4, atol=1e-5), err

    print("KERNEL_OK")
</pallas_src>

<mosaic_0001>
module attributes {stable_mosaic.version = 11 : i64} {
  func.func @_netg_kernel(%arg0: memref<16x4xf32, #tpu.memory_space<vmem>>, %arg1: memref<16x4xf32, #tpu.memory_space<vmem>>, %arg2: memref<1x2x32xf32, #tpu.memory_space<vmem>>, %arg3: memref<4x32xf32, #tpu.memory_space<vmem>>, %arg4: memref<1x32xf32, #tpu.memory_space<vmem>>, %arg5: memref<32x96xf32, #tpu.memory_space<vmem>>, %arg6: memref<32x96xf32, #tpu.memory_space<vmem>>, %arg7: memref<1x96xf32, #tpu.memory_space<vmem>>, %arg8: memref<1x32xf32, #tpu.memory_space<vmem>>, %arg9: memref<32x96xf32, #tpu.memory_space<vmem>>, %arg10: memref<32x96xf32, #tpu.memory_space<vmem>>, %arg11: memref<1x96xf32, #tpu.memory_space<vmem>>, %arg12: memref<1x32xf32, #tpu.memory_space<vmem>>, %arg13: memref<32x4xf32, #tpu.memory_space<vmem>>, %arg14: memref<1x4xf32, #tpu.memory_space<vmem>>, %arg15: memref<16x4xf32, #tpu.memory_space<vmem>>, %arg16: memref<16x32xf32, #tpu.memory_space<vmem>>) attributes {dimension_semantics = [], scalar_prefetch = 0 : i64, scratch_operands = 1 : i64, tpu.core_type = #tpu.core_type<tc>} {
    %c0 = arith.constant 0 : index
    %c0_0 = arith.constant 0 : index
    %0 = vector.load %arg3[%c0, %c0_0] : memref<4x32xf32, #tpu.memory_space<vmem>>, vector<4x32xf32>
    %c0_1 = arith.constant 0 : index
    %c0_2 = arith.constant 0 : index
    %1 = vector.load %arg4[%c0_1, %c0_2] : memref<1x32xf32, #tpu.memory_space<vmem>>, vector<1x32xf32>
    %c0_3 = arith.constant 0 : index
    %c0_4 = arith.constant 0 : index
    %2 = vector.load %arg0[%c0_3, %c0_4] : memref<16x4xf32, #tpu.memory_space<vmem>>, vector<16x4xf32>
    %cst = arith.constant dense<0.000000e+00> : vector<16x32xf32>
    %3 = tpu.matmul %2, %0, %cst {dimension_numbers = #tpu.dot_dimension_numbers<[1], [0], [0], [1], [0, 0, 1, 1], [], []>} : vector<16x4xf32>, vector<4x32xf32>, vector<16x32xf32> -> vector<16x32xf32>
    %4 = vector.broadcast %1 : vector<1x32xf32> to vector<16x32xf32>
    %5 = arith.addf %3, %4 : vector<16x32xf32>
    %cst_5 = arith.constant 0.000000e+00 : f32
    %6 = vector.broadcast %cst_5 : f32 to vector<16x32xf32>
    %7 = arith.maximumf %5, %6 : vector<16x32xf32>
    %c0_6 = arith.constant 0 : index
    %c0_7 = arith.constant 0 : index
    %8 = vector.load %arg1[%c0_6, %c0_7] : memref<16x4xf32, #tpu.memory_space<vmem>>, vector<16x4xf32>
    %cst_8 = arith.constant dense<0.000000e+00> : vector<16x32xf32>
    %9 = tpu.matmul %8, %0, %cst_8 {dimension_numbers = #tpu.dot_dimension_numbers<[1], [0], [0], [1], [0, 0, 1, 1], [], []>} : vector<16x4xf32>, vector<4x32xf32>, vector<16x32xf32> -> vector<16x32xf32>
    %10 = vector.broadcast %1 : vector<1x32xf32> to vector<16x32xf32>
    %11 = arith.addf %9, %10 : vector<16x32xf32>
    %cst_9 = arith.constant 0.000000e+00 : f32
    %12 = vector.broadcast %cst_9 : f32 to vector<16x32xf32>
    %13 = arith.maximumf %11, %12 : vector<16x32xf32>
    %cst_10 = arith.constant 0.000000e+00 : f32
    %14 = vector.broadcast %cst_10 : f32 to vector<2x32xf32>
    %c0_11 = arith.constant 0 : index
    %c0_12 = arith.constant 0 : index
    %15 = vector.load %arg5[%c0_11, %c0_12] : memref<32x96xf32, #tpu.memory_space<vmem>>, vector<32x96xf32>
    %cst_13 = arith.constant dense<0.000000e+00> : vector<16x96xf32>
    %16 = tpu.matmul %7, %15, %cst_13 {dimension_numbers = #tpu.dot_dimension_numbers<[1], [0], [0], [1], [0, 0, 1, 1], [], []>} : vector<16x32xf32>, vector<32x96xf32>, vector<16x96xf32> -> vector<16x96xf32>
    %c0_14 = arith.constant 0 : index
    %c0_15 = arith.constant 0 : index
    %17 = vector.load %arg7[%c0_14, %c0_15] : memref<1x96xf32, #tpu.memory_space<vmem>>, vector<1x96xf32>
    %18 = vector.broadcast %17 : vector<1x96xf32> to vector<16x96xf32>
    %19 = arith.addf %16, %18 : vector<16x96xf32>
    %c0_16 = arith.constant 0 : index
    %c0_17 = arith.constant 0 : index
    %20 = vector.load %arg6[%c0_16, %c0_17] : memref<32x96xf32, #tpu.memory_space<vmem>>, vector<32x96xf32>
    %c0_18 = arith.constant 0 : index
    %c0_19 = arith.constant 0 : index
    %21 = vector.load %arg8[%c0_18, %c0_19] : memref<1x32xf32, #tpu.memory_space<vmem>>, vector<1x32xf32>
    %22 = vector.extract_strided_slice %19 {offsets = [0, 0], sizes = [2, 96], strides = [1, 1]} : vector<16x96xf32> to vector<2x96xf32>
    %cst_20 = arith.constant dense<0.000000e+00> : vector<2x96xf32>
    %23 = tpu.matmul %14, %20, %cst_20 {dimension_numbers = #tpu.dot_dimension_numbers<[1], [0], [0], [1], [0, 0, 1, 1], [], []>} : vector<2x32xf32>, vector<32x96xf32>, vector<2x96xf32> -> vector<2x96xf32>
    %24 = vector.extract_strided_slice %22 {offsets = [0, 0], sizes = [2, 32], strides = [1, 1]} : vector<2x96xf32> to vector<2x32xf32>
    %25 = vector.extract_strided_slice %23 {offsets = [0, 0], sizes = [2, 32], strides = [1, 1]} : vector<2x96xf32> to vector<2x32xf32>
    %26 = arith.addf %24, %25 : vector<2x32xf32>
    %27 = arith.negf %26 : vector<2x32xf32>
    %28 = math.exp %27 : vector<2x32xf32>
    %cst_21 = arith.constant 1.000000e+00 : f32
    %29 = vector.broadcast %cst_21 : f32 to vector<2x32xf32>
    %30 = arith.addf %29, %28 : vector<2x32xf32>
    %31 = arith.divf %29, %30 : vector<2x32xf32>
    %32 = vector.extract_strided_slice %22 {offsets = [0, 32], sizes = [2, 32], strides = [1, 1]} : vector<2x96xf32> to vector<2x32xf32>
    %33 = vector.extract_strided_slice %23 {offsets = [0, 32], sizes = [2, 32], strides = [1, 1]} : vector<2x96xf32> to vector<2x32xf32>
    %34 = arith.addf %32, %33 : vector<2x32xf32>
    %35 = arith.negf %34 : vector<2x32xf32>
    %36 = math.exp %35 : vector<2x32xf32>
    %cst_22 = arith.constant 1.000000e+00 : f32
    %37 = vector.broadcast %cst_22 : f32 to vector<2x32xf32>
    %38 = arith.addf %37, %36 : vector<2x32xf32>
    %39 = arith.divf %37, %38 : vector<2x32xf32>
    %40 = vector.extract_strided_slice %22 {offsets = [0, 64], sizes = [2, 32], strides = [1, 1]} : vector<2x96xf32> to vector<2x32xf32>
    %41 = vector.extract_strided_slice %23 {offsets = [0, 64], sizes = [2, 32], strides = [1, 1]} : vector<2x96xf32> to vector<2x32xf32>
    %42 = vector.broadcast %21 : vector<1x32xf32> to vector<2x32xf32>
    %43 = arith.addf %41, %42 : vector<2x32xf32>
    %44 = arith.mulf %31, %43 : vector<2x32xf32>
    %45 = arith.addf %40, %44 : vector<2x32xf32>
    %46 = math.tanh %45 : vector<2x32xf32>
    %cst_23 = arith.constant 1.000000e+00 : f32
    %47 = vector.broadcast %cst_23 : f32 to vector<2x32xf32>
    %48 = arith.subf %47, %39 : vector<2x32xf32>
    %49 = arith.mulf %48, %46 : vector<2x32xf32>
    %50 = arith.mulf %39, %14 : vector<2x32xf32>
    %51 = arith.addf %49, %50 : vector<2x32xf32>
    %52 = vector.extract_strided_slice %19 {offsets = [2, 0], sizes = [2, 96], strides = [1, 1]} : vector<16x96xf32> to vector<2x96xf32>
    %cst_24 = arith.constant dense<0.000000e+00> : vector<2x96xf32>
    %53 = tpu.matmul %51, %20, %cst_24 {dimension_numbers = #tpu.dot_dimension_numbers<[1], [0], [0], [1], [0, 0, 1, 1], [], []>} : vector<2x32xf32>, vector<32x96xf32>, vector<2x96xf32> -> vector<2x96xf32>
    %54 = vector.extract_strided_slice %52 {offsets = [0, 0], sizes = [2, 32], strides = [1, 1]} : vector<2x96xf32> to vector<2x32xf32>
    %55 = vector.extract_strided_slice %53 {offsets = [0, 0], sizes = [2, 32], strides = [1, 1]} : vector<2x96xf32> to vector<2x32xf32>
    %56 = arith.addf %54, %55 : vector<2x32xf32>
    %57 = arith.negf %56 : vector<2x32xf32>
    %58 = math.exp %57 : vector<2x32xf32>
    %cst_25 = arith.constant 1.000000e+00 : f32
    %59 = vector.broadcast %cst_25 : f32 to vector<2x32xf32>
    %60 = arith.addf %59, %58 : vector<2x32xf32>
    %61 = arith.divf %59, %60 : vector<2x32xf32>
    %62 = vector.extract_strided_slice %52 {offsets = [0, 32], sizes = [2, 32], strides = [1, 1]} : vector<2x96xf32> to vector<2x32xf32>
    %63 = vector.extract_strided_slice %53 {offsets = [0, 32], sizes = [2, 32], strides = [1, 1]} : vector<2x96xf32> to vector<2x32xf32>
    %64 = arith.addf %62, %63 : vector<2x32xf32>
    %65 = arith.negf %64 : vector<2x32xf32>
    %66 = math.exp %65 : vector<2x32xf32>
    %cst_26 = arith.constant 1.000000e+00 : f32
    %67 = vector.broadcast %cst_26 : f32 to vector<2x32xf32>
    %68 = arith.addf %67, %66 : vector<2x32xf32>
    %69 = arith.divf %67, %68 : vector<2x32xf32>
    %70 = vector.extract_strided_slice %52 {offsets = [0, 64], sizes = [2, 32], strides = [1, 1]} : vector<2x96xf32> to vector<2x32xf32>
    %71 = vector.extract_strided_slice %53 {offsets = [0, 64], sizes = [2, 32], strides = [1, 1]} : vector<2x96xf32> to vector<2x32xf32>
    %72 = vector.broadcast %21 : vector<1x32xf32> to vector<2x32xf32>
    %73 = arith.addf %71, %72 : vector<2x32xf32>
    %74 = arith.mulf %61, %73 : vector<2x32xf32>
    %75 = arith.addf %70, %74 : vector<2x32xf32>
    %76 = math.tanh %75 : vector<2x32xf32>
    %cst_27 = arith.constant 1.000000e+00 : f32
    %77 = vector.broadcast %cst_27 : f32 to vector<2x32xf32>
    %78 = arith.subf %77, %69 : vector<2x32xf32>
    %79 = arith.mulf %78, %76 : vector<2x32xf32>
    %80 = arith.mulf %69, %51 : vector<2x32xf32>
    %81 = arith.addf %79, %80 : vector<2x32xf32>
    %82 = vector.extract_strided_slice %19 {offsets = [4, 0], sizes = [2, 96], strides = [1, 1]} : vector<16x96xf32> to vector<2x96xf32>
    %cst_28 = arith.constant dense<0.000000e+00> : vector<2x96xf32>
    %83 = tpu.matmul %81, %20, %cst_28 {dimension_numbers = #tpu.dot_dimension_numbers<[1], [0], [0], [1], [0, 0, 1, 1], [], []>} : vector<2x32xf32>, vector<32x96xf32>, vector<2x96xf32> -> vector<2x96xf32>
    %84 = vector.extract_strided_slice %82 {offsets = [0, 0], sizes = [2, 32], strides = [1, 1]} : vector<2x96xf32> to vector<2x32xf32>
    %85 = vector.extract_strided_slice %83 {offsets = [0, 0], sizes = [2, 32], strides = [1, 1]} : vector<2x96xf32> to vector<2x32xf32>
    %86 = arith.addf %84, %85 : vector<2x32xf32>
    %87 = arith.negf %86 : vector<2x32xf32>
    %88 = math.exp %87 : vector<2x32xf32>
    %cst_29 = arith.constant 1.000000e+00 : f32
    %89 = vector.broadcast %cst_29 : f32 to vector<2x32xf32>
    %90 = arith.addf %89, %88 : vector<2x32xf32>
    %91 = arith.divf %89, %90 : vector<2x32xf32>
    %92 = vector.extract_strided_slice %82 {offsets = [0, 32], sizes = [2, 32], strides = [1, 1]} : vector<2x96xf32> to vector<2x32xf32>
    %93 = vector.extract_strided_slice %83 {offsets = [0, 32], sizes = [2, 32], strides = [1, 1]} : vector<2x96xf32> to vector<2x32xf32>
    %94 = arith.addf %92, %93 : vector<2x32xf32>
    %95 = arith.negf %94 : vector<2x32xf32>
    %96 = math.exp %95 : vector<2x32xf32>
    %cst_30 = arith.constant 1.000000e+00 : f32
    %97 = vector.broadcast %cst_30 : f32 to vector<2x32xf32>
    %98 = arith.addf %97, %96 : vector<2x32xf32>
    %99 = arith.divf %97, %98 : vector<2x32xf32>
    %100 = vector.extract_strided_slice %82 {offsets = [0, 64], sizes = [2, 32], strides = [1, 1]} : vector<2x96xf32> to vector<2x32xf32>
    %101 = vector.extract_strided_slice %83 {offsets = [0, 64], sizes = [2, 32], strides = [1, 1]} : vector<2x96xf32> to vector<2x32xf32>
    %102 = vector.broadcast %21 : vector<1x32xf32> to vector<2x32xf32>
    %103 = arith.addf %101, %102 : vector<2x32xf32>
    %104 = arith.mulf %91, %103 : vector<2x32xf32>
    %105 = arith.addf %100, %104 : vector<2x32xf32>
    %106 = math.tanh %105 : vector<2x32xf32>
    %cst_31 = arith.constant 1.000000e+00 : f32
    %107 = vector.broadcast %cst_31 : f32 to vector<2x32xf32>
    %108 = arith.subf %107, %99 : vector<2x32xf32>
    %109 = arith.mulf %108, %106 : vector<2x32xf32>
    %110 = arith.mulf %99, %81 : vector<2x32xf32>
    %111 = arith.addf %109, %110 : vector<2x32xf32>
    %112 = vector.extract_strided_slice %19 {offsets = [6, 0], sizes = [2, 96], strides = [1, 1]} : vector<16x96xf32> to vector<2x96xf32>
    %cst_32 = arith.constant dense<0.000000e+00> : vector<2x96xf32>
    %113 = tpu.matmul %111, %20, %cst_32 {dimension_numbers = #tpu.dot_dimension_numbers<[1], [0], [0], [1], [0, 0, 1, 1], [], []>} : vector<2x32xf32>, vector<32x96xf32>, vector<2x96xf32> -> vector<2x96xf32>
    %114 = vector.extract_strided_slice %112 {offsets = [0, 0], sizes = [2, 32], strides = [1, 1]} : vector<2x96xf32> to vector<2x32xf32>
    %115 = vector.extract_strided_slice %113 {offsets = [0, 0], sizes = [2, 32], strides = [1, 1]} : vector<2x96xf32> to vector<2x32xf32>
    %116 = arith.addf %114, %115 : vector<2x32xf32>
    %117 = arith.negf %116 : vector<2x32xf32>
    %118 = math.exp %117 : vector<2x32xf32>
    %cst_33 = arith.constant 1.000000e+00 : f32
    %119 = vector.broadcast %cst_33 : f32 to vector<2x32xf32>
    %120 = arith.addf %119, %118 : vector<2x32xf32>
    %121 = arith.divf %119, %120 : vector<2x32xf32>
    %122 = vector.extract_strided_slice %112 {offsets = [0, 32], sizes = [2, 32], strides = [1, 1]} : vector<2x96xf32> to vector<2x32xf32>
    %123 = vector.extract_strided_slice %113 {offsets = [0, 32], sizes = [2, 32], strides = [1, 1]} : vector<2x96xf32> to vector<2x32xf32>
    %124 = arith.addf %122, %123 : vector<2x32xf32>
    %125 = arith.negf %124 : vector<2x32xf32>
    %126 = math.exp %125 : vector<2x32xf32>
    %cst_34 = arith.constant 1.000000e+00 : f32
    %127 = vector.broadcast %cst_34 : f32 to vector<2x32xf32>
    %128 = arith.addf %127, %126 : vector<2x32xf32>
    %129 = arith.divf %127, %128 : vector<2x32xf32>
    %130 = vector.extract_strided_slice %112 {offsets = [0, 64], sizes = [2, 32], strides = [1, 1]} : vector<2x96xf32> to vector<2x32xf32>
    %131 = vector.extract_strided_slice %113 {offsets = [0, 64], sizes = [2, 32], strides = [1, 1]} : vector<2x96xf32> to vector<2x32xf32>
    %132 = vector.broadcast %21 : vector<1x32xf32> to vector<2x32xf32>
    %133 = arith.addf %131, %132 : vector<2x32xf32>
    %134 = arith.mulf %121, %133 : vector<2x32xf32>
    %135 = arith.addf %130, %134 : vector<2x32xf32>
    %136 = math.tanh %135 : vector<2x32xf32>
    %cst_35 = arith.constant 1.000000e+00 : f32
    %137 = vector.broadcast %cst_35 : f32 to vector<2x32xf32>
    %138 = arith.subf %137, %129 : vector<2x32xf32>
    %139 = arith.mulf %138, %136 : vector<2x32xf32>
    %140 = arith.mulf %129, %111 : vector<2x32xf32>
    %141 = arith.addf %139, %140 : vector<2x32xf32>
    %142 = vector.extract_strided_slice %19 {offsets = [8, 0], sizes = [2, 96], strides = [1, 1]} : vector<16x96xf32> to vector<2x96xf32>
    %cst_36 = arith.constant dense<0.000000e+00> : vector<2x96xf32>
    %143 = tpu.matmul %141, %20, %cst_36 {dimension_numbers = #tpu.dot_dimension_numbers<[1], [0], [0], [1], [0, 0, 1, 1], [], []>} : vector<2x32xf32>, vector<32x96xf32>, vector<2x96xf32> -> vector<2x96xf32>
    %144 = vector.extract_strided_slice %142 {offsets = [0, 0], sizes = [2, 32], strides = [1, 1]} : vector<2x96xf32> to vector<2x32xf32>
    %145 = vector.extract_strided_slice %143 {offsets = [0, 0], sizes = [2, 32], strides = [1, 1]} : vector<2x96xf32> to vector<2x32xf32>
    %146 = arith.addf %144, %145 : vector<2x32xf32>
    %147 = arith.negf %146 : vector<2x32xf32>
    %148 = math.exp %147 : vector<2x32xf32>
    %cst_37 = arith.constant 1.000000e+00 : f32
    %149 = vector.broadcast %cst_37 : f32 to vector<2x32xf32>
    %150 = arith.addf %149, %148 : vector<2x32xf32>
    %151 = arith.divf %149, %150 : vector<2x32xf32>
    %152 = vector.extract_strided_slice %142 {offsets = [0, 32], sizes = [2, 32], strides = [1, 1]} : vector<2x96xf32> to vector<2x32xf32>
    %153 = vector.extract_strided_slice %143 {offsets = [0, 32], sizes = [2, 32], strides = [1, 1]} : vector<2x96xf32> to vector<2x32xf32>
    %154 = arith.addf %152, %153 : vector<2x32xf32>
    %155 = arith.negf %154 : vector<2x32xf32>
    %156 = math.exp %155 : vector<2x32xf32>
    %cst_38 = arith.constant 1.000000e+00 : f32
    %157 = vector.broadcast %cst_38 : f32 to vector<2x32xf32>
    %158 = arith.addf %157, %156 : vector<2x32xf32>
    %159 = arith.divf %157, %158 : vector<2x32xf32>
    %160 = vector.extract_strided_slice %142 {offsets = [0, 64], sizes = [2, 32], strides = [1, 1]} : vector<2x96xf32> to vector<2x32xf32>
    %161 = vector.extract_strided_slice %143 {offsets = [0, 64], sizes = [2, 32], strides = [1, 1]} : vector<2x96xf32> to vector<2x32xf32>
    %162 = vector.broadcast %21 : vector<1x32xf32> to vector<2x32xf32>
    %163 = arith.addf %161, %162 : vector<2x32xf32>
    %164 = arith.mulf %151, %163 : vector<2x32xf32>
    %165 = arith.addf %160, %164 : vector<2x32xf32>
    %166 = math.tanh %165 : vector<2x32xf32>
    %cst_39 = arith.constant 1.000000e+00 : f32
    %167 = vector.broadcast %cst_39 : f32 to vector<2x32xf32>
    %168 = arith.subf %167, %159 : vector<2x32xf32>
    %169 = arith.mulf %168, %166 : vector<2x32xf32>
    %170 = arith.mulf %159, %141 : vector<2x32xf32>
    %171 = arith.addf %169, %170 : vector<2x32xf32>
    %172 = vector.extract_strided_slice %19 {offsets = [10, 0], sizes = [2, 96], strides = [1, 1]} : vector<16x96xf32> to vector<2x96xf32>
    %cst_40 = arith.constant dense<0.000000e+00> : vector<2x96xf32>
    %173 = tpu.matmul %171, %20, %cst_40 {dimension_numbers = #tpu.dot_dimension_numbers<[1], [0], [0], [1], [0, 0, 1, 1], [], []>} : vector<2x32xf32>, vector<32x96xf32>, vector<2x96xf32> -> vector<2x96xf32>
    %174 = vector.extract_strided_slice %172 {offsets = [0, 0], sizes = [2, 32], strides = [1, 1]} : vector<2x96xf32> to vector<2x32xf32>
    %175 = vector.extract_strided_slice %173 {offsets = [0, 0], sizes = [2, 32], strides = [1, 1]} : vector<2x96xf32> to vector<2x32xf32>
    %176 = arith.addf %174, %175 : vector<2x32xf32>
    %177 = arith.negf %176 : vector<2x32xf32>
    %178 = math.exp %177 : vector<2x32xf32>
    %cst_41 = arith.constant 1.000000e+00 : f32
    %179 = vector.broadcast %cst_41 : f32 to vector<2x32xf32>
    %180 = arith.addf %179, %178 : vector<2x32xf32>
    %181 = arith.divf %179, %180 : vector<2x32xf32>
    %182 = vector.extract_strided_slice %172 {offsets = [0, 32], sizes = [2, 32], strides = [1, 1]} : vector<2x96xf32> to vector<2x32xf32>
    %183 = vector.extract_strided_slice %173 {offsets = [0, 32], sizes = [2, 32], strides = [1, 1]} : vector<2x96xf32> to vector<2x32xf32>
    %184 = arith.addf %182, %183 : vector<2x32xf32>
    %185 = arith.negf %184 : vector<2x32xf32>
    %186 = math.exp %185 : vector<2x32xf32>
    %cst_42 = arith.constant 1.000000e+00 : f32
    %187 = vector.broadcast %cst_42 : f32 to vector<2x32xf32>
    %188 = arith.addf %187, %186 : vector<2x32xf32>
    %189 = arith.divf %187, %188 : vector<2x32xf32>
    %190 = vector.extract_strided_slice %172 {offsets = [0, 64], sizes = [2, 32], strides = [1, 1]} : vector<2x96xf32> to vector<2x32xf32>
    %191 = vector.extract_strided_slice %173 {offsets = [0, 64], sizes = [2, 32], strides = [1, 1]} : vector<2x96xf32> to vector<2x32xf32>
    %192 = vector.broadcast %21 : vector<1x32xf32> to vector<2x32xf32>
    %193 = arith.addf %191, %192 : vector<2x32xf32>
    %194 = arith.mulf %181, %193 : vector<2x32xf32>
    %195 = arith.addf %190, %194 : vector<2x32xf32>
    %196 = math.tanh %195 : vector<2x32xf32>
    %cst_43 = arith.constant 1.000000e+00 : f32
    %197 = vector.broadcast %cst_43 : f32 to vector<2x32xf32>
    %198 = arith.subf %197, %189 : vector<2x32xf32>
    %199 = arith.mulf %198, %196 : vector<2x32xf32>
    %200 = arith.mulf %189, %171 : vector<2x32xf32>
    %201 = arith.addf %199, %200 : vector<2x32xf32>
    %202 = vector.extract_strided_slice %19 {offsets = [12, 0], sizes = [2, 96], strides = [1, 1]} : vector<16x96xf32> to vector<2x96xf32>
    %cst_44 = arith.constant dense<0.000000e+00> : vector<2x96xf32>
    %203 = tpu.matmul %201, %20, %cst_44 {dimension_numbers = #tpu.dot_dimension_numbers<[1], [0], [0], [1], [0, 0, 1, 1], [], []>} : vector<2x32xf32>, vector<32x96xf32>, vector<2x96xf32> -> vector<2x96xf32>
    %204 = vector.extract_strided_slice %202 {offsets = [0, 0], sizes = [2, 32], strides = [1, 1]} : vector<2x96xf32> to vector<2x32xf32>
    %205 = vector.extract_strided_slice %203 {offsets = [0, 0], sizes = [2, 32], strides = [1, 1]} : vector<2x96xf32> to vector<2x32xf32>
    %206 = arith.addf %204, %205 : vector<2x32xf32>
    %207 = arith.negf %206 : vector<2x32xf32>
    %208 = math.exp %207 : vector<2x32xf32>
    %cst_45 = arith.constant 1.000000e+00 : f32
    %209 = vector.broadcast %cst_45 : f32 to vector<2x32xf32>
    %210 = arith.addf %209, %208 : vector<2x32xf32>
    %211 = arith.divf %209, %210 : vector<2x32xf32>
    %212 = vector.extract_strided_slice %202 {offsets = [0, 32], sizes = [2, 32], strides = [1, 1]} : vector<2x96xf32> to vector<2x32xf32>
    %213 = vector.extract_strided_slice %203 {offsets = [0, 32], sizes = [2, 32], strides = [1, 1]} : vector<2x96xf32> to vector<2x32xf32>
    %214 = arith.addf %212, %213 : vector<2x32xf32>
    %215 = arith.negf %214 : vector<2x32xf32>
    %216 = math.exp %215 : vector<2x32xf32>
    %cst_46 = arith.constant 1.000000e+00 : f32
    %217 = vector.broadcast %cst_46 : f32 to vector<2x32xf32>
    %218 = arith.addf %217, %216 : vector<2x32xf32>
    %219 = arith.divf %217, %218 : vector<2x32xf32>
    %220 = vector.extract_strided_slice %202 {offsets = [0, 64], sizes = [2, 32], strides = [1, 1]} : vector<2x96xf32> to vector<2x32xf32>
    %221 = vector.extract_strided_slice %203 {offsets = [0, 64], sizes = [2, 32], strides = [1, 1]} : vector<2x96xf32> to vector<2x32xf32>
    %222 = vector.broadcast %21 : vector<1x32xf32> to vector<2x32xf32>
    %223 = arith.addf %221, %222 : vector<2x32xf32>
    %224 = arith.mulf %211, %223 : vector<2x32xf32>
    %225 = arith.addf %220, %224 : vector<2x32xf32>
    %226 = math.tanh %225 : vector<2x32xf32>
    %cst_47 = arith.constant 1.000000e+00 : f32
    %227 = vector.broadcast %cst_47 : f32 to vector<2x32xf32>
    %228 = arith.subf %227, %219 : vector<2x32xf32>
    %229 = arith.mulf %228, %226 : vector<2x32xf32>
    %230 = arith.mulf %219, %201 : vector<2x32xf32>
    %231 = arith.addf %229, %230 : vector<2x32xf32>
    %232 = vector.extract_strided_slice %19 {offsets = [14, 0], sizes = [2, 96], strides = [1, 1]} : vector<16x96xf32> to vector<2x96xf32>
    %cst_48 = arith.constant dense<0.000000e+00> : vector<2x96xf32>
    %233 = tpu.matmul %231, %20, %cst_48 {dimension_numbers = #tpu.dot_dimension_numbers<[1], [0], [0], [1], [0, 0, 1, 1], [], []>} : vector<2x32xf32>, vector<32x96xf32>, vector<2x96xf32> -> vector<2x96xf32>
    %234 = vector.extract_strided_slice %232 {offsets = [0, 0], sizes = [2, 32], strides = [1, 1]} : vector<2x96xf32> to vector<2x32xf32>
    %235 = vector.extract_strided_slice %233 {offsets = [0, 0], sizes = [2, 32], strides = [1, 1]} : vector<2x96xf32> to vector<2x32xf32>
    %236 = arith.addf %234, %235 : vector<2x32xf32>
    %237 = arith.negf %236 : vector<2x32xf32>
    %238 = math.exp %237 : vector<2x32xf32>
    %cst_49 = arith.constant 1.000000e+00 : f32
    %239 = vector.broadcast %cst_49 : f32 to vector<2x32xf32>
    %240 = arith.addf %239, %238 : vector<2x32xf32>
    %241 = arith.divf %239, %240 : vector<2x32xf32>
    %242 = vector.extract_strided_slice %232 {offsets = [0, 32], sizes = [2, 32], strides = [1, 1]} : vector<2x96xf32> to vector<2x32xf32>
    %243 = vector.extract_strided_slice %233 {offsets = [0, 32], sizes = [2, 32], strides = [1, 1]} : vector<2x96xf32> to vector<2x32xf32>
    %244 = arith.addf %242, %243 : vector<2x32xf32>
    %245 = arith.negf %244 : vector<2x32xf32>
    %246 = math.exp %245 : vector<2x32xf32>
    %cst_50 = arith.constant 1.000000e+00 : f32
    %247 = vector.broadcast %cst_50 : f32 to vector<2x32xf32>
    %248 = arith.addf %247, %246 : vector<2x32xf32>
    %249 = arith.divf %247, %248 : vector<2x32xf32>
    %250 = vector.extract_strided_slice %232 {offsets = [0, 64], sizes = [2, 32], strides = [1, 1]} : vector<2x96xf32> to vector<2x32xf32>
    %251 = vector.extract_strided_slice %233 {offsets = [0, 64], sizes = [2, 32], strides = [1, 1]} : vector<2x96xf32> to vector<2x32xf32>
    %252 = vector.broadcast %21 : vector<1x32xf32> to vector<2x32xf32>
    %253 = arith.addf %251, %252 : vector<2x32xf32>
    %254 = arith.mulf %241, %253 : vector<2x32xf32>
    %255 = arith.addf %250, %254 : vector<2x32xf32>
    %256 = math.tanh %255 : vector<2x32xf32>
    %cst_51 = arith.constant 1.000000e+00 : f32
    %257 = vector.broadcast %cst_51 : f32 to vector<2x32xf32>
    %258 = arith.subf %257, %249 : vector<2x32xf32>
    %259 = arith.mulf %258, %256 : vector<2x32xf32>
    %260 = arith.mulf %249, %231 : vector<2x32xf32>
    %261 = arith.addf %259, %260 : vector<2x32xf32>
    %c0_52 = arith.constant 0 : index
    %c0_53 = arith.constant 0 : index
    %262 = vector.load %arg11[%c0_52, %c0_53] : memref<1x96xf32, #tpu.memory_space<vmem>>, vector<1x96xf32>
    %c0_54 = arith.constant 0 : index
    %c0_55 = arith.constant 0 : index
    %263 = vector.load %arg9[%c0_54, %c0_55] : memref<32x96xf32, #tpu.memory_space<vmem>>, vector<32x96xf32>
    %cst_56 = arith.constant dense<0.000000e+00> : vector<16x96xf32>
    %264 = tpu.matmul %13, %263, %cst_56 {dimension_numbers = #tpu.dot_dimension_numbers<[1], [0], [0], [1], [0, 0, 1, 1], [], []>} : vector<16x32xf32>, vector<32x96xf32>, vector<16x96xf32> -> vector<16x96xf32>
    %265 = vector.broadcast %262 : vector<1x96xf32> to vector<16x96xf32>
    %266 = arith.addf %264, %265 : vector<16x96xf32>
    %c0_57 = arith.constant 0 : index
    %c0_58 = arith.constant 0 : index
    %c0_59 = arith.constant 0 : index
    %267 = vector.load %arg2[%c0_57, %c0_58, %c0_59] : memref<1x2x32xf32, #tpu.memory_space<vmem>>, vector<1x2x32xf32>
    %268 = vector.shape_cast %267 : vector<1x2x32xf32> to vector<2x32xf32>
    %269 = arith.addf %261, %268 : vector<2x32xf32>
    %c0_60 = arith.constant 0 : index
    %c0_61 = arith.constant 0 : index
    %270 = vector.load %arg10[%c0_60, %c0_61] : memref<32x96xf32, #tpu.memory_space<vmem>>, vector<32x96xf32>
    %c0_62 = arith.constant 0 : index
    %c0_63 = arith.constant 0 : index
    %271 = vector.load %arg12[%c0_62, %c0_63] : memref<1x32xf32, #tpu.memory_space<vmem>>, vector<1x32xf32>
    %272 = vector.shape_cast %262 : vector<1x96xf32> to vector<1x96xf32>
    %273 = vector.broadcast %272 : vector<1x96xf32> to vector<2x96xf32>
    %cst_64 = arith.constant dense<0.000000e+00> : vector<2x96xf32>
    %274 = tpu.matmul %269, %270, %cst_64 {dimension_numbers = #tpu.dot_dimension_numbers<[1], [0], [0], [1], [0, 0, 1, 1], [], []>} : vector<2x32xf32>, vector<32x96xf32>, vector<2x96xf32> -> vector<2x96xf32>
    %275 = vector.extract_strided_slice %273 {offsets = [0, 0], sizes = [2, 32], strides = [1, 1]} : vector<2x96xf32> to vector<2x32xf32>
    %276 = vector.extract_strided_slice %274 {offsets = [0, 0], sizes = [2, 32], strides = [1, 1]} : vector<2x96xf32> to vector<2x32xf32>
    %277 = arith.addf %275, %276 : vector<2x32xf32>
    %278 = arith.negf %277 : vector<2x32xf32>
    %279 = math.exp %278 : vector<2x32xf32>
    %cst_65 = arith.constant 1.000000e+00 : f32
    %280 = vector.broadcast %cst_65 : f32 to vector<2x32xf32>
    %281 = arith.addf %280, %279 : vector<2x32xf32>
    %282 = arith.divf %280, %281 : vector<2x32xf32>
    %283 = vector.extract_strided_slice %273 {offsets = [0, 32], sizes = [2, 32], strides = [1, 1]} : vector<2x96xf32> to vector<2x32xf32>
    %284 = vector.extract_strided_slice %274 {offsets = [0, 32], sizes = [2, 32], strides = [1, 1]} : vector<2x96xf32> to vector<2x32xf32>
    %285 = arith.addf %283, %284 : vector<2x32xf32>
    %286 = arith.negf %285 : vector<2x32xf32>
    %287 = math.exp %286 : vector<2x32xf32>
    %cst_66 = arith.constant 1.000000e+00 : f32
    %288 = vector.broadcast %cst_66 : f32 to vector<2x32xf32>
    %289 = arith.addf %288, %287 : vector<2x32xf32>
    %290 = arith.divf %288, %289 : vector<2x32xf32>
    %291 = vector.extract_strided_slice %273 {offsets = [0, 64], sizes = [2, 32], strides = [1, 1]} : vector<2x96xf32> to vector<2x32xf32>
    %292 = vector.extract_strided_slice %274 {offsets = [0, 64], sizes = [2, 32], strides = [1, 1]} : vector<2x96xf32> to vector<2x32xf32>
    %293 = vector.broadcast %271 : vector<1x32xf32> to vector<2x32xf32>
    %294 = arith.addf %292, %293 : vector<2x32xf32>
    %295 = arith.mulf %282, %294 : vector<2x32xf32>
    %296 = arith.addf %291, %295 : vector<2x32xf32>
    %297 = math.tanh %296 : vector<2x32xf32>
    %cst_67 = arith.constant 1.000000e+00 : f32
    %298 = vector.broadcast %cst_67 : f32 to vector<2x32xf32>
    %299 = arith.subf %298, %290 : vector<2x32xf32>
    %300 = arith.mulf %299, %297 : vector<2x32xf32>
    %301 = arith.mulf %290, %269 : vector<2x32xf32>
    %302 = arith.addf %300, %301 : vector<2x32xf32>
    %c0_68 = arith.constant 0 : index
    %c0_69 = arith.constant 0 : index
    %303 = vector.load %arg16[%c0_68, %c0_69] : memref<16x32xf32, #tpu.memory_space<vmem>>, vector<2x32xf32>
    tpu.vector_store %arg16[%c0_68, %c0_69], %302 {strides = array<i32>} : memref<16x32xf32, #tpu.memory_space<vmem>>, vector<2x32xf32>,
    %304 = vector.extract_strided_slice %266 {offsets = [0, 0], sizes = [2, 96], strides = [1, 1]} : vector<16x96xf32> to vector<2x96xf32>
    %cst_70 = arith.constant dense<0.000000e+00> : vector<2x96xf32>
    %305 = tpu.matmul %302, %270, %cst_70 {dimension_numbers = #tpu.dot_dimension_numbers<[1], [0], [0], [1], [0, 0, 1, 1], [], []>} : vector<2x32xf32>, vector<32x96xf32>, vector<2x96xf32> -> vector<2x96xf32>
    %306 = vector.extract_strided_slice %304 {offsets = [0, 0], sizes = [2, 32], strides = [1, 1]} : vector<2x96xf32> to vector<2x32xf32>
    %307 = vector.extract_strided_slice %305 {offsets = [0, 0], sizes = [2, 32], strides = [1, 1]} : vector<2x96xf32> to vector<2x32xf32>
    %308 = arith.addf %306, %307 : vector<2x32xf32>
    %309 = arith.negf %308 : vector<2x32xf32>
    %310 = math.exp %309 : vector<2x32xf32>
    %cst_71 = arith.constant 1.000000e+00 : f32
    %311 = vector.broadcast %cst_71 : f32 to vector<2x32xf32>
    %312 = arith.addf %311, %310 : vector<2x32xf32>
    %313 = arith.divf %311, %312 : vector<2x32xf32>
    %314 = vector.extract_strided_slice %304 {offsets = [0, 32], sizes = [2, 32], strides = [1, 1]} : vector<2x96xf32> to vector<2x32xf32>
    %315 = vector.extract_strided_slice %305 {offsets = [0, 32], sizes = [2, 32], strides = [1, 1]} : vector<2x96xf32> to vector<2x32xf32>
    %316 = arith.addf %314, %315 : vector<2x32xf32>
    %317 = arith.negf %316 : vector<2x32xf32>
    %318 = math.exp %317 : vector<2x32xf32>
    %cst_72 = arith.constant 1.000000e+00 : f32
    %319 = vector.broadcast %cst_72 : f32 to vector<2x32xf32>
    %320 = arith.addf %319, %318 : vector<2x32xf32>
    %321 = arith.divf %319, %320 : vector<2x32xf32>
    %322 = vector.extract_strided_slice %304 {offsets = [0, 64], sizes = [2, 32], strides = [1, 1]} : vector<2x96xf32> to vector<2x32xf32>
    %323 = vector.extract_strided_slice %305 {offsets = [0, 64], sizes = [2, 32], strides = [1, 1]} : vector<2x96xf32> to vector<2x32xf32>
    %324 = vector.broadcast %271 : vector<1x32xf32> to vector<2x32xf32>
    %325 = arith.addf %323, %324 : vector<2x32xf32>
    %326 = arith.mulf %313, %325 : vector<2x32xf32>
    %327 = arith.addf %322, %326 : vector<2x32xf32>
    %328 = math.tanh %327 : vector<2x32xf32>
    %cst_73 = arith.constant 1.000000e+00 : f32
    %329 = vector.broadcast %cst_73 : f32 to vector<2x32xf32>
    %330 = arith.subf %329, %321 : vector<2x32xf32>
    %331 = arith.mulf %330, %328 : vector<2x32xf32>
    %332 = arith.mulf %321, %302 : vector<2x32xf32>
    %333 = arith.addf %331, %332 : vector<2x32xf32>
    %c2 = arith.constant 2 : index
    %c0_74 = arith.constant 0 : index
    %334 = vector.load %arg16[%c2, %c0_74] : memref<16x32xf32, #tpu.memory_space<vmem>>, vector<2x32xf32>
    tpu.vector_store %arg16[%c2, %c0_74], %333 {strides = array<i32>} : memref<16x32xf32, #tpu.memory_space<vmem>>, vector<2x32xf32>,
    %335 = vector.extract_strided_slice %266 {offsets = [2, 0], sizes = [2, 96], strides = [1, 1]} : vector<16x96xf32> to vector<2x96xf32>
    %cst_75 = arith.constant dense<0.000000e+00> : vector<2x96xf32>
    %336 = tpu.matmul %333, %270, %cst_75 {dimension_numbers = #tpu.dot_dimension_numbers<[1], [0], [0], [1], [0, 0, 1, 1], [], []>} : vector<2x32xf32>, vector<32x96xf32>, vector<2x96xf32> -> vector<2x96xf32>
    %337 = vector.extract_strided_slice %335 {offsets = [0, 0], sizes = [2, 32], strides = [1, 1]} : vector<2x96xf32> to vector<2x32xf32>
    %338 = vector.extract_strided_slice %336 {offsets = [0, 0], sizes = [2, 32], strides = [1, 1]} : vector<2x96xf32> to vector<2x32xf32>
    %339 = arith.addf %337, %338 : vector<2x32xf32>
    %340 = arith.negf %339 : vector<2x32xf32>
    %341 = math.exp %340 : vector<2x32xf32>
    %cst_76 = arith.constant 1.000000e+00 : f32
    %342 = vector.broadcast %cst_76 : f32 to vector<2x32xf32>
    %343 = arith.addf %342, %341 : vector<2x32xf32>
    %344 = arith.divf %342, %343 : vector<2x32xf32>
    %345 = vector.extract_strided_slice %335 {offsets = [0, 32], sizes = [2, 32], strides = [1, 1]} : vector<2x96xf32> to vector<2x32xf32>
    %346 = vector.extract_strided_slice %336 {offsets = [0, 32], sizes = [2, 32], strides = [1, 1]} : vector<2x96xf32> to vector<2x32xf32>
    %347 = arith.addf %345, %346 : vector<2x32xf32>
    %348 = arith.negf %347 : vector<2x32xf32>
    %349 = math.exp %348 : vector<2x32xf32>
    %cst_77 = arith.constant 1.000000e+00 : f32
    %350 = vector.broadcast %cst_77 : f32 to vector<2x32xf32>
    %351 = arith.addf %350, %349 : vector<2x32xf32>
    %352 = arith.divf %350, %351 : vector<2x32xf32>
    %353 = vector.extract_strided_slice %335 {offsets = [0, 64], sizes = [2, 32], strides = [1, 1]} : vector<2x96xf32> to vector<2x32xf32>
    %354 = vector.extract_strided_slice %336 {offsets = [0, 64], sizes = [2, 32], strides = [1, 1]} : vector<2x96xf32> to vector<2x32xf32>
    %355 = vector.broadcast %271 : vector<1x32xf32> to vector<2x32xf32>
    %356 = arith.addf %354, %355 : vector<2x32xf32>
    %357 = arith.mulf %344, %356 : vector<2x32xf32>
    %358 = arith.addf %353, %357 : vector<2x32xf32>
    %359 = math.tanh %358 : vector<2x32xf32>
    %cst_78 = arith.constant 1.000000e+00 : f32
    %360 = vector.broadcast %cst_78 : f32 to vector<2x32xf32>
    %361 = arith.subf %360, %352 : vector<2x32xf32>
    %362 = arith.mulf %361, %359 : vector<2x32xf32>
    %363 = arith.mulf %352, %333 : vector<2x32xf32>
    %364 = arith.addf %362, %363 : vector<2x32xf32>
    %c4 = arith.constant 4 : index
    %c0_79 = arith.constant 0 : index
    %365 = vector.load %arg16[%c4, %c0_79] : memref<16x32xf32, #tpu.memory_space<vmem>>, vector<2x32xf32>
    tpu.vector_store %arg16[%c4, %c0_79], %364 {strides = array<i32>} : memref<16x32xf32, #tpu.memory_space<vmem>>, vector<2x32xf32>,
    %366 = vector.extract_strided_slice %266 {offsets = [4, 0], sizes = [2, 96], strides = [1, 1]} : vector<16x96xf32> to vector<2x96xf32>
    %cst_80 = arith.constant dense<0.000000e+00> : vector<2x96xf32>
    %367 = tpu.matmul %364, %270, %cst_80 {dimension_numbers = #tpu.dot_dimension_numbers<[1], [0], [0], [1], [0, 0, 1, 1], [], []>} : vector<2x32xf32>, vector<32x96xf32>, vector<2x96xf32> -> vector<2x96xf32>
    %368 = vector.extract_strided_slice %366 {offsets = [0, 0], sizes = [2, 32], strides = [1, 1]} : vector<2x96xf32> to vector<2x32xf32>
    %369 = vector.extract_strided_slice %367 {offsets = [0, 0], sizes = [2, 32], strides = [1, 1]} : vector<2x96xf32> to vector<2x32xf32>
    %370 = arith.addf %368, %369 : vector<2x32xf32>
    %371 = arith.negf %370 : vector<2x32xf32>
    %372 = math.exp %371 : vector<2x32xf32>
    %cst_81 = arith.constant 1.000000e+00 : f32
    %373 = vector.broadcast %cst_81 : f32 to vector<2x32xf32>
    %374 = arith.addf %373, %372 : vector<2x32xf32>
    %375 = arith.divf %373, %374 : vector<2x32xf32>
    %376 = vector.extract_strided_slice %366 {offsets = [0, 32], sizes = [2, 32], strides = [1, 1]} : vector<2x96xf32> to vector<2x32xf32>
    %377 = vector.extract_strided_slice %367 {offsets = [0, 32], sizes = [2, 32], strides = [1, 1]} : vector<2x96xf32> to vector<2x32xf32>
    %378 = arith.addf %376, %377 : vector<2x32xf32>
    %379 = arith.negf %378 : vector<2x32xf32>
    %380 = math.exp %379 : vector<2x32xf32>
    %cst_82 = arith.constant 1.000000e+00 : f32
    %381 = vector.broadcast %cst_82 : f32 to vector<2x32xf32>
    %382 = arith.addf %381, %380 : vector<2x32xf32>
    %383 = arith.divf %381, %382 : vector<2x32xf32>
    %384 = vector.extract_strided_slice %366 {offsets = [0, 64], sizes = [2, 32], strides = [1, 1]} : vector<2x96xf32> to vector<2x32xf32>
    %385 = vector.extract_strided_slice %367 {offsets = [0, 64], sizes = [2, 32], strides = [1, 1]} : vector<2x96xf32> to vector<2x32xf32>
    %386 = vector.broadcast %271 : vector<1x32xf32> to vector<2x32xf32>
    %387 = arith.addf %385, %386 : vector<2x32xf32>
    %388 = arith.mulf %375, %387 : vector<2x32xf32>
    %389 = arith.addf %384, %388 : vector<2x32xf32>
    %390 = math.tanh %389 : vector<2x32xf32>
    %cst_83 = arith.constant 1.000000e+00 : f32
    %391 = vector.broadcast %cst_83 : f32 to vector<2x32xf32>
    %392 = arith.subf %391, %383 : vector<2x32xf32>
    %393 = arith.mulf %392, %390 : vector<2x32xf32>
    %394 = arith.mulf %383, %364 : vector<2x32xf32>
    %395 = arith.addf %393, %394 : vector<2x32xf32>
    %c6 = arith.constant 6 : index
    %c0_84 = arith.constant 0 : index
    %396 = vector.load %arg16[%c6, %c0_84] : memref<16x32xf32, #tpu.memory_space<vmem>>, vector<2x32xf32>
    tpu.vector_store %arg16[%c6, %c0_84], %395 {strides = array<i32>} : memref<16x32xf32, #tpu.memory_space<vmem>>, vector<2x32xf32>,
    %397 = vector.extract_strided_slice %266 {offsets = [6, 0], sizes = [2, 96], strides = [1, 1]} : vector<16x96xf32> to vector<2x96xf32>
    %cst_85 = arith.constant dense<0.000000e+00> : vector<2x96xf32>
    %398 = tpu.matmul %395, %270, %cst_85 {dimension_numbers = #tpu.dot_dimension_numbers<[1], [0], [0], [1], [0, 0, 1, 1], [], []>} : vector<2x32xf32>, vector<32x96xf32>, vector<2x96xf32> -> vector<2x96xf32>
    %399 = vector.extract_strided_slice %397 {offsets = [0, 0], sizes = [2, 32], strides = [1, 1]} : vector<2x96xf32> to vector<2x32xf32>
    %400 = vector.extract_strided_slice %398 {offsets = [0, 0], sizes = [2, 32], strides = [1, 1]} : vector<2x96xf32> to vector<2x32xf32>
    %401 = arith.addf %399, %400 : vector<2x32xf32>
    %402 = arith.negf %401 : vector<2x32xf32>
    %403 = math.exp %402 : vector<2x32xf32>
    %cst_86 = arith.constant 1.000000e+00 : f32
    %404 = vector.broadcast %cst_86 : f32 to vector<2x32xf32>
    %405 = arith.addf %404, %403 : vector<2x32xf32>
    %406 = arith.divf %404, %405 : vector<2x32xf32>
    %407 = vector.extract_strided_slice %397 {offsets = [0, 32], sizes = [2, 32], strides = [1, 1]} : vector<2x96xf32> to vector<2x32xf32>
    %408 = vector.extract_strided_slice %398 {offsets = [0, 32], sizes = [2, 32], strides = [1, 1]} : vector<2x96xf32> to vector<2x32xf32>
    %409 = arith.addf %407, %408 : vector<2x32xf32>
    %410 = arith.negf %409 : vector<2x32xf32>
    %411 = math.exp %410 : vector<2x32xf32>
    %cst_87 = arith.constant 1.000000e+00 : f32
    %412 = vector.broadcast %cst_87 : f32 to vector<2x32xf32>
    %413 = arith.addf %412, %411 : vector<2x32xf32>
    %414 = arith.divf %412, %413 : vector<2x32xf32>
    %415 = vector.extract_strided_slice %397 {offsets = [0, 64], sizes = [2, 32], strides = [1, 1]} : vector<2x96xf32> to vector<2x32xf32>
    %416 = vector.extract_strided_slice %398 {offsets = [0, 64], sizes = [2, 32], strides = [1, 1]} : vector<2x96xf32> to vector<2x32xf32>
    %417 = vector.broadcast %271 : vector<1x32xf32> to vector<2x32xf32>
    %418 = arith.addf %416, %417 : vector<2x32xf32>
    %419 = arith.mulf %406, %418 : vector<2x32xf32>
    %420 = arith.addf %415, %419 : vector<2x32xf32>
    %421 = math.tanh %420 : vector<2x32xf32>
    %cst_88 = arith.constant 1.000000e+00 : f32
    %422 = vector.broadcast %cst_88 : f32 to vector<2x32xf32>
    %423 = arith.subf %422, %414 : vector<2x32xf32>
    %424 = arith.mulf %423, %421 : vector<2x32xf32>
    %425 = arith.mulf %414, %395 : vector<2x32xf32>
    %426 = arith.addf %424, %425 : vector<2x32xf32>
    %c8 = arith.constant 8 : index
    %c0_89 = arith.constant 0 : index
    %427 = vector.load %arg16[%c8, %c0_89] : memref<16x32xf32, #tpu.memory_space<vmem>>, vector<2x32xf32>
    tpu.vector_store %arg16[%c8, %c0_89], %426 {strides = array<i32>} : memref<16x32xf32, #tpu.memory_space<vmem>>, vector<2x32xf32>,
    %428 = vector.extract_strided_slice %266 {offsets = [8, 0], sizes = [2, 96], strides = [1, 1]} : vector<16x96xf32> to vector<2x96xf32>
    %cst_90 = arith.constant dense<0.000000e+00> : vector<2x96xf32>
    %429 = tpu.matmul %426, %270, %cst_90 {dimension_numbers = #tpu.dot_dimension_numbers<[1], [0], [0], [1], [0, 0, 1, 1], [], []>} : vector<2x32xf32>, vector<32x96xf32>, vector<2x96xf32> -> vector<2x96xf32>
    %430 = vector.extract_strided_slice %428 {offsets = [0, 0], sizes = [2, 32], strides = [1, 1]} : vector<2x96xf32> to vector<2x32xf32>
    %431 = vector.extract_strided_slice %429 {offsets = [0, 0], sizes = [2, 32], strides = [1, 1]} : vector<2x96xf32> to vector<2x32xf32>
    %432 = arith.addf %430, %431 : vector<2x32xf32>
    %433 = arith.negf %432 : vector<2x32xf32>
    %434 = math.exp %433 : vector<2x32xf32>
    %cst_91 = arith.constant 1.000000e+00 : f32
    %435 = vector.broadcast %cst_91 : f32 to vector<2x32xf32>
    %436 = arith.addf %435, %434 : vector<2x32xf32>
    %437 = arith.divf %435, %436 : vector<2x32xf32>
    %438 = vector.extract_strided_slice %428 {offsets = [0, 32], sizes = [2, 32], strides = [1, 1]} : vector<2x96xf32> to vector<2x32xf32>
    %439 = vector.extract_strided_slice %429 {offsets = [0, 32], sizes = [2, 32], strides = [1, 1]} : vector<2x96xf32> to vector<2x32xf32>
    %440 = arith.addf %438, %439 : vector<2x32xf32>
    %441 = arith.negf %440 : vector<2x32xf32>
    %442 = math.exp %441 : vector<2x32xf32>
    %cst_92 = arith.constant 1.000000e+00 : f32
    %443 = vector.broadcast %cst_92 : f32 to vector<2x32xf32>
    %444 = arith.addf %443, %442 : vector<2x32xf32>
    %445 = arith.divf %443, %444 : vector<2x32xf32>
    %446 = vector.extract_strided_slice %428 {offsets = [0, 64], sizes = [2, 32], strides = [1, 1]} : vector<2x96xf32> to vector<2x32xf32>
    %447 = vector.extract_strided_slice %429 {offsets = [0, 64], sizes = [2, 32], strides = [1, 1]} : vector<2x96xf32> to vector<2x32xf32>
    %448 = vector.broadcast %271 : vector<1x32xf32> to vector<2x32xf32>
    %449 = arith.addf %447, %448 : vector<2x32xf32>
    %450 = arith.mulf %437, %449 : vector<2x32xf32>
    %451 = arith.addf %446, %450 : vector<2x32xf32>
    %452 = math.tanh %451 : vector<2x32xf32>
    %cst_93 = arith.constant 1.000000e+00 : f32
    %453 = vector.broadcast %cst_93 : f32 to vector<2x32xf32>
    %454 = arith.subf %453, %445 : vector<2x32xf32>
    %455 = arith.mulf %454, %452 : vector<2x32xf32>
    %456 = arith.mulf %445, %426 : vector<2x32xf32>
    %457 = arith.addf %455, %456 : vector<2x32xf32>
    %c10 = arith.constant 10 : index
    %c0_94 = arith.constant 0 : index
    %458 = vector.load %arg16[%c10, %c0_94] : memref<16x32xf32, #tpu.memory_space<vmem>>, vector<2x32xf32>
    tpu.vector_store %arg16[%c10, %c0_94], %457 {strides = array<i32>} : memref<16x32xf32, #tpu.memory_space<vmem>>, vector<2x32xf32>,
    %459 = vector.extract_strided_slice %266 {offsets = [10, 0], sizes = [2, 96], strides = [1, 1]} : vector<16x96xf32> to vector<2x96xf32>
    %cst_95 = arith.constant dense<0.000000e+00> : vector<2x96xf32>
    %460 = tpu.matmul %457, %270, %cst_95 {dimension_numbers = #tpu.dot_dimension_numbers<[1], [0], [0], [1], [0, 0, 1, 1], [], []>} : vector<2x32xf32>, vector<32x96xf32>, vector<2x96xf32> -> vector<2x96xf32>
    %461 = vector.extract_strided_slice %459 {offsets = [0, 0], sizes = [2, 32], strides = [1, 1]} : vector<2x96xf32> to vector<2x32xf32>
    %462 = vector.extract_strided_slice %460 {offsets = [0, 0], sizes = [2, 32], strides = [1, 1]} : vector<2x96xf32> to vector<2x32xf32>
    %463 = arith.addf %461, %462 : vector<2x32xf32>
    %464 = arith.negf %463 : vector<2x32xf32>
    %465 = math.exp %464 : vector<2x32xf32>
    %cst_96 = arith.constant 1.000000e+00 : f32
    %466 = vector.broadcast %cst_96 : f32 to vector<2x32xf32>
    %467 = arith.addf %466, %465 : vector<2x32xf32>
    %468 = arith.divf %466, %467 : vector<2x32xf32>
    %469 = vector.extract_strided_slice %459 {offsets = [0, 32], sizes = [2, 32], strides = [1, 1]} : vector<2x96xf32> to vector<2x32xf32>
    %470 = vector.extract_strided_slice %460 {offsets = [0, 32], sizes = [2, 32], strides = [1, 1]} : vector<2x96xf32> to vector<2x32xf32>
    %471 = arith.addf %469, %470 : vector<2x32xf32>
    %472 = arith.negf %471 : vector<2x32xf32>
    %473 = math.exp %472 : vector<2x32xf32>
    %cst_97 = arith.constant 1.000000e+00 : f32
    %474 = vector.broadcast %cst_97 : f32 to vector<2x32xf32>
    %475 = arith.addf %474, %473 : vector<2x32xf32>
    %476 = arith.divf %474, %475 : vector<2x32xf32>
    %477 = vector.extract_strided_slice %459 {offsets = [0, 64], sizes = [2, 32], strides = [1, 1]} : vector<2x96xf32> to vector<2x32xf32>
    %478 = vector.extract_strided_slice %460 {offsets = [0, 64], sizes = [2, 32], strides = [1, 1]} : vector<2x96xf32> to vector<2x32xf32>
    %479 = vector.broadcast %271 : vector<1x32xf32> to vector<2x32xf32>
    %480 = arith.addf %478, %479 : vector<2x32xf32>
    %481 = arith.mulf %468, %480 : vector<2x32xf32>
    %482 = arith.addf %477, %481 : vector<2x32xf32>
    %483 = math.tanh %482 : vector<2x32xf32>
    %cst_98 = arith.constant 1.000000e+00 : f32
    %484 = vector.broadcast %cst_98 : f32 to vector<2x32xf32>
    %485 = arith.subf %484, %476 : vector<2x32xf32>
    %486 = arith.mulf %485, %483 : vector<2x32xf32>
    %487 = arith.mulf %476, %457 : vector<2x32xf32>
    %488 = arith.addf %486, %487 : vector<2x32xf32>
    %c12 = arith.constant 12 : index
    %c0_99 = arith.constant 0 : index
    %489 = vector.load %arg16[%c12, %c0_99] : memref<16x32xf32, #tpu.memory_space<vmem>>, vector<2x32xf32>
    tpu.vector_store %arg16[%c12, %c0_99], %488 {strides = array<i32>} : memref<16x32xf32, #tpu.memory_space<vmem>>, vector<2x32xf32>,
    %490 = vector.extract_strided_slice %266 {offsets = [12, 0], sizes = [2, 96], strides = [1, 1]} : vector<16x96xf32> to vector<2x96xf32>
    %cst_100 = arith.constant dense<0.000000e+00> : vector<2x96xf32>
    %491 = tpu.matmul %488, %270, %cst_100 {dimension_numbers = #tpu.dot_dimension_numbers<[1], [0], [0], [1], [0, 0, 1, 1], [], []>} : vector<2x32xf32>, vector<32x96xf32>, vector<2x96xf32> -> vector<2x96xf32>
    %492 = vector.extract_strided_slice %490 {offsets = [0, 0], sizes = [2, 32], strides = [1, 1]} : vector<2x96xf32> to vector<2x32xf32>
    %493 = vector.extract_strided_slice %491 {offsets = [0, 0], sizes = [2, 32], strides = [1, 1]} : vector<2x96xf32> to vector<2x32xf32>
    %494 = arith.addf %492, %493 : vector<2x32xf32>
    %495 = arith.negf %494 : vector<2x32xf32>
    %496 = math.exp %495 : vector<2x32xf32>
    %cst_101 = arith.constant 1.000000e+00 : f32
    %497 = vector.broadcast %cst_101 : f32 to vector<2x32xf32>
    %498 = arith.addf %497, %496 : vector<2x32xf32>
    %499 = arith.divf %497, %498 : vector<2x32xf32>
    %500 = vector.extract_strided_slice %490 {offsets = [0, 32], sizes = [2, 32], strides = [1, 1]} : vector<2x96xf32> to vector<2x32xf32>
    %501 = vector.extract_strided_slice %491 {offsets = [0, 32], sizes = [2, 32], strides = [1, 1]} : vector<2x96xf32> to vector<2x32xf32>
    %502 = arith.addf %500, %501 : vector<2x32xf32>
    %503 = arith.negf %502 : vector<2x32xf32>
    %504 = math.exp %503 : vector<2x32xf32>
    %cst_102 = arith.constant 1.000000e+00 : f32
    %505 = vector.broadcast %cst_102 : f32 to vector<2x32xf32>
    %506 = arith.addf %505, %504 : vector<2x32xf32>
    %507 = arith.divf %505, %506 : vector<2x32xf32>
    %508 = vector.extract_strided_slice %490 {offsets = [0, 64], sizes = [2, 32], strides = [1, 1]} : vector<2x96xf32> to vector<2x32xf32>
    %509 = vector.extract_strided_slice %491 {offsets = [0, 64], sizes = [2, 32], strides = [1, 1]} : vector<2x96xf32> to vector<2x32xf32>
    %510 = vector.broadcast %271 : vector<1x32xf32> to vector<2x32xf32>
    %511 = arith.addf %509, %510 : vector<2x32xf32>
    %512 = arith.mulf %499, %511 : vector<2x32xf32>
    %513 = arith.addf %508, %512 : vector<2x32xf32>
    %514 = math.tanh %513 : vector<2x32xf32>
    %cst_103 = arith.constant 1.000000e+00 : f32
    %515 = vector.broadcast %cst_103 : f32 to vector<2x32xf32>
    %516 = arith.subf %515, %507 : vector<2x32xf32>
    %517 = arith.mulf %516, %514 : vector<2x32xf32>
    %518 = arith.mulf %507, %488 : vector<2x32xf32>
    %519 = arith.addf %517, %518 : vector<2x32xf32>
    %c14 = arith.constant 14 : index
    %c0_104 = arith.constant 0 : index
    %520 = vector.load %arg16[%c14, %c0_104] : memref<16x32xf32, #tpu.memory_space<vmem>>, vector<2x32xf32>
    tpu.vector_store %arg16[%c14, %c0_104], %519 {strides = array<i32>} : memref<16x32xf32, #tpu.memory_space<vmem>>, vector<2x32xf32>,
    %c0_105 = arith.constant 0 : index
    %c0_106 = arith.constant 0 : index
    %521 = vector.load %arg16[%c0_105, %c0_106] : memref<16x32xf32, #tpu.memory_space<vmem>>, vector<16x32xf32>
    %c0_107 = arith.constant 0 : index
    %c0_108 = arith.constant 0 : index
    %522 = vector.load %arg13[%c0_107, %c0_108] : memref<32x4xf32, #tpu.memory_space<vmem>>, vector<32x4xf32>
    %cst_109 = arith.constant dense<0.000000e+00> : vector<16x4xf32>
    %523 = tpu.matmul %521, %522, %cst_109 {dimension_numbers = #tpu.dot_dimension_numbers<[1], [0], [0], [1], [0, 0, 1, 1], [], []>} : vector<16x32xf32>, vector<32x4xf32>, vector<16x4xf32> -> vector<16x4xf32>
    %c0_110 = arith.constant 0 : index
    %c0_111 = arith.constant 0 : index
    %524 = vector.load %arg14[%c0_110, %c0_111] : memref<1x4xf32, #tpu.memory_space<vmem>>, vector<1x4xf32>
    %525 = vector.broadcast %524 : vector<1x4xf32> to vector<16x4xf32>
    %526 = arith.addf %523, %525 : vector<16x4xf32>
    %c0_112 = arith.constant 0 : index
    %c0_113 = arith.constant 0 : index
    %527 = vector.load %arg15[%c0_112, %c0_113] : memref<16x4xf32, #tpu.memory_space<vmem>>, vector<16x4xf32>
    tpu.vector_store %arg15[%c0_112, %c0_113], %526 {strides = array<i32>} : memref<16x4xf32, #tpu.memory_space<vmem>>, vector<16x4xf32>,
    return
  }
}

</mosaic_0001>

<llo_original>
// kernel: netg_forward.1
$region0: #{netg_forward.1}
  #allocation0 [shape = 'u32[]', space=smem, size = 0x4, offset = 0x4, fixed_abs, tag = 'smem constant byte address 0x4 - core index']
  #allocation1 [shape = 'u32[144,128]{1,0:T(1,128)}', space=vmem, size = 0x12000, scoped, tag = 'internal scratch']
  #allocation2 [shape = 'f32[16,32]{1,0:T(8,128)}', space=vmem, size = 0x2000, scoped, tag = 'scratch operand']
  %s0 = inlined_call_operand.vmem [shape: f32[16,4], index: 0, kind: input, shape index: {}]
  %s1 = inlined_call_operand.vmem [shape: f32[16,4], index: 1, kind: input, shape index: {}]
  %s2 = inlined_call_operand.hbm [shape: f32[1,2,32], index: 2, kind: input, shape index: {}]
  %s3 = inlined_call_operand.hbm [shape: f32[4,32], index: 3, kind: input, shape index: {}]
  %s4 = inlined_call_operand.hbm [shape: f32[1,32], index: 4, kind: input, shape index: {}]
  %s5 = inlined_call_operand.hbm [shape: f32[32,96], index: 5, kind: input, shape index: {}]
  %s6 = inlined_call_operand.hbm [shape: f32[32,96], index: 6, kind: input, shape index: {}]
  %s7 = inlined_call_operand.hbm [shape: f32[1,96], index: 7, kind: input, shape index: {}]
  %s8 = inlined_call_operand.vmem [shape: f32[1,32], index: 8, kind: input, shape index: {}]
  %s9 = inlined_call_operand.hbm [shape: f32[32,96], index: 9, kind: input, shape index: {}]
  %s10 = inlined_call_operand.vmem [shape: f32[32,96], index: 10, kind: input, shape index: {}]
  %s11 = inlined_call_operand.vmem [shape: f32[1,96], index: 11, kind: input, shape index: {}]
  %s12 = inlined_call_operand.vmem [shape: f32[1,32], index: 12, kind: input, shape index: {}]
  %s13 = inlined_call_operand.vmem [shape: f32[32,4], index: 13, kind: input, shape index: {}]
  %s14 = inlined_call_operand.vmem [shape: f32[1,4], index: 14, kind: input, shape index: {}]
  %s15 = inlined_call_operand.vmem [shape: f32[16,4], index: 15, kind: output, shape index: {}]
  %s16 = sld [smem:[#allocation0]]
  $region98: #{netg_forward.1} parent=0
    _
  %s18 = ssub.s32 1, %s16
  %s19 = scalar_select 0, %s18, %s16
  $region1: #{netg_forward.1} parent=0
    #allocation3 [shape = 'u8[1024]{0}', space=vmem, size = 0x400, scoped, tag = 'input window, operand 2, single buffered']
    #allocation4 [shape = 's32[1]{0}', space=sflag, size = 0x4, scoped, tag = 'scoped memory for netg_forward.1']
    #allocation5 [shape = 'u8[2048]{0}', space=vmem, size = 0x800, scoped, tag = 'input window, operand 3, single buffered']
    #allocation6 [shape = 's32[1]{0}', space=sflag, size = 0x4, scoped, tag = 'scoped memory for netg_forward.1']
    #allocation7 [shape = 'u8[512]{0}', space=vmem, size = 0x400, scoped, tag = 'input window, operand 4, single buffered']
    #allocation8 [shape = 'u8[16384]{0}', space=vmem, size = 0x4000, scoped, tag = 'input window, operand 5, single buffered']
    #allocation9 [shape = 's32[1]{0}', space=sflag, size = 0x4, scoped, tag = 'scoped memory for netg_forward.1']
    #allocation10 [shape = 'u8[16384]{0}', space=vmem, size = 0x4000, scoped, tag = 'input window, operand 6, single buffered']
    #allocation11 [shape = 'u8[512]{0}', space=vmem, size = 0x400, scoped, tag = 'input window, operand 7, single buffered']
    #allocation12 [shape = 's32[1]{0}', space=sflag, size = 0x4, scoped, tag = 'scoped memory for netg_forward.1']
    #allocation13 [shape = 'u8[16384]{0}', space=vmem, size = 0x4000, scoped, tag = 'input window, operand 9, single buffered']
    %20 = vsyncpa [#allocation4], 0
    %21 = vsyncpa [#allocation6], 0
    %22 = vsyncpa [#allocation9], 0
    %23 = vsyncpa [#allocation12], 0
    // Predicated region
    $region2: #{netg_forward.1} parent=1 // pred_check
      _
    $region3: #{netg_forward.1} parent=1 // pred_check_branch
      %25 = sbr.rel (0) target = $region5
    $region4: #{netg_forward.1} parent=1 // pred_region
      _
    $region5: #{netg_forward.1} parent=1 // pred_fallthru
      _
    // Predicated region
    $region6: #{netg_forward.1} parent=1 // pred_check
      _
    $region7: #{netg_forward.1} parent=1 // pred_check_branch
      %27 = sbr.rel (0) target = $region9
    $region8: #{netg_forward.1} parent=1 // pred_region
      _
    $region9: #{netg_forward.1} parent=1 // pred_fallthru
      _
    // Predicated region
    $region10: #{netg_forward.1} parent=1 // pred_check
      _
    $region11: #{netg_forward.1} parent=1 // pred_check_branch
      %29 = sbr.rel (0) target = $region13
    $region12: #{netg_forward.1} parent=1 // pred_region
      %s31 = ssub.s32 32, 32
      %32 = vsyncadd [#allocation4], %s31
      %s34 = sshll.u32 [#allocation3], 4
      %s35 = int_to_ptr.vmem [resolvable:$true] %s34
      %37 = dma.hbm_to_vmem [thread:$0]  %s2, 32, %s35, [#allocation4]
    $region13: #{netg_forward.1} parent=1 // pred_fallthru
      _
    // Predicated region
    $region14: #{netg_forward.1} parent=1 // pred_check
      _
    $region15: #{netg_forward.1} parent=1 // pred_check_branch
      %39 = sbr.rel (0) target = $region17
    $region16: #{netg_forward.1} parent=1 // pred_region
      %s41 = ssub.s32 64, 64
      %42 = vsyncadd [#allocation6], %s41
      %s44 = sshll.u32 [#allocation5], 4
      %s45 = int_to_ptr.vmem [resolvable:$true] %s44
      %47 = dma.hbm_to_vmem [thread:$0]  %s3, 64, %s45, [#allocation6]
    $region17: #{netg_forward.1} parent=1 // pred_fallthru
      _
    // Predicated region
    $region18: #{netg_forward.1} parent=1 // pred_check
      _
    $region19: #{netg_forward.1} parent=1 // pred_check_branch
      %49 = sbr.rel (0) target = $region21
    $region20: #{netg_forward.1} parent=1 // pred_region
      %s51 = ssub.s32 16, 16
      %52 = vsyncadd [#allocation6], %s51
      %s54 = sshll.u32 [#allocation7], 4
      %s55 = int_to_ptr.vmem [resolvable:$true] %s54
      %57 = dma.hbm_to_vmem [thread:$0]  %s4, 16, %s55, [#allocation6]
    $region21: #{netg_forward.1} parent=1 // pred_fallthru
      _
    // Predicated region
    $region22: #{netg_forward.1} parent=1 // pred_check
      _
    $region23: #{netg_forward.1} parent=1 // pred_check_branch
      %59 = sbr.rel (0) target = $region25
    $region24: #{netg_forward.1} parent=1 // pred_region
      %s61 = ssub.s32 512, 512
      %62 = vsyncadd [#allocation9], %s61
      %s63 = sshll.u32 [#allocation8], 4
      %s64 = int_to_ptr.vmem [resolvable:$true] %s63
      %69 = dma.hbm_to_vmem [thread:$0]  %s5, 512, %s64, [#allocation9], 128, 128, 8
    $region25: #{netg_forward.1} parent=1 // pred_fallthru
      _
    // Predicated region
    $region26: #{netg_forward.1} parent=1 // pred_check
      _
    $region27: #{netg_forward.1} parent=1 // pred_check_branch
      %71 = sbr.rel (0) target = $region29
    $region28: #{netg_forward.1} parent=1 // pred_region
      %s73 = ssub.s32 512, 512
      %74 = vsyncadd [#allocation9], %s73
      %s75 = sshll.u32 [#allocation10], 4
      %s76 = int_to_ptr.vmem [resolvable:$true] %s75
      %81 = dma.hbm_to_vmem [thread:$0]  %s6, 512, %s76, [#allocation9], 128, 128, 8
    $region29: #{netg_forward.1} parent=1 // pred_fallthru
      _
    // Predicated region
    $region30: #{netg_forward.1} parent=1 // pred_check
      _
    $region31: #{netg_forward.1} parent=1 // pred_check_branch
      %83 = sbr.rel (0) target = $region33
    $region32: #{netg_forward.1} parent=1 // pred_region
      %s85 = ssub.s32 16, 16
      %86 = vsyncadd [#allocation12], %s85
      %s88 = sshll.u32 [#allocation11], 4
      %s89 = int_to_ptr.vmem [resolvable:$true] %s88
      %91 = dma.hbm_to_vmem [thread:$0]  %s7, 16, %s89, [#allocation12]
    $region33: #{netg_forward.1} parent=1 // pred_fallthru
      _
    // Predicated region
    $region34: #{netg_forward.1} parent=1 // pred_check
      _
    $region35: #{netg_forward.1} parent=1 // pred_check_branch
      %93 = sbr.rel (0) target = $region37
    $region36: #{netg_forward.1} parent=1 // pred_region
      _
    $region37: #{netg_forward.1} parent=1 // pred_fallthru
      _
    // Predicated region
    $region38: #{netg_forward.1} parent=1 // pred_check
      _
    $region39: #{netg_forward.1} parent=1 // pred_check_branch
      %95 = sbr.rel (0) target = $region41
    $region40: #{netg_forward.1} parent=1 // pred_region
      %s97 = ssub.s32 512, 512
      %98 = vsyncadd [#allocation12], %s97
      %s99 = sshll.u32 [#allocation13], 4
      %s100 = int_to_ptr.vmem [resolvable:$true] %s99
      %105 = dma.hbm_to_vmem [thread:$0]  %s9, 512, %s100, [#allocation12], 128, 128, 8
    $region41: #{netg_forward.1} parent=1 // pred_fallthru
      _
    // Predicated region
    $region42: #{netg_forward.1} parent=1 // pred_check
      _
    $region43: #{netg_forward.1} parent=1 // pred_check_branch
      %107 = sbr.rel (0) target = $region45
    $region44: #{netg_forward.1} parent=1 // pred_region
      _
    $region45: #{netg_forward.1} parent=1 // pred_fallthru
      _
    // Predicated region
    $region46: #{netg_forward.1} parent=1 // pred_check
      _
    $region47: #{netg_forward.1} parent=1 // pred_check_branch
      %109 = sbr.rel (0) target = $region49
    $region48: #{netg_forward.1} parent=1 // pred_region
      _
    $region49: #{netg_forward.1} parent=1 // pred_fallthru
      _
    // Predicated region
    $region50: #{netg_forward.1} parent=1 // pred_check
      _
    $region51: #{netg_forward.1} parent=1 // pred_check_branch
      %111 = sbr.rel (0) target = $region53
    $region52: #{netg_forward.1} parent=1 // pred_region
      _
    $region53: #{netg_forward.1} parent=1 // pred_fallthru
      _
    // Predicated region
    $region54: #{netg_forward.1} parent=1 // pred_check
      _
    $region55: #{netg_forward.1} parent=1 // pred_check_branch
      %113 = sbr.rel (0) target = $region57
    $region56: #{netg_forward.1} parent=1 // pred_region
      _
    $region57: #{netg_forward.1} parent=1 // pred_fallthru
      _
    // Predicated region
    $region58: #{netg_forward.1} parent=1 // pred_check
      _
    $region59: #{netg_forward.1} parent=1 // pred_check_branch
      %115 = sbr.rel (0) target = $region61
    $region60: #{netg_forward.1} parent=1 // pred_region
      _
    $region61: #{netg_forward.1} parent=1 // pred_fallthru
      _
    // Predicated region
    $region62: #{netg_forward.1} parent=1 // pred_check
      _
    $region63: #{netg_forward.1} parent=1 // pred_check_branch
      %117 = sbr.rel (0) target = $region65
    $region64: #{netg_forward.1} parent=1 // pred_region
      %118 = dma.done [#allocation4], 32
    $region65: #{netg_forward.1} parent=1 // pred_fallthru
      _
    // Predicated region
    $region66: #{netg_forward.1} parent=1 // pred_check
      _
    $region67: #{netg_forward.1} parent=1 // pred_check_branch
      %120 = sbr.rel (0) target = $region69
    $region68: #{netg_forward.1} parent=1 // pred_region
      %121 = dma.done [#allocation6], 64
    $region69: #{netg_forward.1} parent=1 // pred_fallthru
      _
    // Predicated region
    $region70: #{netg_forward.1} parent=1 // pred_check
      _
    $region71: #{netg_forward.1} parent=1 // pred_check_branch
      %123 = sbr.rel (0) target = $region73
    $region72: #{netg_forward.1} parent=1 // pred_region
      %124 = dma.done [#allocation6], 16
    $region73: #{netg_forward.1} parent=1 // pred_fallthru
      _
    // Predicated region
    $region74: #{netg_forward.1} parent=1 // pred_check
      _
    $region75: #{netg_forward.1} parent=1 // pred_check_branch
      %126 = sbr.rel (0) target = $region77
    $region76: #{netg_forward.1} parent=1 // pred_region
      %127 = dma.done [#allocation9], 512
    $region77: #{netg_forward.1} parent=1 // pred_fallthru
      _
    // Predicated region
    $region78: #{netg_forward.1} parent=1 // pred_check
      _
    $region79: #{netg_forward.1} parent=1 // pred_check_branch
      %129 = sbr.rel (0) target = $region81
    $region80: #{netg_forward.1} parent=1 // pred_region
      %130 = dma.done [#allocation9], 512
    $region81: #{netg_forward.1} parent=1 // pred_fallthru
      _
    // Predicated region
    $region82: #{netg_forward.1} parent=1 // pred_check
      _
    $region83: #{netg_forward.1} parent=1 // pred_check_branch
      %132 = sbr.rel (0) target = $region85
    $region84: #{netg_forward.1} parent=1 // pred_region
      %133 = dma.done [#allocation12], 16
    $region85: #{netg_forward.1} parent=1 // pred_fallthru
      _
    // Predicated region
    $region86: #{netg_forward.1} parent=1 // pred_check
      _
    $region87: #{netg_forward.1} parent=1 // pred_check_branch
      %135 = sbr.rel (0) target = $region89
    $region88: #{netg_forward.1} parent=1 // pred_region
      %136 = dma.done [#allocation12], 512
    $region89: #{netg_forward.1} parent=1 // pred_fallthru
      _
    %v137 = vld [vmem:[#allocation5] sm:$0xf]
    %v138 = vld [vmem:[#allocation7] sm:$0x1]
    %v139 = vld [vmem:[%s0] sm:$0xff]
    %v140 = vld [vmem:[%s0 + $0x8] sm:$0xff]
    %v142 = vlaneseq
    %v143 = vshrl.u32 %v142, 7
    %v144 = vsub.s32 0, %v143
    %v145 = vrot.slane %v138, %v144
    %vm147 = vcmask 31744
    %v149 = vsel %vm147, %v139, 0
    %v152 = vsel %vm147, %v140, 0
    %vm154 = vcmask 1043456
    %v156 = vsel %vm154, %v137, 0
    %158 = vmatprep.subr.mxu0 0.0
    %159 = vmatpush1.msra.mxu0 0.0
    %160 = vmatprep.subr.mxu0 0.0
    %161 = vmatpush1.msra.mxu0 0.0
    %162 = vmatprep.subr.mxu0 0.0
    %163 = vmatpush1.msra.mxu0 0.0
    %164 = vmatprep.subr.mxu0 0.0
    %165 = vmatpush1.msra.mxu0 0.0
    %166 = vmatprep.subr.mxu0 0.0
    %167 = vmatpush1.msra.mxu0 0.0
    %168 = vmatprep.subr.mxu0 0.0
    %169 = vmatpush1.msra.mxu0 0.0
    %170 = vmatprep.subr.mxu0 0.0
    %171 = vmatpush1.msra.mxu0 0.0
    %172 = vmatprep.subr.mxu0 0.0
    %173 = vmatpush1.msra.mxu0 0.0
    %174 = vmatprep.subr.mxu0 0.0
    %175 = vmatpush1.msra.mxu0 0.0
    %176 = vmatprep.subr.mxu0 0.0
    %177 = vmatpush1.msra.mxu0 0.0
    %178 = vmatprep.subr.mxu0 0.0
    %179 = vmatpush1.msra.mxu0 0.0
    %180 = vmatprep.subr.mxu0 0.0
    %181 = vmatpush1.msra.mxu0 0.0
    %182 = vmatprep.subr.mxu0 0.0
    %183 = vmatpush1.msra.mxu0 0.0
    %184 = vmatprep.subr.mxu0 0.0
    %185 = vmatpush1.msra.mxu0 0.0
    %186 = vmatprep.subr.mxu0 0.0
    %187 = vmatpush1.msra.mxu0 0.0
    %188 = vmatprep.subr.mxu0 0.0
    %189 = vmatpush1.msra.mxu0 %v156
    %190 = vmatprep.subr.mxu0 0.0
    %191 = vmatpush2.msra.mxu0 0.0
    %192 = vmatprep.subr.mxu0 0.0
    %193 = vmatpush2.msra.mxu0 0.0
    %194 = vmatprep.subr.mxu0 0.0
    %195 = vmatpush2.msra.mxu0 0.0
    %196 = vmatprep.subr.mxu0 0.0
    %197 = vmatpush2.msra.mxu0 0.0
    %198 = vmatprep.subr.mxu0 0.0
    %199 = vmatpush2.msra.mxu0 0.0
    %200 = vmatprep.subr.mxu0 0.0
    %201 = vmatpush2.msra.mxu0 0.0
    %202 = vmatprep.subr.mxu0 0.0
    %203 = vmatpush2.msra.mxu0 0.0
    %204 = vmatprep.subr.mxu0 0.0
    %205 = vmatpush2.msra.mxu0 0.0
    %206 = vmatprep.subr.mxu0 0.0
    %207 = vmatpush2.msra.mxu0 0.0
    %208 = vmatprep.subr.mxu0 0.0
    %209 = vmatpush2.msra.mxu0 0.0
    %210 = vmatprep.subr.mxu0 0.0
    %211 = vmatpush2.msra.mxu0 0.0
    %212 = vmatprep.subr.mxu0 0.0
    %213 = vmatpush2.msra.mxu0 0.0
    %214 = vmatprep.subr.mxu0 0.0
    %215 = vmatpush2.msra.mxu0 0.0
    %216 = vmatprep.subr.mxu0 0.0
    %217 = vmatpush2.msra.mxu0 0.0
    %218 = vmatprep.subr.mxu0 0.0
    %219 = vmatpush2.msra.mxu0 0.0
    %220 = vmatprep.subr.mxu0 0.0
    %221 = vmatpush2.msra.mxu0 0.0
    %222 = vmatprep.mubr.f32.mxu0 0.0
    %223 = vmatmul.mubr.f32.gmra.mxu0 %v149
    %v224 = vpop.f32.mrf.mxu0
    %v225 = vadd.f32 %v145, %v224
    %v226 = vpop.f32.mrf.mxu0
    %227 = vmatprep.mubr.f32.mxu0 0.0
    %228 = vmatmul.mubr.f32.gmra.mxu0 %v152
    %v229 = vpop.f32.mrf.mxu0
    %v230 = vadd.f32 %v145, %v229
    %v231 = vpop.f32.mrf.mxu0
    %232 = vdwg.mxu0
    %v233 = vmax.f32 %v225, 0.0
    %v234 = vmax.f32 %v230, 0.0
    %v235 = vld [vmem:[%s1] sm:$0xff]
    %v236 = vld [vmem:[%s1 + $0x8] sm:$0xff]
    %v238 = vsel %vm147, %v235, 0
    %v241 = vsel %vm147, %v236, 0
    %243 = vmatprep.subr.mxu0 0.0
    %244 = vmatpush1.msra.mxu0 0.0
    %245 = vmatprep.subr.mxu0 0.0
    %246 = vmatpush1.msra.mxu0 0.0
    %247 = vmatprep.subr.mxu0 0.0
    %248 = vmatpush1.msra.mxu0 0.0
    %249 = vmatprep.subr.mxu0 0.0
    %250 = vmatpush1.msra.mxu0 0.0
    %251 = vmatprep.subr.mxu0 0.0
    %252 = vmatpush1.msra.mxu0 0.0
    %253 = vmatprep.subr.mxu0 0.0
    %254 = vmatpush1.msra.mxu0 0.0
    %255 = vmatprep.subr.mxu0 0.0
    %256 = vmatpush1.msra.mxu0 0.0
    %257 = vmatprep.subr.mxu0 0.0
    %258 = vmatpush1.msra.mxu0 0.0
    %259 = vmatprep.subr.mxu0 0.0
    %260 = vmatpush1.msra.mxu0 0.0
    %261 = vmatprep.subr.mxu0 0.0
    %262 = vmatpush1.msra.mxu0 0.0
    %263 = vmatprep.subr.mxu0 0.0
    %264 = vmatpush1.msra.mxu0 0.0
    %265 = vmatprep.subr.mxu0 0.0
    %266 = vmatpush1.msra.mxu0 0.0
    %267 = vmatprep.subr.mxu0 0.0
    %268 = vmatpush1.msra.mxu0 0.0
    %269 = vmatprep.subr.mxu0 0.0
    %270 = vmatpush1.msra.mxu0 0.0
    %271 = vmatprep.subr.mxu0 0.0
    %272 = vmatpush1.msra.mxu0 0.0
    %273 = vmatprep.subr.mxu0 0.0
    %274 = vmatpush1.msra.mxu0 %v156
    %275 = vmatprep.subr.mxu0 0.0
    %276 = vmatpush2.msra.mxu0 0.0
    %277 = vmatprep.subr.mxu0 0.0
    %278 = vmatpush2.msra.mxu0 0.0
    %279 = vmatprep.subr.mxu0 0.0
    %280 = vmatpush2.msra.mxu0 0.0
    %281 = vmatprep.subr.mxu0 0.0
    %282 = vmatpush2.msra.mxu0 0.0
    %283 = vmatprep.subr.mxu0 0.0
    %284 = vmatpush2.msra.mxu0 0.0
    %285 = vmatprep.subr.mxu0 0.0
    %286 = vmatpush2.msra.mxu0 0.0
    %287 = vmatprep.subr.mxu0 0.0
    %288 = vmatpush2.msra.mxu0 0.0
    %289 = vmatprep.subr.mxu0 0.0
    %290 = vmatpush2.msra.mxu0 0.0
    %291 = vmatprep.subr.mxu0 0.0
    %292 = vmatpush2.msra.mxu0 0.0
    %293 = vmatprep.subr.mxu0 0.0
    %294 = vmatpush2.msra.mxu0 0.0
    %295 = vmatprep.subr.mxu0 0.0
    %296 = vmatpush2.msra.mxu0 0.0
    %297 = vmatprep.subr.mxu0 0.0
    %298 = vmatpush2.msra.mxu0 0.0
    %299 = vmatprep.subr.mxu0 0.0
    %300 = vmatpush2.msra.mxu0 0.0
    %301 = vmatprep.subr.mxu0 0.0
    %302 = vmatpush2.msra.mxu0 0.0
    %303 = vmatprep.subr.mxu0 0.0
    %304 = vmatpush2.msra.mxu0 0.0
    %305 = vmatprep.subr.mxu0 0.0
    %306 = vmatpush2.msra.mxu0 0.0
    %307 = vmatprep.mubr.f32.mxu0 0.0
    %308 = vmatmul.mubr.f32.gmra.mxu0 %v238
    %v309 = vpop.f32.mrf.mxu0
    %v310 = vadd.f32 %v145, %v309
    %v311 = vpop.f32.mrf.mxu0
    %312 = vmatprep.mubr.f32.mxu0 0.0
    %313 = vmatmul.mubr.f32.gmra.mxu0 %v241
    %v314 = vpop.f32.mrf.mxu0
    %v315 = vadd.f32 %v145, %v314
    %v316 = vpop.f32.mrf.mxu0
    %317 = vdwg.mxu0
    %v318 = vmax.f32 %v310, 0.0
    %v319 = vmax.f32 %v315, 0.0
    %v320 = vld [vmem:[#allocation8] sm:$0xff]
    %v321 = vld [vmem:[#allocation8 + $0x8] sm:$0xff]
    %v322 = vld [vmem:[#allocation8 + $0x10] sm:$0xff]
    %v323 = vld [vmem:[#allocation8 + $0x18] sm:$0xff]
    %v324 = vld [vmem:[#allocation11] sm:$0x1]
    %v326 = vlaneseq
    %v327 = vshrl.u32 %v326, 7
    %v328 = vsub.s32 0, %v327
    %v329 = vrot.slane %v324, %v328
    %vm331 = vcmask 261120
    %v333 = vsel %vm331, %v233, 0
    %v336 = vsel %vm331, %v234, 0
    %338 = vmatprep.subr.mxu0 0.0
    %339 = vmatpush1.msra.mxu0 0.0
    %340 = vmatprep.subr.mxu0 0.0
    %341 = vmatpush1.msra.mxu0 0.0
    %342 = vmatprep.subr.mxu0 0.0
    %343 = vmatpush1.msra.mxu0 0.0
    %344 = vmatprep.subr.mxu0 0.0
    %345 = vmatpush1.msra.mxu0 0.0
    %346 = vmatprep.subr.mxu0 0.0
    %347 = vmatpush1.msra.mxu0 0.0
    %348 = vmatprep.subr.mxu0 0.0
    %349 = vmatpush1.msra.mxu0 0.0
    %350 = vmatprep.subr.mxu0 0.0
    %351 = vmatpush1.msra.mxu0 0.0
    %352 = vmatprep.subr.mxu0 0.0
    %353 = vmatpush1.msra.mxu0 0.0
    %354 = vmatprep.subr.mxu0 0.0
    %355 = vmatpush1.msra.mxu0 0.0
    %356 = vmatprep.subr.mxu0 0.0
    %357 = vmatpush1.msra.mxu0 0.0
    %358 = vmatprep.subr.mxu0 0.0
    %359 = vmatpush1.msra.mxu0 0.0
    %360 = vmatprep.subr.mxu0 0.0
    %361 = vmatpush1.msra.mxu0 0.0
    %362 = vmatprep.subr.mxu0 0.0
    %363 = vmatpush1.msra.mxu0 %v323
    %364 = vmatprep.subr.mxu0 0.0
    %365 = vmatpush1.msra.mxu0 %v322
    %366 = vmatprep.subr.mxu0 0.0
    %367 = vmatpush1.msra.mxu0 %v321
    %368 = vmatprep.subr.mxu0 0.0
    %369 = vmatpush1.msra.mxu0 %v320
    %370 = vmatprep.subr.mxu0 0.0
    %371 = vmatpush2.msra.mxu0 0.0
    %372 = vmatprep.subr.mxu0 0.0
    %373 = vmatpush2.msra.mxu0 0.0
    %374 = vmatprep.subr.mxu0 0.0
    %375 = vmatpush2.msra.mxu0 0.0
    %376 = vmatprep.subr.mxu0 0.0
    %377 = vmatpush2.msra.mxu0 0.0
    %378 = vmatprep.subr.mxu0 0.0
    %379 = vmatpush2.msra.mxu0 0.0
    %380 = vmatprep.subr.mxu0 0.0
    %381 = vmatpush2.msra.mxu0 0.0
    %382 = vmatprep.subr.mxu0 0.0
    %383 = vmatpush2.msra.mxu0 0.0
    %384 = vmatprep.subr.mxu0 0.0
    %385 = vmatpush2.msra.mxu0 0.0
    %386 = vmatprep.subr.mxu0 0.0
    %387 = vmatpush2.msra.mxu0 0.0
    %388 = vmatprep.subr.mxu0 0.0
    %389 = vmatpush2.msra.mxu0 0.0
    %390 = vmatprep.subr.mxu0 0.0
    %391 = vmatpush2.msra.mxu0 0.0
    %392 = vmatprep.subr.mxu0 0.0
    %393 = vmatpush2.msra.mxu0 0.0
    %394 = vmatprep.subr.mxu0 0.0
    %395 = vmatpush2.msra.mxu0 0.0
    %396 = vmatprep.subr.mxu0 0.0
    %397 = vmatpush2.msra.mxu0 0.0
    %398 = vmatprep.subr.mxu0 0.0
    %399 = vmatpush2.msra.mxu0 0.0
    %400 = vmatprep.subr.mxu0 0.0
    %401 = vmatpush2.msra.mxu0 0.0
    %402 = vmatprep.mubr.f32.mxu0 0.0
    %403 = vmatmul.mubr.f32.gmra.mxu0 %v333
    %v404 = vpop.f32.mrf.mxu0
    %v405 = vadd.f32 %v329, %v404
    %v406 = vpop.f32.mrf.mxu0
    %407 = vmatprep.mubr.f32.mxu0 0.0
    %408 = vmatmul.mubr.f32.gmra.mxu0 %v336
    %v409 = vpop.f32.mrf.mxu0
    %v410 = vadd.f32 %v329, %v409
    %v411 = vpop.f32.mrf.mxu0
    %412 = vdwg.mxu0
    %v413 = vld [vmem:[#allocation10] sm:$0xff]
    %v414 = vld [vmem:[#allocation10 + $0x8] sm:$0xff]
    %v415 = vld [vmem:[#allocation10 + $0x10] sm:$0xff]
    %v416 = vld [vmem:[#allocation10 + $0x18] sm:$0xff]
    %v417 = vld [vmem:[%s8] sm:$0x1]
    %v419 = vsel %vm331, 0.0, 0
    %421 = vmatprep.subr.mxu0 0.0
    %422 = vmatpush1.msra.mxu0 0.0
    %423 = vmatprep.subr.mxu0 0.0
    %424 = vmatpush1.msra.mxu0 0.0
    %425 = vmatprep.subr.mxu0 0.0
    %426 = vmatpush1.msra.mxu0 0.0
    %427 = vmatprep.subr.mxu0 0.0
    %428 = vmatpush1.msra.mxu0 0.0
    %429 = vmatprep.subr.mxu0 0.0
    %430 = vmatpush1.msra.mxu0 0.0
    %431 = vmatprep.subr.mxu0 0.0
    %432 = vmatpush1.msra.mxu0 0.0
    %433 = vmatprep.subr.mxu0 0.0
    %434 = vmatpush1.msra.mxu0 0.0
    %435 = vmatprep.subr.mxu0 0.0
    %436 = vmatpush1.msra.mxu0 0.0
    %437 = vmatprep.subr.mxu0 0.0
    %438 = vmatpush1.msra.mxu0 0.0
    %439 = vmatprep.subr.mxu0 0.0
    %440 = vmatpush1.msra.mxu0 0.0
    %441 = vmatprep.subr.mxu0 0.0
    %442 = vmatpush1.msra.mxu0 0.0
    %443 = vmatprep.subr.mxu0 0.0
    %444 = vmatpush1.msra.mxu0 0.0
    %445 = vmatprep.subr.mxu0 0.0
    %446 = vmatpush1.msra.mxu0 %v416
    %447 = vmatprep.subr.mxu0 0.0
    %448 = vmatpush1.msra.mxu0 %v415
    %449 = vmatprep.subr.mxu0 0.0
    %450 = vmatpush1.msra.mxu0 %v414
    %451 = vmatprep.subr.mxu0 0.0
    %452 = vmatpush1.msra.mxu0 %v413
    %453 = vmatprep.subr.mxu0 0.0
    %454 = vmatpush2.msra.mxu0 0.0
    %455 = vmatprep.subr.mxu0 0.0
    %456 = vmatpush2.msra.mxu0 0.0
    %457 = vmatprep.subr.mxu0 0.0
    %458 = vmatpush2.msra.mxu0 0.0
    %459 = vmatprep.subr.mxu0 0.0
    %460 = vmatpush2.msra.mxu0 0.0
    %461 = vmatprep.subr.mxu0 0.0
    %462 = vmatpush2.msra.mxu0 0.0
    %463 = vmatprep.subr.mxu0 0.0
    %464 = vmatpush2.msra.mxu0 0.0
    %465 = vmatprep.subr.mxu0 0.0
    %466 = vmatpush2.msra.mxu0 0.0
    %467 = vmatprep.subr.mxu0 0.0
    %468 = vmatpush2.msra.mxu0 0.0
    %469 = vmatprep.subr.mxu0 0.0
    %470 = vmatpush2.msra.mxu0 0.0
    %471 = vmatprep.subr.mxu0 0.0
    %472 = vmatpush2.msra.mxu0 0.0
    %473 = vmatprep.subr.mxu0 0.0
    %474 = vmatpush2.msra.mxu0 0.0
    %475 = vmatprep.subr.mxu0 0.0
    %476 = vmatpush2.msra.mxu0 0.0
    %477 = vmatprep.subr.mxu0 0.0
    %478 = vmatpush2.msra.mxu0 0.0
    %479 = vmatprep.subr.mxu0 0.0
    %480 = vmatpush2.msra.mxu0 0.0
    %481 = vmatprep.subr.mxu0 0.0
    %482 = vmatpush2.msra.mxu0 0.0
    %483 = vmatprep.subr.mxu0 0.0
    %484 = vmatpush2.msra.mxu0 0.0
    %485 = vmatprep.mubr.f32.mxu0 0.0
    %486 = vmatmul.mubr.f32.gmra.mxu0 %v419
    %v487 = vpop.f32.mrf.mxu0
    %v488 = vadd.f32 0.0, %v487
    %v489 = vpop.f32.mrf.mxu0
    %490 = vdwg.mxu0
    %v491 = vadd.f32 %v405, %v488
    %v492 = vxor.u32 %v491, 2147483648
    %v493 = vmul.f32 %v492, 1.442695
    %v494 = vpow.pop %v493
    %v495 = vadd.f32 %v494, 1.0
    %v496 = vrcp.pop %v495
    %v497 = vmul.f32 1.0, %v496
    %v499 = vlaneseq
    %v500 = vshrl.u32 %v499, 7
    %v501 = vsub.s32 0, %v500
    %v502 = vrot.slane %v417, %v501
    %503 = vrot.lane.b32.xlu0 %v502, 64
    %v504 = vpop.permute.xlu0 %503
    %v506 = vadd.f32 %v488, %v504
    %508 = vrot.lane.b32.xlu0 %v506, 64
    %v509 = vpop.permute.xlu0 %508
    %v511 = vmul.f32 %v497, %v509
    %513 = vrot.lane.b32.xlu0 %v511, 64
    %v514 = vpop.permute.xlu0 %513
    %v516 = vadd.f32 %v405, %v514
    %v517 = vtanh.pop %v516
    %v518 = vsub.f32 1.0, %v497
    %520 = vrot.lane.b32.xlu0 %v517, 96
    %v521 = vpop.permute.xlu0 %520
    %v523 = vmul.f32 %v518, %v521
    %v524 = vmul.f32 %v497, 0.0
    %v525 = vadd.f32 %v523, %v524
    %527 = vrot.lane.b32.xlu0 %v525, 96
    %v528 = vpop.permute.xlu0 %527
    %v529 = vsel %vm331, %v528, 0
    %531 = vmatprep.subr.mxu0 0.0
    %532 = vmatpush1.msra.mxu0 0.0
    %533 = vmatprep.subr.mxu0 0.0
    %534 = vmatpush1.msra.mxu0 0.0
    %535 = vmatprep.subr.mxu0 0.0
    %536 = vmatpush1.msra.mxu0 0.0
    %537 = vmatprep.subr.mxu0 0.0
    %538 = vmatpush1.msra.mxu0 0.0
    %539 = vmatprep.subr.mxu0 0.0
    %540 = vmatpush1.msra.mxu0 0.0
    %541 = vmatprep.subr.mxu0 0.0
    %542 = vmatpush1.msra.mxu0 0.0
    %543 = vmatprep.subr.mxu0 0.0
    %544 = vmatpush1.msra.mxu0 0.0
    %545 = vmatprep.subr.mxu0 0.0
    %546 = vmatpush1.msra.mxu0 0.0
    %547 = vmatprep.subr.mxu0 0.0
    %548 = vmatpush1.msra.mxu0 0.0
    %549 = vmatprep.subr.mxu0 0.0
    %550 = vmatpush1.msra.mxu0 0.0
    %551 = vmatprep.subr.mxu0 0.0
    %552 = vmatpush1.msra.mxu0 0.0
    %553 = vmatprep.subr.mxu0 0.0
    %554 = vmatpush1.msra.mxu0 0.0
    %555 = vmatprep.subr.mxu0 0.0
    %556 = vmatpush1.msra.mxu0 %v416
    %557 = vmatprep.subr.mxu0 0.0
    %558 = vmatpush1.msra.mxu0 %v415
    %559 = vmatprep.subr.mxu0 0.0
    %560 = vmatpush1.msra.mxu0 %v414
    %561 = vmatprep.subr.mxu0 0.0
    %562 = vmatpush1.msra.mxu0 %v413
    %563 = vmatprep.subr.mxu0 0.0
    %564 = vmatpush2.msra.mxu0 0.0
    %565 = vmatprep.subr.mxu0 0.0
    %566 = vmatpush2.msra.mxu0 0.0
    %567 = vmatprep.subr.mxu0 0.0
    %568 = vmatpush2.msra.mxu0 0.0
    %569 = vmatprep.subr.mxu0 0.0
    %570 = vmatpush2.msra.mxu0 0.0
    %571 = vmatprep.subr.mxu0 0.0
    %572 = vmatpush2.msra.mxu0 0.0
    %573 = vmatprep.subr.mxu0 0.0
    %574 = vmatpush2.msra.mxu0 0.0
    %575 = vmatprep.subr.mxu0 0.0
    %576 = vmatpush2.msra.mxu0 0.0
    %577 = vmatprep.subr.mxu0 0.0
    %578 = vmatpush2.msra.mxu0 0.0
    %579 = vmatprep.subr.mxu0 0.0
    %580 = vmatpush2.msra.mxu0 0.0
    %581 = vmatprep.subr.mxu0 0.0
    %582 = vmatpush2.msra.mxu0 0.0
    %583 = vmatprep.subr.mxu0 0.0
    %584 = vmatpush2.msra.mxu0 0.0
    %585 = vmatprep.subr.mxu0 0.0
    %586 = vmatpush2.msra.mxu0 0.0
    %587 = vmatprep.subr.mxu0 0.0
    %588 = vmatpush2.msra.mxu0 0.0
    %589 = vmatprep.subr.mxu0 0.0
    %590 = vmatpush2.msra.mxu0 0.0
    %591 = vmatprep.subr.mxu0 0.0
    %592 = vmatpush2.msra.mxu0 0.0
    %593 = vmatprep.subr.mxu0 0.0
    %594 = vmatpush2.msra.mxu0 0.0
    %595 = vmatprep.mubr.f32.mxu0 0.0
    %596 = vmatmul.mubr.f32.gmra.mxu0 %v529
    %v597 = vpop.f32.mrf.mxu0
    %v598 = vadd.f32 0.0, %v597
    %v599 = vpop.f32.mrf.mxu0
    %600 = vdwg.mxu0
    %v602 = vrot.slane %v598, 6
    %v604 = vadd.f32 %v405, %v602
    %v605 = vxor.u32 %v604, 2147483648
    %v606 = vmul.f32 %v605, 1.442695
    %v607 = vpow.pop %v606
    %v608 = vadd.f32 %v607, 1.0
    %v609 = vrcp.pop %v608
    %v610 = vmul.f32 1.0, %v609
    %v611 = vadd.f32 %v598, %v504
    %v613 = vrot.slane %v611, 6
    %614 = vrot.lane.b32.xlu0 %v613, 64
    %v615 = vpop.permute.xlu0 %614
    %v617 = vmul.f32 %v610, %v615
    %619 = vrot.lane.b32.xlu0 %v617, 64
    %v620 = vpop.permute.xlu0 %619
    %v622 = vadd.f32 %v405, %v620
    %v623 = vtanh.pop %v622
    %v624 = vsub.f32 1.0, %v610
    %626 = vrot.lane.b32.xlu0 %v623, 96
    %v627 = vpop.permute.xlu0 %626
    %v629 = vmul.f32 %v624, %v627
    %v630 = vrot.slane %v525, 6
    %v632 = vmul.f32 %v610, %v630
    %v633 = vadd.f32 %v629, %v632
    %v635 = vrot.slane %v633, 2
    %636 = vrot.lane.b32.xlu0 %v635, 96
    %v637 = vpop.permute.xlu0 %636
    %v638 = vsel %vm331, %v637, 0
    %640 = vmatprep.subr.mxu0 0.0
    %641 = vmatpush1.msra.mxu0 0.0
    %642 = vmatprep.subr.mxu0 0.0
    %643 = vmatpush1.msra.mxu0 0.0
    %644 = vmatprep.subr.mxu0 0.0
    %645 = vmatpush1.msra.mxu0 0.0
    %646 = vmatprep.subr.mxu0 0.0
    %647 = vmatpush1.msra.mxu0 0.0
    %648 = vmatprep.subr.mxu0 0.0
    %649 = vmatpush1.msra.mxu0 0.0
    %650 = vmatprep.subr.mxu0 0.0
    %651 = vmatpush1.msra.mxu0 0.0
    %652 = vmatprep.subr.mxu0 0.0
    %653 = vmatpush1.msra.mxu0 0.0
    %654 = vmatprep.subr.mxu0 0.0
    %655 = vmatpush1.msra.mxu0 0.0
    %656 = vmatprep.subr.mxu0 0.0
    %657 = vmatpush1.msra.mxu0 0.0
    %658 = vmatprep.subr.mxu0 0.0
    %659 = vmatpush1.msra.mxu0 0.0
    %660 = vmatprep.subr.mxu0 0.0
    %661 = vmatpush1.msra.mxu0 0.0
    %662 = vmatprep.subr.mxu0 0.0
    %663 = vmatpush1.msra.mxu0 0.0
    %664 = vmatprep.subr.mxu0 0.0
    %665 = vmatpush1.msra.mxu0 %v416
    %666 = vmatprep.subr.mxu0 0.0
    %667 = vmatpush1.msra.mxu0 %v415
    %668 = vmatprep.subr.mxu0 0.0
    %669 = vmatpush1.msra.mxu0 %v414
    %670 = vmatprep.subr.mxu0 0.0
    %671 = vmatpush1.msra.mxu0 %v413
    %672 = vmatprep.subr.mxu0 0.0
    %673 = vmatpush2.msra.mxu0 0.0
    %674 = vmatprep.subr.mxu0 0.0
    %675 = vmatpush2.msra.mxu0 0.0
    %676 = vmatprep.subr.mxu0 0.0
    %677 = vmatpush2.msra.mxu0 0.0
    %678 = vmatprep.subr.mxu0 0.0
    %679 = vmatpush2.msra.mxu0 0.0
    %680 = vmatprep.subr.mxu0 0.0
    %681 = vmatpush2.msra.mxu0 0.0
    %682 = vmatprep.subr.mxu0 0.0
    %683 = vmatpush2.msra.mxu0 0.0
    %684 = vmatprep.subr.mxu0 0.0
    %685 = vmatpush2.msra.mxu0 0.0
    %686 = vmatprep.subr.mxu0 0.0
    %687 = vmatpush2.msra.mxu0 0.0
    %688 = vmatprep.subr.mxu0 0.0
    %689 = vmatpush2.msra.mxu0 0.0
    %690 = vmatprep.subr.mxu0 0.0
    %691 = vmatpush2.msra.mxu0 0.0
    %692 = vmatprep.subr.mxu0 0.0
    %693 = vmatpush2.msra.mxu0 0.0
    %694 = vmatprep.subr.mxu0 0.0
    %695 = vmatpush2.msra.mxu0 0.0
    %696 = vmatprep.subr.mxu0 0.0
    %697 = vmatpush2.msra.mxu0 0.0
    %698 = vmatprep.subr.mxu0 0.0
    %699 = vmatpush2.msra.mxu0 0.0
    %700 = vmatprep.subr.mxu0 0.0
    %701 = vmatpush2.msra.mxu0 0.0
    %702 = vmatprep.subr.mxu0 0.0
    %703 = vmatpush2.msra.mxu0 0.0
    %704 = vmatprep.mubr.f32.mxu0 0.0
    %705 = vmatmul.mubr.f32.gmra.mxu0 %v638
    %v706 = vpop.f32.mrf.mxu0
    %v707 = vadd.f32 0.0, %v706
    %v708 = vpop.f32.mrf.mxu0
    %709 = vdwg.mxu0
    %v711 = vrot.slane %v707, 4
    %v713 = vadd.f32 %v405, %v711
    %v714 = vxor.u32 %v713, 2147483648
    %v715 = vmul.f32 %v714, 1.442695
    %v716 = vpow.pop %v715
    %v717 = vadd.f32 %v716, 1.0
    %v718 = vrcp.pop %v717
    %v719 = vmul.f32 1.0, %v718
    %v720 = vadd.f32 %v707, %v504
    %v722 = vrot.slane %v720, 4
    %723 = vrot.lane.b32.xlu0 %v722, 64
    %v724 = vpop.permute.xlu0 %723
    %v726 = vmul.f32 %v719, %v724
    %728 = vrot.lane.b32.xlu0 %v726, 64
    %v729 = vpop.permute.xlu0 %728
    %v731 = vadd.f32 %v405, %v729
    %v732 = vtanh.pop %v731
    %v733 = vsub.f32 1.0, %v719
    %735 = vrot.lane.b32.xlu0 %v732, 96
    %v736 = vpop.permute.xlu0 %735
    %v738 = vmul.f32 %v733, %v736
    %v739 = vrot.slane %v633, 6
    %v741 = vmul.f32 %v719, %v739
    %v742 = vadd.f32 %v738, %v741
    %v744 = vrot.slane %v742, 4
    %745 = vrot.lane.b32.xlu0 %v744, 96
    %v746 = vpop.permute.xlu0 %745
    %v747 = vsel %vm331, %v746, 0
    %749 = vmatprep.subr.mxu0 0.0
    %750 = vmatpush1.msra.mxu0 0.0
    %751 = vmatprep.subr.mxu0 0.0
    %752 = vmatpush1.msra.mxu0 0.0
    %753 = vmatprep.subr.mxu0 0.0
    %754 = vmatpush1.msra.mxu0 0.0
    %755 = vmatprep.subr.mxu0 0.0
    %756 = vmatpush1.msra.mxu0 0.0
    %757 = vmatprep.subr.mxu0 0.0
    %758 = vmatpush1.msra.mxu0 0.0
    %759 = vmatprep.subr.mxu0 0.0
    %760 = vmatpush1.msra.mxu0 0.0
    %761 = vmatprep.subr.mxu0 0.0
    %762 = vmatpush1.msra.mxu0 0.0
    %763 = vmatprep.subr.mxu0 0.0
    %764 = vmatpush1.msra.mxu0 0.0
    %765 = vmatprep.subr.mxu0 0.0
    %766 = vmatpush1.msra.mxu0 0.0
    %767 = vmatprep.subr.mxu0 0.0
    %768 = vmatpush1.msra.mxu0 0.0
    %769 = vmatprep.subr.mxu0 0.0
    %770 = vmatpush1.msra.mxu0 0.0
    %771 = vmatprep.subr.mxu0 0.0
    %772 = vmatpush1.msra.mxu0 0.0
    %773 = vmatprep.subr.mxu0 0.0
    %774 = vmatpush1.msra.mxu0 %v416
    %775 = vmatprep.subr.mxu0 0.0
    %776 = vmatpush1.msra.mxu0 %v415
    %777 = vmatprep.subr.mxu0 0.0
    %778 = vmatpush1.msra.mxu0 %v414
    %779 = vmatprep.subr.mxu0 0.0
    %780 = vmatpush1.msra.mxu0 %v413
    %781 = vmatprep.subr.mxu0 0.0
    %782 = vmatpush2.msra.mxu0 0.0
    %783 = vmatprep.subr.mxu0 0.0
    %784 = vmatpush2.msra.mxu0 0.0
    %785 = vmatprep.subr.mxu0 0.0
    %786 = vmatpush2.msra.mxu0 0.0
    %787 = vmatprep.subr.mxu0 0.0
    %788 = vmatpush2.msra.mxu0 0.0
    %789 = vmatprep.subr.mxu0 0.0
    %790 = vmatpush2.msra.mxu0 0.0
    %791 = vmatprep.subr.mxu0 0.0
    %792 = vmatpush2.msra.mxu0 0.0
    %793 = vmatprep.subr.mxu0 0.0
    %794 = vmatpush2.msra.mxu0 0.0
    %795 = vmatprep.subr.mxu0 0.0
    %796 = vmatpush2.msra.mxu0 0.0
    %797 = vmatprep.subr.mxu0 0.0
    %798 = vmatpush2.msra.mxu0 0.0
    %799 = vmatprep.subr.mxu0 0.0
    %800 = vmatpush2.msra.mxu0 0.0
    %801 = vmatprep.subr.mxu0 0.0
    %802 = vmatpush2.msra.mxu0 0.0
    %803 = vmatprep.subr.mxu0 0.0
    %804 = vmatpush2.msra.mxu0 0.0
    %805 = vmatprep.subr.mxu0 0.0
    %806 = vmatpush2.msra.mxu0 0.0
    %807 = vmatprep.subr.mxu0 0.0
    %808 = vmatpush2.msra.mxu0 0.0
    %809 = vmatprep.subr.mxu0 0.0
    %810 = vmatpush2.msra.mxu0 0.0
    %811 = vmatprep.subr.mxu0 0.0
    %812 = vmatpush2.msra.mxu0 0.0
    %813 = vmatprep.mubr.f32.mxu0 0.0
    %814 = vmatmul.mubr.f32.gmra.mxu0 %v747
    %v815 = vpop.f32.mrf.mxu0
    %v816 = vadd.f32 0.0, %v815
    %v817 = vpop.f32.mrf.mxu0
    %818 = vdwg.mxu0
    %v820 = vrot.slane %v816, 2
    %v822 = vadd.f32 %v405, %v820
    %v823 = vxor.u32 %v822, 2147483648
    %v824 = vmul.f32 %v823, 1.442695
    %v825 = vpow.pop %v824
    %v826 = vadd.f32 %v825, 1.0
    %v827 = vrcp.pop %v826
    %v828 = vmul.f32 1.0, %v827
    %v829 = vadd.f32 %v816, %v504
    %v831 = vrot.slane %v829, 2
    %832 = vrot.lane.b32.xlu0 %v831, 64
    %v833 = vpop.permute.xlu0 %832
    %v835 = vmul.f32 %v828, %v833
    %837 = vrot.lane.b32.xlu0 %v835, 64
    %v838 = vpop.permute.xlu0 %837
    %v840 = vadd.f32 %v405, %v838
    %v841 = vtanh.pop %v840
    %v842 = vsub.f32 1.0, %v828
    %844 = vrot.lane.b32.xlu0 %v841, 96
    %v845 = vpop.permute.xlu0 %844
    %v847 = vmul.f32 %v842, %v845
    %v848 = vrot.slane %v742, 6
    %v850 = vmul.f32 %v828, %v848
    %v851 = vadd.f32 %v847, %v850
    %v853 = vrot.slane %v851, 6
    %854 = vrot.lane.b32.xlu0 %v853, 96
    %v855 = vpop.permute.xlu0 %854
    %v856 = vsel %vm331, %v855, 0
    %858 = vmatprep.subr.mxu0 0.0
    %859 = vmatpush1.msra.mxu0 0.0
    %860 = vmatprep.subr.mxu0 0.0
    %861 = vmatpush1.msra.mxu0 0.0
    %862 = vmatprep.subr.mxu0 0.0
    %863 = vmatpush1.msra.mxu0 0.0
    %864 = vmatprep.subr.mxu0 0.0
    %865 = vmatpush1.msra.mxu0 0.0
    %866 = vmatprep.subr.mxu0 0.0
    %867 = vmatpush1.msra.mxu0 0.0
    %868 = vmatprep.subr.mxu0 0.0
    %869 = vmatpush1.msra.mxu0 0.0
    %870 = vmatprep.subr.mxu0 0.0
    %871 = vmatpush1.msra.mxu0 0.0
    %872 = vmatprep.subr.mxu0 0.0
    %873 = vmatpush1.msra.mxu0 0.0
    %874 = vmatprep.subr.mxu0 0.0
    %875 = vmatpush1.msra.mxu0 0.0
    %876 = vmatprep.subr.mxu0 0.0
    %877 = vmatpush1.msra.mxu0 0.0
    %878 = vmatprep.subr.mxu0 0.0
    %879 = vmatpush1.msra.mxu0 0.0
    %880 = vmatprep.subr.mxu0 0.0
    %881 = vmatpush1.msra.mxu0 0.0
    %882 = vmatprep.subr.mxu0 0.0
    %883 = vmatpush1.msra.mxu0 %v416
    %884 = vmatprep.subr.mxu0 0.0
    %885 = vmatpush1.msra.mxu0 %v415
    %886 = vmatprep.subr.mxu0 0.0
    %887 = vmatpush1.msra.mxu0 %v414
    %888 = vmatprep.subr.mxu0 0.0
    %889 = vmatpush1.msra.mxu0 %v413
    %890 = vmatprep.subr.mxu0 0.0
    %891 = vmatpush2.msra.mxu0 0.0
    %892 = vmatprep.subr.mxu0 0.0
    %893 = vmatpush2.msra.mxu0 0.0
    %894 = vmatprep.subr.mxu0 0.0
    %895 = vmatpush2.msra.mxu0 0.0
    %896 = vmatprep.subr.mxu0 0.0
    %897 = vmatpush2.msra.mxu0 0.0
    %898 = vmatprep.subr.mxu0 0.0
    %899 = vmatpush2.msra.mxu0 0.0
    %900 = vmatprep.subr.mxu0 0.0
    %901 = vmatpush2.msra.mxu0 0.0
    %902 = vmatprep.subr.mxu0 0.0
    %903 = vmatpush2.msra.mxu0 0.0
    %904 = vmatprep.subr.mxu0 0.0
    %905 = vmatpush2.msra.mxu0 0.0
    %906 = vmatprep.subr.mxu0 0.0
    %907 = vmatpush2.msra.mxu0 0.0
    %908 = vmatprep.subr.mxu0 0.0
    %909 = vmatpush2.msra.mxu0 0.0
    %910 = vmatprep.subr.mxu0 0.0
    %911 = vmatpush2.msra.mxu0 0.0
    %912 = vmatprep.subr.mxu0 0.0
    %913 = vmatpush2.msra.mxu0 0.0
    %914 = vmatprep.subr.mxu0 0.0
    %915 = vmatpush2.msra.mxu0 0.0
    %916 = vmatprep.subr.mxu0 0.0
    %917 = vmatpush2.msra.mxu0 0.0
    %918 = vmatprep.subr.mxu0 0.0
    %919 = vmatpush2.msra.mxu0 0.0
    %920 = vmatprep.subr.mxu0 0.0
    %921 = vmatpush2.msra.mxu0 0.0
    %922 = vmatprep.mubr.f32.mxu0 0.0
    %923 = vmatmul.mubr.f32.gmra.mxu0 %v856
    %v924 = vpop.f32.mrf.mxu0
    %v925 = vadd.f32 0.0, %v924
    %v926 = vpop.f32.mrf.mxu0
    %927 = vdwg.mxu0
    %v928 = vadd.f32 %v410, %v925
    %v929 = vxor.u32 %v928, 2147483648
    %v930 = vmul.f32 %v929, 1.442695
    %v931 = vpow.pop %v930
    %v932 = vadd.f32 %v931, 1.0
    %v933 = vrcp.pop %v932
    %v934 = vmul.f32 1.0, %v933
    %v935 = vadd.f32 %v925, %v504
    %937 = vrot.lane.b32.xlu0 %v935, 64
    %v938 = vpop.permute.xlu0 %937
    %v940 = vmul.f32 %v934, %v938
    %942 = vrot.lane.b32.xlu0 %v940, 64
    %v943 = vpop.permute.xlu0 %942
    %v945 = vadd.f32 %v410, %v943
    %v946 = vtanh.pop %v945
    %v947 = vsub.f32 1.0, %v934
    %949 = vrot.lane.b32.xlu0 %v946, 96
    %v950 = vpop.permute.xlu0 %949
    %v952 = vmul.f32 %v947, %v950
    %v954 = vmul.f32 %v934, %v853
    %v955 = vadd.f32 %v952, %v954
    %957 = vrot.lane.b32.xlu0 %v955, 96
    %v958 = vpop.permute.xlu0 %957
    %v959 = vsel %vm331, %v958, 0
    %961 = vmatprep.subr.mxu0 0.0
    %962 = vmatpush1.msra.mxu0 0.0
    %963 = vmatprep.subr.mxu0 0.0
    %964 = vmatpush1.msra.mxu0 0.0
    %965 = vmatprep.subr.mxu0 0.0
    %966 = vmatpush1.msra.mxu0 0.0
    %967 = vmatprep.subr.mxu0 0.0
    %968 = vmatpush1.msra.mxu0 0.0
    %969 = vmatprep.subr.mxu0 0.0
    %970 = vmatpush1.msra.mxu0 0.0
    %971 = vmatprep.subr.mxu0 0.0
    %972 = vmatpush1.msra.mxu0 0.0
    %973 = vmatprep.subr.mxu0 0.0
    %974 = vmatpush1.msra.mxu0 0.0
    %975 = vmatprep.subr.mxu0 0.0
    %976 = vmatpush1.msra.mxu0 0.0
    %977 = vmatprep.subr.mxu0 0.0
    %978 = vmatpush1.msra.mxu0 0.0
    %979 = vmatprep.subr.mxu0 0.0
    %980 = vmatpush1.msra.mxu0 0.0
    %981 = vmatprep.subr.mxu0 0.0
    %982 = vmatpush1.msra.mxu0 0.0
    %983 = vmatprep.subr.mxu0 0.0
    %984 = vmatpush1.msra.mxu0 0.0
    %985 = vmatprep.subr.mxu0 0.0
    %986 = vmatpush1.msra.mxu0 %v416
    %987 = vmatprep.subr.mxu0 0.0
    %988 = vmatpush1.msra.mxu0 %v415
    %989 = vmatprep.subr.mxu0 0.0
    %990 = vmatpush1.msra.mxu0 %v414
    %991 = vmatprep.subr.mxu0 0.0
    %992 = vmatpush1.msra.mxu0 %v413
    %993 = vmatprep.subr.mxu0 0.0
    %994 = vmatpush2.msra.mxu0 0.0
    %995 = vmatprep.subr.mxu0 0.0
    %996 = vmatpush2.msra.mxu0 0.0
    %997 = vmatprep.subr.mxu0 0.0
    %998 = vmatpush2.msra.mxu0 0.0
    %999 = vmatprep.subr.mxu0 0.0
    %1000 = vmatpush2.msra.mxu0 0.0
    %1001 = vmatprep.subr.mxu0 0.0
    %1002 = vmatpush2.msra.mxu0 0.0
    %1003 = vmatprep.subr.mxu0 0.0
    %1004 = vmatpush2.msra.mxu0 0.0
    %1005 = vmatprep.subr.mxu0 0.0
    %1006 = vmatpush2.msra.mxu0 0.0
    %1007 = vmatprep.subr.mxu0 0.0
    %1008 = vmatpush2.msra.mxu0 0.0
    %1009 = vmatprep.subr.mxu0 0.0
    %1010 = vmatpush2.msra.mxu0 0.0
    %1011 = vmatprep.subr.mxu0 0.0
    %1012 = vmatpush2.msra.mxu0 0.0
    %1013 = vmatprep.subr.mxu0 0.0
    %1014 = vmatpush2.msra.mxu0 0.0
    %1015 = vmatprep.subr.mxu0 0.0
    %1016 = vmatpush2.msra.mxu0 0.0
    %1017 = vmatprep.subr.mxu0 0.0
    %1018 = vmatpush2.msra.mxu0 0.0
    %1019 = vmatprep.subr.mxu0 0.0
    %1020 = vmatpush2.msra.mxu0 0.0
    %1021 = vmatprep.subr.mxu0 0.0
    %1022 = vmatpush2.msra.mxu0 0.0
    %1023 = vmatprep.subr.mxu0 0.0
    %1024 = vmatpush2.msra.mxu0 0.0
    %1025 = vmatprep.mubr.f32.mxu0 0.0
    %1026 = vmatmul.mubr.f32.gmra.mxu0 %v959
    %v1027 = vpop.f32.mrf.mxu0
    %v1028 = vadd.f32 0.0, %v1027
    %v1029 = vpop.f32.mrf.mxu0
    %1030 = vdwg.mxu0
    %v1032 = vrot.slane %v1028, 6
    %v1034 = vadd.f32 %v410, %v1032
    %v1035 = vxor.u32 %v1034, 2147483648
    %v1036 = vmul.f32 %v1035, 1.442695
    %v1037 = vpow.pop %v1036
    %v1038 = vadd.f32 %v1037, 1.0
    %v1039 = vrcp.pop %v1038
    %v1040 = vmul.f32 1.0, %v1039
    %v1041 = vadd.f32 %v1028, %v504
    %v1043 = vrot.slane %v1041, 6
    %1044 = vrot.lane.b32.xlu0 %v1043, 64
    %v1045 = vpop.permute.xlu0 %1044
    %v1047 = vmul.f32 %v1040, %v1045
    %1049 = vrot.lane.b32.xlu0 %v1047, 64
    %v1050 = vpop.permute.xlu0 %1049
    %v1052 = vadd.f32 %v410, %v1050
    %v1053 = vtanh.pop %v1052
    %v1054 = vsub.f32 1.0, %v1040
    %1056 = vrot.lane.b32.xlu0 %v1053, 96
    %v1057 = vpop.permute.xlu0 %1056
    %v1059 = vmul.f32 %v1054, %v1057
    %v1060 = vrot.slane %v955, 6
    %v1062 = vmul.f32 %v1040, %v1060
    %v1063 = vadd.f32 %v1059, %v1062
    %v1065 = vrot.slane %v1063, 2
    %1066 = vrot.lane.b32.xlu0 %v1065, 96
    %v1067 = vpop.permute.xlu0 %1066
    %v1068 = vsel %vm331, %v1067, 0
    %1070 = vmatprep.subr.mxu0 0.0
    %1071 = vmatpush1.msra.mxu0 0.0
    %1072 = vmatprep.subr.mxu0 0.0
    %1073 = vmatpush1.msra.mxu0 0.0
    %1074 = vmatprep.subr.mxu0 0.0
    %1075 = vmatpush1.msra.mxu0 0.0
    %1076 = vmatprep.subr.mxu0 0.0
    %1077 = vmatpush1.msra.mxu0 0.0
    %1078 = vmatprep.subr.mxu0 0.0
    %1079 = vmatpush1.msra.mxu0 0.0
    %1080 = vmatprep.subr.mxu0 0.0
    %1081 = vmatpush1.msra.mxu0 0.0
    %1082 = vmatprep.subr.mxu0 0.0
    %1083 = vmatpush1.msra.mxu0 0.0
    %1084 = vmatprep.subr.mxu0 0.0
    %1085 = vmatpush1.msra.mxu0 0.0
    %1086 = vmatprep.subr.mxu0 0.0
    %1087 = vmatpush1.msra.mxu0 0.0
    %1088 = vmatprep.subr.mxu0 0.0
    %1089 = vmatpush1.msra.mxu0 0.0
    %1090 = vmatprep.subr.mxu0 0.0
    %1091 = vmatpush1.msra.mxu0 0.0
    %1092 = vmatprep.subr.mxu0 0.0
    %1093 = vmatpush1.msra.mxu0 0.0
    %1094 = vmatprep.subr.mxu0 0.0
    %1095 = vmatpush1.msra.mxu0 %v416
    %1096 = vmatprep.subr.mxu0 0.0
    %1097 = vmatpush1.msra.mxu0 %v415
    %1098 = vmatprep.subr.mxu0 0.0
    %1099 = vmatpush1.msra.mxu0 %v414
    %1100 = vmatprep.subr.mxu0 0.0
    %1101 = vmatpush1.msra.mxu0 %v413
    %1102 = vmatprep.subr.mxu0 0.0
    %1103 = vmatpush2.msra.mxu0 0.0
    %1104 = vmatprep.subr.mxu0 0.0
    %1105 = vmatpush2.msra.mxu0 0.0
    %1106 = vmatprep.subr.mxu0 0.0
    %1107 = vmatpush2.msra.mxu0 0.0
    %1108 = vmatprep.subr.mxu0 0.0
    %1109 = vmatpush2.msra.mxu0 0.0
    %1110 = vmatprep.subr.mxu0 0.0
    %1111 = vmatpush2.msra.mxu0 0.0
    %1112 = vmatprep.subr.mxu0 0.0
    %1113 = vmatpush2.msra.mxu0 0.0
    %1114 = vmatprep.subr.mxu0 0.0
    %1115 = vmatpush2.msra.mxu0 0.0
    %1116 = vmatprep.subr.mxu0 0.0
    %1117 = vmatpush2.msra.mxu0 0.0
    %1118 = vmatprep.subr.mxu0 0.0
    %1119 = vmatpush2.msra.mxu0 0.0
    %1120 = vmatprep.subr.mxu0 0.0
    %1121 = vmatpush2.msra.mxu0 0.0
    %1122 = vmatprep.subr.mxu0 0.0
    %1123 = vmatpush2.msra.mxu0 0.0
    %1124 = vmatprep.subr.mxu0 0.0
    %1125 = vmatpush2.msra.mxu0 0.0
    %1126 = vmatprep.subr.mxu0 0.0
    %1127 = vmatpush2.msra.mxu0 0.0
    %1128 = vmatprep.subr.mxu0 0.0
    %1129 = vmatpush2.msra.mxu0 0.0
    %1130 = vmatprep.subr.mxu0 0.0
    %1131 = vmatpush2.msra.mxu0 0.0
    %1132 = vmatprep.subr.mxu0 0.0
    %1133 = vmatpush2.msra.mxu0 0.0
    %1134 = vmatprep.mubr.f32.mxu0 0.0
    %1135 = vmatmul.mubr.f32.gmra.mxu0 %v1068
    %v1136 = vpop.f32.mrf.mxu0
    %v1137 = vadd.f32 0.0, %v1136
    %v1138 = vpop.f32.mrf.mxu0
    %1139 = vdwg.mxu0
    %v1141 = vrot.slane %v1137, 4
    %v1143 = vadd.f32 %v410, %v1141
    %v1144 = vxor.u32 %v1143, 2147483648
    %v1145 = vmul.f32 %v1144, 1.442695
    %v1146 = vpow.pop %v1145
    %v1147 = vadd.f32 %v1146, 1.0
    %v1148 = vrcp.pop %v1147
    %v1149 = vmul.f32 1.0, %v1148
    %v1150 = vadd.f32 %v1137, %v504
    %v1152 = vrot.slane %v1150, 4
    %1153 = vrot.lane.b32.xlu0 %v1152, 64
    %v1154 = vpop.permute.xlu0 %1153
    %v1156 = vmul.f32 %v1149, %v1154
    %1158 = vrot.lane.b32.xlu0 %v1156, 64
    %v1159 = vpop.permute.xlu0 %1158
    %v1161 = vadd.f32 %v410, %v1159
    %v1162 = vtanh.pop %v1161
    %v1163 = vsub.f32 1.0, %v1149
    %1165 = vrot.lane.b32.xlu0 %v1162, 96
    %v1166 = vpop.permute.xlu0 %1165
    %v1168 = vmul.f32 %v1163, %v1166
    %v1169 = vrot.slane %v1063, 6
    %v1171 = vmul.f32 %v1149, %v1169
    %v1172 = vadd.f32 %v1168, %v1171
    %v1174 = vrot.slane %v1172, 4
    %1175 = vrot.lane.b32.xlu0 %v1174, 96
    %v1176 = vpop.permute.xlu0 %1175
    %v1177 = vsel %vm331, %v1176, 0
    %1179 = vmatprep.subr.mxu0 0.0
    %1180 = vmatpush1.msra.mxu0 0.0
    %1181 = vmatprep.subr.mxu0 0.0
    %1182 = vmatpush1.msra.mxu0 0.0
    %1183 = vmatprep.subr.mxu0 0.0
    %1184 = vmatpush1.msra.mxu0 0.0
    %1185 = vmatprep.subr.mxu0 0.0
    %1186 = vmatpush1.msra.mxu0 0.0
    %1187 = vmatprep.subr.mxu0 0.0
    %1188 = vmatpush1.msra.mxu0 0.0
    %1189 = vmatprep.subr.mxu0 0.0
    %1190 = vmatpush1.msra.mxu0 0.0
    %1191 = vmatprep.subr.mxu0 0.0
    %1192 = vmatpush1.msra.mxu0 0.0
    %1193 = vmatprep.subr.mxu0 0.0
    %1194 = vmatpush1.msra.mxu0 0.0
    %1195 = vmatprep.subr.mxu0 0.0
    %1196 = vmatpush1.msra.mxu0 0.0
    %1197 = vmatprep.subr.mxu0 0.0
    %1198 = vmatpush1.msra.mxu0 0.0
    %1199 = vmatprep.subr.mxu0 0.0
    %1200 = vmatpush1.msra.mxu0 0.0
    %1201 = vmatprep.subr.mxu0 0.0
    %1202 = vmatpush1.msra.mxu0 0.0
    %1203 = vmatprep.subr.mxu0 0.0
    %1204 = vmatpush1.msra.mxu0 %v416
    %1205 = vmatprep.subr.mxu0 0.0
    %1206 = vmatpush1.msra.mxu0 %v415
    %1207 = vmatprep.subr.mxu0 0.0
    %1208 = vmatpush1.msra.mxu0 %v414
    %1209 = vmatprep.subr.mxu0 0.0
    %1210 = vmatpush1.msra.mxu0 %v413
    %1211 = vmatprep.subr.mxu0 0.0
    %1212 = vmatpush2.msra.mxu0 0.0
    %1213 = vmatprep.subr.mxu0 0.0
    %1214 = vmatpush2.msra.mxu0 0.0
    %1215 = vmatprep.subr.mxu0 0.0
    %1216 = vmatpush2.msra.mxu0 0.0
    %1217 = vmatprep.subr.mxu0 0.0
    %1218 = vmatpush2.msra.mxu0 0.0
    %1219 = vmatprep.subr.mxu0 0.0
    %1220 = vmatpush2.msra.mxu0 0.0
    %1221 = vmatprep.subr.mxu0 0.0
    %1222 = vmatpush2.msra.mxu0 0.0
    %1223 = vmatprep.subr.mxu0 0.0
    %1224 = vmatpush2.msra.mxu0 0.0
    %1225 = vmatprep.subr.mxu0 0.0
    %1226 = vmatpush2.msra.mxu0 0.0
    %1227 = vmatprep.subr.mxu0 0.0
    %1228 = vmatpush2.msra.mxu0 0.0
    %1229 = vmatprep.subr.mxu0 0.0
    %1230 = vmatpush2.msra.mxu0 0.0
    %1231 = vmatprep.subr.mxu0 0.0
    %1232 = vmatpush2.msra.mxu0 0.0
    %1233 = vmatprep.subr.mxu0 0.0
    %1234 = vmatpush2.msra.mxu0 0.0
    %1235 = vmatprep.subr.mxu0 0.0
    %1236 = vmatpush2.msra.mxu0 0.0
    %1237 = vmatprep.subr.mxu0 0.0
    %1238 = vmatpush2.msra.mxu0 0.0
    %1239 = vmatprep.subr.mxu0 0.0
    %1240 = vmatpush2.msra.mxu0 0.0
    %1241 = vmatprep.subr.mxu0 0.0
    %1242 = vmatpush2.msra.mxu0 0.0
    %1243 = vmatprep.mubr.f32.mxu0 0.0
    %1244 = vmatmul.mubr.f32.gmra.mxu0 %v1177
    %v1245 = vpop.f32.mrf.mxu0
    %v1246 = vadd.f32 0.0, %v1245
    %v1247 = vpop.f32.mrf.mxu0
    %1248 = vdwg.mxu0
    %v1250 = vrot.slane %v1246, 2
    %v1252 = vadd.f32 %v410, %v1250
    %v1253 = vxor.u32 %v1252, 2147483648
    %v1254 = vmul.f32 %v1253, 1.442695
    %v1255 = vpow.pop %v1254
    %v1256 = vadd.f32 %v1255, 1.0
    %v1257 = vrcp.pop %v1256
    %v1258 = vmul.f32 1.0, %v1257
    %v1259 = vadd.f32 %v1246, %v504
    %v1261 = vrot.slane %v1259, 2
    %1262 = vrot.lane.b32.xlu0 %v1261, 64
    %v1263 = vpop.permute.xlu0 %1262
    %v1265 = vmul.f32 %v1258, %v1263
    %1267 = vrot.lane.b32.xlu0 %v1265, 64
    %v1268 = vpop.permute.xlu0 %1267
    %v1270 = vadd.f32 %v410, %v1268
    %v1271 = vtanh.pop %v1270
    %v1272 = vsub.f32 1.0, %v1258
    %1274 = vrot.lane.b32.xlu0 %v1271, 96
    %v1275 = vpop.permute.xlu0 %1274
    %v1277 = vmul.f32 %v1272, %v1275
    %v1278 = vrot.slane %v1172, 6
    %v1280 = vmul.f32 %v1258, %v1278
    %v1281 = vadd.f32 %v1277, %v1280
    %v1282 = vld [vmem:[%s11] sm:$0x1]
    %v1283 = vld [vmem:[#allocation13] sm:$0xff]
    %v1284 = vld [vmem:[#allocation13 + $0x8] sm:$0xff]
    %v1285 = vld [vmem:[#allocation13 + $0x10] sm:$0xff]
    %v1286 = vld [vmem:[#allocation13 + $0x18] sm:$0xff]
    %v1288 = vlaneseq
    %v1289 = vshrl.u32 %v1288, 7
    %v1290 = vsub.s32 0, %v1289
    %v1291 = vrot.slane %v1282, %v1290
    %v1294 = vsel %vm331, %v318, 0
    %v1297 = vsel %vm331, %v319, 0
    %1299 = vmatprep.subr.mxu0 0.0
    %1300 = vmatpush1.msra.mxu0 0.0
    %1301 = vmatprep.subr.mxu0 0.0
    %1302 = vmatpush1.msra.mxu0 0.0
    %1303 = vmatprep.subr.mxu0 0.0
    %1304 = vmatpush1.msra.mxu0 0.0
    %1305 = vmatprep.subr.mxu0 0.0
    %1306 = vmatpush1.msra.mxu0 0.0
    %1307 = vmatprep.subr.mxu0 0.0
    %1308 = vmatpush1.msra.mxu0 0.0
    %1309 = vmatprep.subr.mxu0 0.0
    %1310 = vmatpush1.msra.mxu0 0.0
    %1311 = vmatprep.subr.mxu0 0.0
    %1312 = vmatpush1.msra.mxu0 0.0
    %1313 = vmatprep.subr.mxu0 0.0
    %1314 = vmatpush1.msra.mxu0 0.0
    %1315 = vmatprep.subr.mxu0 0.0
    %1316 = vmatpush1.msra.mxu0 0.0
    %1317 = vmatprep.subr.mxu0 0.0
    %1318 = vmatpush1.msra.mxu0 0.0
    %1319 = vmatprep.subr.mxu0 0.0
    %1320 = vmatpush1.msra.mxu0 0.0
    %1321 = vmatprep.subr.mxu0 0.0
    %1322 = vmatpush1.msra.mxu0 0.0
    %1323 = vmatprep.subr.mxu0 0.0
    %1324 = vmatpush1.msra.mxu0 %v1286
    %1325 = vmatprep.subr.mxu0 0.0
    %1326 = vmatpush1.msra.mxu0 %v1285
    %1327 = vmatprep.subr.mxu0 0.0
    %1328 = vmatpush1.msra.mxu0 %v1284
    %1329 = vmatprep.subr.mxu0 0.0
    %1330 = vmatpush1.msra.mxu0 %v1283
    %1331 = vmatprep.subr.mxu0 0.0
    %1332 = vmatpush2.msra.mxu0 0.0
    %1333 = vmatprep.subr.mxu0 0.0
    %1334 = vmatpush2.msra.mxu0 0.0
    %1335 = vmatprep.subr.mxu0 0.0
    %1336 = vmatpush2.msra.mxu0 0.0
    %1337 = vmatprep.subr.mxu0 0.0
    %1338 = vmatpush2.msra.mxu0 0.0
    %1339 = vmatprep.subr.mxu0 0.0
    %1340 = vmatpush2.msra.mxu0 0.0
    %1341 = vmatprep.subr.mxu0 0.0
    %1342 = vmatpush2.msra.mxu0 0.0
    %1343 = vmatprep.subr.mxu0 0.0
    %1344 = vmatpush2.msra.mxu0 0.0
    %1345 = vmatprep.subr.mxu0 0.0
    %1346 = vmatpush2.msra.mxu0 0.0
    %1347 = vmatprep.subr.mxu0 0.0
    %1348 = vmatpush2.msra.mxu0 0.0
    %1349 = vmatprep.subr.mxu0 0.0
    %1350 = vmatpush2.msra.mxu0 0.0
    %1351 = vmatprep.subr.mxu0 0.0
    %1352 = vmatpush2.msra.mxu0 0.0
    %1353 = vmatprep.subr.mxu0 0.0
    %1354 = vmatpush2.msra.mxu0 0.0
    %1355 = vmatprep.subr.mxu0 0.0
    %1356 = vmatpush2.msra.mxu0 0.0
    %1357 = vmatprep.subr.mxu0 0.0
    %1358 = vmatpush2.msra.mxu0 0.0
    %1359 = vmatprep.subr.mxu0 0.0
    %1360 = vmatpush2.msra.mxu0 0.0
    %1361 = vmatprep.subr.mxu0 0.0
    %1362 = vmatpush2.msra.mxu0 0.0
    %1363 = vmatprep.mubr.f32.mxu0 0.0
    %1364 = vmatmul.mubr.f32.gmra.mxu0 %v1294
    %v1365 = vpop.f32.mrf.mxu0
    %v1366 = vadd.f32 %v1291, %v1365
    %v1367 = vpop.f32.mrf.mxu0
    %1368 = vmatprep.mubr.f32.mxu0 0.0
    %1369 = vmatmul.mubr.f32.gmra.mxu0 %v1297
    %v1370 = vpop.f32.mrf.mxu0
    %v1371 = vadd.f32 %v1291, %v1370
    %v1372 = vpop.f32.mrf.mxu0
    %1373 = vdwg.mxu0
    %v1374 = vld [vmem:[#allocation3] sm:$0x3]
    %v1376 = vrot.slane %v1374, 2
    %1377 = vrot.lane.b32.xlu0 %v1376, 32
    %v1378 = vpop.permute.xlu0 %1377
    %v1380 = vadd.f32 %v1281, %v1378
    %v1381 = vld [vmem:[%s10] sm:$0xff]
    %v1382 = vld [vmem:[%s10 + $0x8] sm:$0xff]
    %v1383 = vld [vmem:[%s10 + $0x10] sm:$0xff]
    %v1384 = vld [vmem:[%s10 + $0x18] sm:$0xff]
    %v1385 = vld [vmem:[%s12] sm:$0x1]
    %v1387 = vrot.slane %v1380, 6
    %1388 = vrot.lane.b32.xlu0 %v1387, 96
    %v1389 = vpop.permute.xlu0 %1388
    %v1390 = vsel %vm331, %v1389, 0
    %1392 = vmatprep.subr.mxu0 0.0
    %1393 = vmatpush1.msra.mxu0 0.0
    %1394 = vmatprep.subr.mxu0 0.0
    %1395 = vmatpush1.msra.mxu0 0.0
    %1396 = vmatprep.subr.mxu0 0.0
    %1397 = vmatpush1.msra.mxu0 0.0
    %1398 = vmatprep.subr.mxu0 0.0
    %1399 = vmatpush1.msra.mxu0 0.0
    %1400 = vmatprep.subr.mxu0 0.0
    %1401 = vmatpush1.msra.mxu0 0.0
    %1402 = vmatprep.subr.mxu0 0.0
    %1403 = vmatpush1.msra.mxu0 0.0
    %1404 = vmatprep.subr.mxu0 0.0
    %1405 = vmatpush1.msra.mxu0 0.0
    %1406 = vmatprep.subr.mxu0 0.0
    %1407 = vmatpush1.msra.mxu0 0.0
    %1408 = vmatprep.subr.mxu0 0.0
    %1409 = vmatpush1.msra.mxu0 0.0
    %1410 = vmatprep.subr.mxu0 0.0
    %1411 = vmatpush1.msra.mxu0 0.0
    %1412 = vmatprep.subr.mxu0 0.0
    %1413 = vmatpush1.msra.mxu0 0.0
    %1414 = vmatprep.subr.mxu0 0.0
    %1415 = vmatpush1.msra.mxu0 0.0
    %1416 = vmatprep.subr.mxu0 0.0
    %1417 = vmatpush1.msra.mxu0 %v1384
    %1418 = vmatprep.subr.mxu0 0.0
    %1419 = vmatpush1.msra.mxu0 %v1383
    %1420 = vmatprep.subr.mxu0 0.0
    %1421 = vmatpush1.msra.mxu0 %v1382
    %1422 = vmatprep.subr.mxu0 0.0
    %1423 = vmatpush1.msra.mxu0 %v1381
    %1424 = vmatprep.subr.mxu0 0.0
    %1425 = vmatpush2.msra.mxu0 0.0
    %1426 = vmatprep.subr.mxu0 0.0
    %1427 = vmatpush2.msra.mxu0 0.0
    %1428 = vmatprep.subr.mxu0 0.0
    %1429 = vmatpush2.msra.mxu0 0.0
    %1430 = vmatprep.subr.mxu0 0.0
    %1431 = vmatpush2.msra.mxu0 0.0
    %1432 = vmatprep.subr.mxu0 0.0
    %1433 = vmatpush2.msra.mxu0 0.0
    %1434 = vmatprep.subr.mxu0 0.0
    %1435 = vmatpush2.msra.mxu0 0.0
    %1436 = vmatprep.subr.mxu0 0.0
    %1437 = vmatpush2.msra.mxu0 0.0
    %1438 = vmatprep.subr.mxu0 0.0
    %1439 = vmatpush2.msra.mxu0 0.0
    %1440 = vmatprep.subr.mxu0 0.0
    %1441 = vmatpush2.msra.mxu0 0.0
    %1442 = vmatprep.subr.mxu0 0.0
    %1443 = vmatpush2.msra.mxu0 0.0
    %1444 = vmatprep.subr.mxu0 0.0
    %1445 = vmatpush2.msra.mxu0 0.0
    %1446 = vmatprep.subr.mxu0 0.0
    %1447 = vmatpush2.msra.mxu0 0.0
    %1448 = vmatprep.subr.mxu0 0.0
    %1449 = vmatpush2.msra.mxu0 0.0
    %1450 = vmatprep.subr.mxu0 0.0
    %1451 = vmatpush2.msra.mxu0 0.0
    %1452 = vmatprep.subr.mxu0 0.0
    %1453 = vmatpush2.msra.mxu0 0.0
    %1454 = vmatprep.subr.mxu0 0.0
    %1455 = vmatpush2.msra.mxu0 0.0
    %1456 = vmatprep.mubr.f32.mxu0 0.0
    %1457 = vmatmul.mubr.f32.gmra.mxu0 %v1390
    %v1458 = vpop.f32.mrf.mxu0
    %v1459 = vadd.f32 0.0, %v1458
    %v1460 = vpop.f32.mrf.mxu0
    %1461 = vdwg.mxu0
    %v1462 = vadd.f32 %v1291, %v1459
    %v1463 = vxor.u32 %v1462, 2147483648
    %v1464 = vmul.f32 %v1463, 1.442695
    %v1465 = vpow.pop %v1464
    %v1466 = vadd.f32 %v1465, 1.0
    %v1467 = vrcp.pop %v1466
    %v1468 = vmul.f32 1.0, %v1467
    %v1470 = vlaneseq
    %v1471 = vshrl.u32 %v1470, 7
    %v1472 = vsub.s32 0, %v1471
    %v1473 = vrot.slane %v1385, %v1472
    %1474 = vrot.lane.b32.xlu0 %v1473, 64
    %v1475 = vpop.permute.xlu0 %1474
    %v1477 = vadd.f32 %v1459, %v1475
    %1479 = vrot.lane.b32.xlu0 %v1477, 64
    %v1480 = vpop.permute.xlu0 %1479
    %v1482 = vmul.f32 %v1468, %v1480
    %1484 = vrot.lane.b32.xlu0 %v1482, 64
    %v1485 = vpop.permute.xlu0 %1484
    %v1487 = vadd.f32 %v1291, %v1485
    %v1488 = vtanh.pop %v1487
    %v1489 = vsub.f32 1.0, %v1468
    %1491 = vrot.lane.b32.xlu0 %v1488, 96
    %v1492 = vpop.permute.xlu0 %1491
    %v1494 = vmul.f32 %v1489, %v1492
    %v1496 = vmul.f32 %v1468, %v1387
    %v1497 = vadd.f32 %v1494, %v1496
    %1499 = vrot.lane.b32.xlu0 %v1497, 96
    %v1500 = vpop.permute.xlu0 %1499
    %vm1502 = vcmask 254976
    %1503 = vst.msk [vmem:[#allocation2] sm:$0x3] %vm1502, %v1500
    %v1504 = vsel %vm331, %v1500, 0
    %1506 = vmatprep.subr.mxu0 0.0
    %1507 = vmatpush1.msra.mxu0 0.0
    %1508 = vmatprep.subr.mxu0 0.0
    %1509 = vmatpush1.msra.mxu0 0.0
    %1510 = vmatprep.subr.mxu0 0.0
    %1511 = vmatpush1.msra.mxu0 0.0
    %1512 = vmatprep.subr.mxu0 0.0
    %1513 = vmatpush1.msra.mxu0 0.0
    %1514 = vmatprep.subr.mxu0 0.0
    %1515 = vmatpush1.msra.mxu0 0.0
    %1516 = vmatprep.subr.mxu0 0.0
    %1517 = vmatpush1.msra.mxu0 0.0
    %1518 = vmatprep.subr.mxu0 0.0
    %1519 = vmatpush1.msra.mxu0 0.0
    %1520 = vmatprep.subr.mxu0 0.0
    %1521 = vmatpush1.msra.mxu0 0.0
    %1522 = vmatprep.subr.mxu0 0.0
    %1523 = vmatpush1.msra.mxu0 0.0
    %1524 = vmatprep.subr.mxu0 0.0
    %1525 = vmatpush1.msra.mxu0 0.0
    %1526 = vmatprep.subr.mxu0 0.0
    %1527 = vmatpush1.msra.mxu0 0.0
    %1528 = vmatprep.subr.mxu0 0.0
    %1529 = vmatpush1.msra.mxu0 0.0
    %1530 = vmatprep.subr.mxu0 0.0
    %1531 = vmatpush1.msra.mxu0 %v1384
    %1532 = vmatprep.subr.mxu0 0.0
    %1533 = vmatpush1.msra.mxu0 %v1383
    %1534 = vmatprep.subr.mxu0 0.0
    %1535 = vmatpush1.msra.mxu0 %v1382
    %1536 = vmatprep.subr.mxu0 0.0
    %1537 = vmatpush1.msra.mxu0 %v1381
    %1538 = vmatprep.subr.mxu0 0.0
    %1539 = vmatpush2.msra.mxu0 0.0
    %1540 = vmatprep.subr.mxu0 0.0
    %1541 = vmatpush2.msra.mxu0 0.0
    %1542 = vmatprep.subr.mxu0 0.0
    %1543 = vmatpush2.msra.mxu0 0.0
    %1544 = vmatprep.subr.mxu0 0.0
    %1545 = vmatpush2.msra.mxu0 0.0
    %1546 = vmatprep.subr.mxu0 0.0
    %1547 = vmatpush2.msra.mxu0 0.0
    %1548 = vmatprep.subr.mxu0 0.0
    %1549 = vmatpush2.msra.mxu0 0.0
    %1550 = vmatprep.subr.mxu0 0.0
    %1551 = vmatpush2.msra.mxu0 0.0
    %1552 = vmatprep.subr.mxu0 0.0
    %1553 = vmatpush2.msra.mxu0 0.0
    %1554 = vmatprep.subr.mxu0 0.0
    %1555 = vmatpush2.msra.mxu0 0.0
    %1556 = vmatprep.subr.mxu0 0.0
    %1557 = vmatpush2.msra.mxu0 0.0
    %1558 = vmatprep.subr.mxu0 0.0
    %1559 = vmatpush2.msra.mxu0 0.0
    %1560 = vmatprep.subr.mxu0 0.0
    %1561 = vmatpush2.msra.mxu0 0.0
    %1562 = vmatprep.subr.mxu0 0.0
    %1563 = vmatpush2.msra.mxu0 0.0
    %1564 = vmatprep.subr.mxu0 0.0
    %1565 = vmatpush2.msra.mxu0 0.0
    %1566 = vmatprep.subr.mxu0 0.0
    %1567 = vmatpush2.msra.mxu0 0.0
    %1568 = vmatprep.subr.mxu0 0.0
    %1569 = vmatpush2.msra.mxu0 0.0
    %1570 = vmatprep.mubr.f32.mxu0 0.0
    %1571 = vmatmul.mubr.f32.gmra.mxu0 %v1504
    %v1572 = vpop.f32.mrf.mxu0
    %v1573 = vadd.f32 0.0, %v1572
    %v1574 = vpop.f32.mrf.mxu0
    %1575 = vdwg.mxu0
    %v1576 = vadd.f32 %v1366, %v1573
    %v1577 = vxor.u32 %v1576, 2147483648
    %v1578 = vmul.f32 %v1577, 1.442695
    %v1579 = vpow.pop %v1578
    %v1580 = vadd.f32 %v1579, 1.0
    %v1581 = vrcp.pop %v1580
    %v1582 = vmul.f32 1.0, %v1581
    %v1583 = vadd.f32 %v1573, %v1475
    %1585 = vrot.lane.b32.xlu0 %v1583, 64
    %v1586 = vpop.permute.xlu0 %1585
    %v1588 = vmul.f32 %v1582, %v1586
    %1590 = vrot.lane.b32.xlu0 %v1588, 64
    %v1591 = vpop.permute.xlu0 %1590
    %v1593 = vadd.f32 %v1366, %v1591
    %v1594 = vtanh.pop %v1593
    %v1595 = vsub.f32 1.0, %v1582
    %1597 = vrot.lane.b32.xlu0 %v1594, 96
    %v1598 = vpop.permute.xlu0 %1597
    %v1600 = vmul.f32 %v1595, %v1598
    %v1601 = vmul.f32 %v1582, %v1497
    %v1602 = vadd.f32 %v1600, %v1601
    %1604 = vrot.lane.b32.xlu0 %v1602, 96
    %v1605 = vpop.permute.xlu0 %1604
    %1607 = vst.msk [vmem:[#allocation2 + $0x2] sm:$0x3] %vm1502, %v1605
    %v1608 = vsel %vm331, %v1605, 0
    %1610 = vmatprep.subr.mxu0 0.0
    %1611 = vmatpush1.msra.mxu0 0.0
    %1612 = vmatprep.subr.mxu0 0.0
    %1613 = vmatpush1.msra.mxu0 0.0
    %1614 = vmatprep.subr.mxu0 0.0
    %1615 = vmatpush1.msra.mxu0 0.0
    %1616 = vmatprep.subr.mxu0 0.0
    %1617 = vmatpush1.msra.mxu0 0.0
    %1618 = vmatprep.subr.mxu0 0.0
    %1619 = vmatpush1.msra.mxu0 0.0
    %1620 = vmatprep.subr.mxu0 0.0
    %1621 = vmatpush1.msra.mxu0 0.0
    %1622 = vmatprep.subr.mxu0 0.0
    %1623 = vmatpush1.msra.mxu0 0.0
    %1624 = vmatprep.subr.mxu0 0.0
    %1625 = vmatpush1.msra.mxu0 0.0
    %1626 = vmatprep.subr.mxu0 0.0
    %1627 = vmatpush1.msra.mxu0 0.0
    %1628 = vmatprep.subr.mxu0 0.0
    %1629 = vmatpush1.msra.mxu0 0.0
    %1630 = vmatprep.subr.mxu0 0.0
    %1631 = vmatpush1.msra.mxu0 0.0
    %1632 = vmatprep.subr.mxu0 0.0
    %1633 = vmatpush1.msra.mxu0 0.0
    %1634 = vmatprep.subr.mxu0 0.0
    %1635 = vmatpush1.msra.mxu0 %v1384
    %1636 = vmatprep.subr.mxu0 0.0
    %1637 = vmatpush1.msra.mxu0 %v1383
    %1638 = vmatprep.subr.mxu0 0.0
    %1639 = vmatpush1.msra.mxu0 %v1382
    %1640 = vmatprep.subr.mxu0 0.0
    %1641 = vmatpush1.msra.mxu0 %v1381
    %1642 = vmatprep.subr.mxu0 0.0
    %1643 = vmatpush2.msra.mxu0 0.0
    %1644 = vmatprep.subr.mxu0 0.0
    %1645 = vmatpush2.msra.mxu0 0.0
    %1646 = vmatprep.subr.mxu0 0.0
    %1647 = vmatpush2.msra.mxu0 0.0
    %1648 = vmatprep.subr.mxu0 0.0
    %1649 = vmatpush2.msra.mxu0 0.0
    %1650 = vmatprep.subr.mxu0 0.0
    %1651 = vmatpush2.msra.mxu0 0.0
    %1652 = vmatprep.subr.mxu0 0.0
    %1653 = vmatpush2.msra.mxu0 0.0
    %1654 = vmatprep.subr.mxu0 0.0
    %1655 = vmatpush2.msra.mxu0 0.0
    %1656 = vmatprep.subr.mxu0 0.0
    %1657 = vmatpush2.msra.mxu0 0.0
    %1658 = vmatprep.subr.mxu0 0.0
    %1659 = vmatpush2.msra.mxu0 0.0
    %1660 = vmatprep.subr.mxu0 0.0
    %1661 = vmatpush2.msra.mxu0 0.0
    %1662 = vmatprep.subr.mxu0 0.0
    %1663 = vmatpush2.msra.mxu0 0.0
    %1664 = vmatprep.subr.mxu0 0.0
    %1665 = vmatpush2.msra.mxu0 0.0
    %1666 = vmatprep.subr.mxu0 0.0
    %1667 = vmatpush2.msra.mxu0 0.0
    %1668 = vmatprep.subr.mxu0 0.0
    %1669 = vmatpush2.msra.mxu0 0.0
    %1670 = vmatprep.subr.mxu0 0.0
    %1671 = vmatpush2.msra.mxu0 0.0
    %1672 = vmatprep.subr.mxu0 0.0
    %1673 = vmatpush2.msra.mxu0 0.0
    %1674 = vmatprep.mubr.f32.mxu0 0.0
    %1675 = vmatmul.mubr.f32.gmra.mxu0 %v1608
    %v1676 = vpop.f32.mrf.mxu0
    %v1677 = vadd.f32 0.0, %v1676
    %v1678 = vpop.f32.mrf.mxu0
    %1679 = vdwg.mxu0
    %v1681 = vrot.slane %v1677, 6
    %v1683 = vadd.f32 %v1366, %v1681
    %v1684 = vxor.u32 %v1683, 2147483648
    %v1685 = vmul.f32 %v1684, 1.442695
    %v1686 = vpow.pop %v1685
    %v1687 = vadd.f32 %v1686, 1.0
    %v1688 = vrcp.pop %v1687
    %v1689 = vmul.f32 1.0, %v1688
    %v1690 = vadd.f32 %v1677, %v1475
    %v1692 = vrot.slane %v1690, 6
    %1693 = vrot.lane.b32.xlu0 %v1692, 64
    %v1694 = vpop.permute.xlu0 %1693
    %v1696 = vmul.f32 %v1689, %v1694
    %1698 = vrot.lane.b32.xlu0 %v1696, 64
    %v1699 = vpop.permute.xlu0 %1698
    %v1701 = vadd.f32 %v1366, %v1699
    %v1702 = vtanh.pop %v1701
    %v1703 = vsub.f32 1.0, %v1689
    %1705 = vrot.lane.b32.xlu0 %v1702, 96
    %v1706 = vpop.permute.xlu0 %1705
    %v1708 = vmul.f32 %v1703, %v1706
    %v1709 = vrot.slane %v1602, 6
    %v1711 = vmul.f32 %v1689, %v1709
    %v1712 = vadd.f32 %v1708, %v1711
    %1714 = vrot.lane.b32.xlu0 %v1712, 96
    %v1715 = vpop.permute.xlu0 %1714
    %vm1717 = vcmask 257026
    %1718 = vst.msk [vmem:[#allocation2 + $0x2] sm:$0xc] %vm1717, %v1715
    %v1719 = vrot.slane %v1712, 2
    %1720 = vrot.lane.b32.xlu0 %v1719, 96
    %v1721 = vpop.permute.xlu0 %1720
    %v1722 = vsel %vm331, %v1721, 0
    %1724 = vmatprep.subr.mxu0 0.0
    %1725 = vmatpush1.msra.mxu0 0.0
    %1726 = vmatprep.subr.mxu0 0.0
    %1727 = vmatpush1.msra.mxu0 0.0
    %1728 = vmatprep.subr.mxu0 0.0
    %1729 = vmatpush1.msra.mxu0 0.0
    %1730 = vmatprep.subr.mxu0 0.0
    %1731 = vmatpush1.msra.mxu0 0.0
    %1732 = vmatprep.subr.mxu0 0.0
    %1733 = vmatpush1.msra.mxu0 0.0
    %1734 = vmatprep.subr.mxu0 0.0
    %1735 = vmatpush1.msra.mxu0 0.0
    %1736 = vmatprep.subr.mxu0 0.0
    %1737 = vmatpush1.msra.mxu0 0.0
    %1738 = vmatprep.subr.mxu0 0.0
    %1739 = vmatpush1.msra.mxu0 0.0
    %1740 = vmatprep.subr.mxu0 0.0
    %1741 = vmatpush1.msra.mxu0 0.0
    %1742 = vmatprep.subr.mxu0 0.0
    %1743 = vmatpush1.msra.mxu0 0.0
    %1744 = vmatprep.subr.mxu0 0.0
    %1745 = vmatpush1.msra.mxu0 0.0
    %1746 = vmatprep.subr.mxu0 0.0
    %1747 = vmatpush1.msra.mxu0 0.0
    %1748 = vmatprep.subr.mxu0 0.0
    %1749 = vmatpush1.msra.mxu0 %v1384
    %1750 = vmatprep.subr.mxu0 0.0
    %1751 = vmatpush1.msra.mxu0 %v1383
    %1752 = vmatprep.subr.mxu0 0.0
    %1753 = vmatpush1.msra.mxu0 %v1382
    %1754 = vmatprep.subr.mxu0 0.0
    %1755 = vmatpush1.msra.mxu0 %v1381
    %1756 = vmatprep.subr.mxu0 0.0
    %1757 = vmatpush2.msra.mxu0 0.0
    %1758 = vmatprep.subr.mxu0 0.0
    %1759 = vmatpush2.msra.mxu0 0.0
    %1760 = vmatprep.subr.mxu0 0.0
    %1761 = vmatpush2.msra.mxu0 0.0
    %1762 = vmatprep.subr.mxu0 0.0
    %1763 = vmatpush2.msra.mxu0 0.0
    %1764 = vmatprep.subr.mxu0 0.0
    %1765 = vmatpush2.msra.mxu0 0.0
    %1766 = vmatprep.subr.mxu0 0.0
    %1767 = vmatpush2.msra.mxu0 0.0
    %1768 = vmatprep.subr.mxu0 0.0
    %1769 = vmatpush2.msra.mxu0 0.0
    %1770 = vmatprep.subr.mxu0 0.0
    %1771 = vmatpush2.msra.mxu0 0.0
    %1772 = vmatprep.subr.mxu0 0.0
    %1773 = vmatpush2.msra.mxu0 0.0
    %1774 = vmatprep.subr.mxu0 0.0
    %1775 = vmatpush2.msra.mxu0 0.0
    %1776 = vmatprep.subr.mxu0 0.0
    %1777 = vmatpush2.msra.mxu0 0.0
    %1778 = vmatprep.subr.mxu0 0.0
    %1779 = vmatpush2.msra.mxu0 0.0
    %1780 = vmatprep.subr.mxu0 0.0
    %1781 = vmatpush2.msra.mxu0 0.0
    %1782 = vmatprep.subr.mxu0 0.0
    %1783 = vmatpush2.msra.mxu0 0.0
    %1784 = vmatprep.subr.mxu0 0.0
    %1785 = vmatpush2.msra.mxu0 0.0
    %1786 = vmatprep.subr.mxu0 0.0
    %1787 = vmatpush2.msra.mxu0 0.0
    %1788 = vmatprep.mubr.f32.mxu0 0.0
    %1789 = vmatmul.mubr.f32.gmra.mxu0 %v1722
    %v1790 = vpop.f32.mrf.mxu0
    %v1791 = vadd.f32 0.0, %v1790
    %v1792 = vpop.f32.mrf.mxu0
    %1793 = vdwg.mxu0
    %v1795 = vrot.slane %v1791, 4
    %v1797 = vadd.f32 %v1366, %v1795
    %v1798 = vxor.u32 %v1797, 2147483648
    %v1799 = vmul.f32 %v1798, 1.442695
    %v1800 = vpow.pop %v1799
    %v1801 = vadd.f32 %v1800, 1.0
    %v1802 = vrcp.pop %v1801
    %v1803 = vmul.f32 1.0, %v1802
    %v1804 = vadd.f32 %v1791, %v1475
    %v1806 = vrot.slane %v1804, 4
    %1807 = vrot.lane.b32.xlu0 %v1806, 64
    %v1808 = vpop.permute.xlu0 %1807
    %v1810 = vmul.f32 %v1803, %v1808
    %1812 = vrot.lane.b32.xlu0 %v1810, 64
    %v1813 = vpop.permute.xlu0 %1812
    %v1815 = vadd.f32 %v1366, %v1813
    %v1816 = vtanh.pop %v1815
    %v1817 = vsub.f32 1.0, %v1803
    %1819 = vrot.lane.b32.xlu0 %v1816, 96
    %v1820 = vpop.permute.xlu0 %1819
    %v1822 = vmul.f32 %v1817, %v1820
    %v1823 = vrot.slane %v1712, 6
    %v1825 = vmul.f32 %v1803, %v1823
    %v1826 = vadd.f32 %v1822, %v1825
    %1828 = vrot.lane.b32.xlu0 %v1826, 96
    %v1829 = vpop.permute.xlu0 %1828
    %vm1831 = vcmask 259076
    %1832 = vst.msk [vmem:[#allocation2 + $0x2] sm:$0x30] %vm1831, %v1829
    %v1833 = vrot.slane %v1826, 4
    %1834 = vrot.lane.b32.xlu0 %v1833, 96
    %v1835 = vpop.permute.xlu0 %1834
    %v1836 = vsel %vm331, %v1835, 0
    %1838 = vmatprep.subr.mxu0 0.0
    %1839 = vmatpush1.msra.mxu0 0.0
    %1840 = vmatprep.subr.mxu0 0.0
    %1841 = vmatpush1.msra.mxu0 0.0
    %1842 = vmatprep.subr.mxu0 0.0
    %1843 = vmatpush1.msra.mxu0 0.0
    %1844 = vmatprep.subr.mxu0 0.0
    %1845 = vmatpush1.msra.mxu0 0.0
    %1846 = vmatprep.subr.mxu0 0.0
    %1847 = vmatpush1.msra.mxu0 0.0
    %1848 = vmatprep.subr.mxu0 0.0
    %1849 = vmatpush1.msra.mxu0 0.0
    %1850 = vmatprep.subr.mxu0 0.0
    %1851 = vmatpush1.msra.mxu0 0.0
    %1852 = vmatprep.subr.mxu0 0.0
    %1853 = vmatpush1.msra.mxu0 0.0
    %1854 = vmatprep.subr.mxu0 0.0
    %1855 = vmatpush1.msra.mxu0 0.0
    %1856 = vmatprep.subr.mxu0 0.0
    %1857 = vmatpush1.msra.mxu0 0.0
    %1858 = vmatprep.subr.mxu0 0.0
    %1859 = vmatpush1.msra.mxu0 0.0
    %1860 = vmatprep.subr.mxu0 0.0
    %1861 = vmatpush1.msra.mxu0 0.0
    %1862 = vmatprep.subr.mxu0 0.0
    %1863 = vmatpush1.msra.mxu0 %v1384
    %1864 = vmatprep.subr.mxu0 0.0
    %1865 = vmatpush1.msra.mxu0 %v1383
    %1866 = vmatprep.subr.mxu0 0.0
    %1867 = vmatpush1.msra.mxu0 %v1382
    %1868 = vmatprep.subr.mxu0 0.0
    %1869 = vmatpush1.msra.mxu0 %v1381
    %1870 = vmatprep.subr.mxu0 0.0
    %1871 = vmatpush2.msra.mxu0 0.0
    %1872 = vmatprep.subr.mxu0 0.0
    %1873 = vmatpush2.msra.mxu0 0.0
    %1874 = vmatprep.subr.mxu0 0.0
    %1875 = vmatpush2.msra.mxu0 0.0
    %1876 = vmatprep.subr.mxu0 0.0
    %1877 = vmatpush2.msra.mxu0 0.0
    %1878 = vmatprep.subr.mxu0 0.0
    %1879 = vmatpush2.msra.mxu0 0.0
    %1880 = vmatprep.subr.mxu0 0.0
    %1881 = vmatpush2.msra.mxu0 0.0
    %1882 = vmatprep.subr.mxu0 0.0
    %1883 = vmatpush2.msra.mxu0 0.0
    %1884 = vmatprep.subr.mxu0 0.0
    %1885 = vmatpush2.msra.mxu0 0.0
    %1886 = vmatprep.subr.mxu0 0.0
    %1887 = vmatpush2.msra.mxu0 0.0
    %1888 = vmatprep.subr.mxu0 0.0
    %1889 = vmatpush2.msra.mxu0 0.0
    %1890 = vmatprep.subr.mxu0 0.0
    %1891 = vmatpush2.msra.mxu0 0.0
    %1892 = vmatprep.subr.mxu0 0.0
    %1893 = vmatpush2.msra.mxu0 0.0
    %1894 = vmatprep.subr.mxu0 0.0
    %1895 = vmatpush2.msra.mxu0 0.0
    %1896 = vmatprep.subr.mxu0 0.0
    %1897 = vmatpush2.msra.mxu0 0.0
    %1898 = vmatprep.subr.mxu0 0.0
    %1899 = vmatpush2.msra.mxu0 0.0
    %1900 = vmatprep.subr.mxu0 0.0
    %1901 = vmatpush2.msra.mxu0 0.0
    %1902 = vmatprep.mubr.f32.mxu0 0.0
    %1903 = vmatmul.mubr.f32.gmra.mxu0 %v1836
    %v1904 = vpop.f32.mrf.mxu0
    %v1905 = vadd.f32 0.0, %v1904
    %v1906 = vpop.f32.mrf.mxu0
    %1907 = vdwg.mxu0
    %v1909 = vrot.slane %v1905, 2
    %v1911 = vadd.f32 %v1366, %v1909
    %v1912 = vxor.u32 %v1911, 2147483648
    %v1913 = vmul.f32 %v1912, 1.442695
    %v1914 = vpow.pop %v1913
    %v1915 = vadd.f32 %v1914, 1.0
    %v1916 = vrcp.pop %v1915
    %v1917 = vmul.f32 1.0, %v1916
    %v1918 = vadd.f32 %v1905, %v1475
    %v1920 = vrot.slane %v1918, 2
    %1921 = vrot.lane.b32.xlu0 %v1920, 64
    %v1922 = vpop.permute.xlu0 %1921
    %v1924 = vmul.f32 %v1917, %v1922
    %1926 = vrot.lane.b32.xlu0 %v1924, 64
    %v1927 = vpop.permute.xlu0 %1926
    %v1929 = vadd.f32 %v1366, %v1927
    %v1930 = vtanh.pop %v1929
    %v1931 = vsub.f32 1.0, %v1917
    %1933 = vrot.lane.b32.xlu0 %v1930, 96
    %v1934 = vpop.permute.xlu0 %1933
    %v1936 = vmul.f32 %v1931, %v1934
    %v1937 = vrot.slane %v1826, 6
    %v1939 = vmul.f32 %v1917, %v1937
    %v1940 = vadd.f32 %v1936, %v1939
    %1942 = vrot.lane.b32.xlu0 %v1940, 96
    %v1943 = vpop.permute.xlu0 %1942
    %vm1945 = vcmask 261126
    %1946 = vst.msk [vmem:[#allocation2 + $0x2] sm:$0xc0] %vm1945, %v1943
    %v1947 = vrot.slane %v1940, 6
    %1948 = vrot.lane.b32.xlu0 %v1947, 96
    %v1949 = vpop.permute.xlu0 %1948
    %v1950 = vsel %vm331, %v1949, 0
    %1952 = vmatprep.subr.mxu0 0.0
    %1953 = vmatpush1.msra.mxu0 0.0
    %1954 = vmatprep.subr.mxu0 0.0
    %1955 = vmatpush1.msra.mxu0 0.0
    %1956 = vmatprep.subr.mxu0 0.0
    %1957 = vmatpush1.msra.mxu0 0.0
    %1958 = vmatprep.subr.mxu0 0.0
    %1959 = vmatpush1.msra.mxu0 0.0
    %1960 = vmatprep.subr.mxu0 0.0
    %1961 = vmatpush1.msra.mxu0 0.0
    %1962 = vmatprep.subr.mxu0 0.0
    %1963 = vmatpush1.msra.mxu0 0.0
    %1964 = vmatprep.subr.mxu0 0.0
    %1965 = vmatpush1.msra.mxu0 0.0
    %1966 = vmatprep.subr.mxu0 0.0
    %1967 = vmatpush1.msra.mxu0 0.0
    %1968 = vmatprep.subr.mxu0 0.0
    %1969 = vmatpush1.msra.mxu0 0.0
    %1970 = vmatprep.subr.mxu0 0.0
    %1971 = vmatpush1.msra.mxu0 0.0
    %1972 = vmatprep.subr.mxu0 0.0
    %1973 = vmatpush1.msra.mxu0 0.0
    %1974 = vmatprep.subr.mxu0 0.0
    %1975 = vmatpush1.msra.mxu0 0.0
    %1976 = vmatprep.subr.mxu0 0.0
    %1977 = vmatpush1.msra.mxu0 %v1384
    %1978 = vmatprep.subr.mxu0 0.0
    %1979 = vmatpush1.msra.mxu0 %v1383
    %1980 = vmatprep.subr.mxu0 0.0
    %1981 = vmatpush1.msra.mxu0 %v1382
    %1982 = vmatprep.subr.mxu0 0.0
    %1983 = vmatpush1.msra.mxu0 %v1381
    %1984 = vmatprep.subr.mxu0 0.0
    %1985 = vmatpush2.msra.mxu0 0.0
    %1986 = vmatprep.subr.mxu0 0.0
    %1987 = vmatpush2.msra.mxu0 0.0
    %1988 = vmatprep.subr.mxu0 0.0
    %1989 = vmatpush2.msra.mxu0 0.0
    %1990 = vmatprep.subr.mxu0 0.0
    %1991 = vmatpush2.msra.mxu0 0.0
    %1992 = vmatprep.subr.mxu0 0.0
    %1993 = vmatpush2.msra.mxu0 0.0
    %1994 = vmatprep.subr.mxu0 0.0
    %1995 = vmatpush2.msra.mxu0 0.0
    %1996 = vmatprep.subr.mxu0 0.0
    %1997 = vmatpush2.msra.mxu0 0.0
    %1998 = vmatprep.subr.mxu0 0.0
    %1999 = vmatpush2.msra.mxu0 0.0
    %2000 = vmatprep.subr.mxu0 0.0
    %2001 = vmatpush2.msra.mxu0 0.0
    %2002 = vmatprep.subr.mxu0 0.0
    %2003 = vmatpush2.msra.mxu0 0.0
    %2004 = vmatprep.subr.mxu0 0.0
    %2005 = vmatpush2.msra.mxu0 0.0
    %2006 = vmatprep.subr.mxu0 0.0
    %2007 = vmatpush2.msra.mxu0 0.0
    %2008 = vmatprep.subr.mxu0 0.0
    %2009 = vmatpush2.msra.mxu0 0.0
    %2010 = vmatprep.subr.mxu0 0.0
    %2011 = vmatpush2.msra.mxu0 0.0
    %2012 = vmatprep.subr.mxu0 0.0
    %2013 = vmatpush2.msra.mxu0 0.0
    %2014 = vmatprep.subr.mxu0 0.0
    %2015 = vmatpush2.msra.mxu0 0.0
    %2016 = vmatprep.mubr.f32.mxu0 0.0
    %2017 = vmatmul.mubr.f32.gmra.mxu0 %v1950
    %v2018 = vpop.f32.mrf.mxu0
    %v2019 = vadd.f32 0.0, %v2018
    %v2020 = vpop.f32.mrf.mxu0
    %2021 = vdwg.mxu0
    %v2022 = vadd.f32 %v1371, %v2019
    %v2023 = vxor.u32 %v2022, 2147483648
    %v2024 = vmul.f32 %v2023, 1.442695
    %v2025 = vpow.pop %v2024
    %v2026 = vadd.f32 %v2025, 1.0
    %v2027 = vrcp.pop %v2026
    %v2028 = vmul.f32 1.0, %v2027
    %v2029 = vadd.f32 %v2019, %v1475
    %2031 = vrot.lane.b32.xlu0 %v2029, 64
    %v2032 = vpop.permute.xlu0 %2031
    %v2034 = vmul.f32 %v2028, %v2032
    %2036 = vrot.lane.b32.xlu0 %v2034, 64
    %v2037 = vpop.permute.xlu0 %2036
    %v2039 = vadd.f32 %v1371, %v2037
    %v2040 = vtanh.pop %v2039
    %v2041 = vsub.f32 1.0, %v2028
    %2043 = vrot.lane.b32.xlu0 %v2040, 96
    %v2044 = vpop.permute.xlu0 %2043
    %v2046 = vmul.f32 %v2041, %v2044
    %v2048 = vmul.f32 %v2028, %v1947
    %v2049 = vadd.f32 %v2046, %v2048
    %2051 = vrot.lane.b32.xlu0 %v2049, 96
    %v2052 = vpop.permute.xlu0 %2051
    %2054 = vst.msk [vmem:[#allocation2 + $0xa] sm:$0x3] %vm1502, %v2052
    %v2055 = vsel %vm331, %v2052, 0
    %2057 = vmatprep.subr.mxu0 0.0
    %2058 = vmatpush1.msra.mxu0 0.0
    %2059 = vmatprep.subr.mxu0 0.0
    %2060 = vmatpush1.msra.mxu0 0.0
    %2061 = vmatprep.subr.mxu0 0.0
    %2062 = vmatpush1.msra.mxu0 0.0
    %2063 = vmatprep.subr.mxu0 0.0
    %2064 = vmatpush1.msra.mxu0 0.0
    %2065 = vmatprep.subr.mxu0 0.0
    %2066 = vmatpush1.msra.mxu0 0.0
    %2067 = vmatprep.subr.mxu0 0.0
    %2068 = vmatpush1.msra.mxu0 0.0
    %2069 = vmatprep.subr.mxu0 0.0
    %2070 = vmatpush1.msra.mxu0 0.0
    %2071 = vmatprep.subr.mxu0 0.0
    %2072 = vmatpush1.msra.mxu0 0.0
    %2073 = vmatprep.subr.mxu0 0.0
    %2074 = vmatpush1.msra.mxu0 0.0
    %2075 = vmatprep.subr.mxu0 0.0
    %2076 = vmatpush1.msra.mxu0 0.0
    %2077 = vmatprep.subr.mxu0 0.0
    %2078 = vmatpush1.msra.mxu0 0.0
    %2079 = vmatprep.subr.mxu0 0.0
    %2080 = vmatpush1.msra.mxu0 0.0
    %2081 = vmatprep.subr.mxu0 0.0
    %2082 = vmatpush1.msra.mxu0 %v1384
    %2083 = vmatprep.subr.mxu0 0.0
    %2084 = vmatpush1.msra.mxu0 %v1383
    %2085 = vmatprep.subr.mxu0 0.0
    %2086 = vmatpush1.msra.mxu0 %v1382
    %2087 = vmatprep.subr.mxu0 0.0
    %2088 = vmatpush1.msra.mxu0 %v1381
    %2089 = vmatprep.subr.mxu0 0.0
    %2090 = vmatpush2.msra.mxu0 0.0
    %2091 = vmatprep.subr.mxu0 0.0
    %2092 = vmatpush2.msra.mxu0 0.0
    %2093 = vmatprep.subr.mxu0 0.0
    %2094 = vmatpush2.msra.mxu0 0.0
    %2095 = vmatprep.subr.mxu0 0.0
    %2096 = vmatpush2.msra.mxu0 0.0
    %2097 = vmatprep.subr.mxu0 0.0
    %2098 = vmatpush2.msra.mxu0 0.0
    %2099 = vmatprep.subr.mxu0 0.0
    %2100 = vmatpush2.msra.mxu0 0.0
    %2101 = vmatprep.subr.mxu0 0.0
    %2102 = vmatpush2.msra.mxu0 0.0
    %2103 = vmatprep.subr.mxu0 0.0
    %2104 = vmatpush2.msra.mxu0 0.0
    %2105 = vmatprep.subr.mxu0 0.0
    %2106 = vmatpush2.msra.mxu0 0.0
    %2107 = vmatprep.subr.mxu0 0.0
    %2108 = vmatpush2.msra.mxu0 0.0
    %2109 = vmatprep.subr.mxu0 0.0
    %2110 = vmatpush2.msra.mxu0 0.0
    %2111 = vmatprep.subr.mxu0 0.0
    %2112 = vmatpush2.msra.mxu0 0.0
    %2113 = vmatprep.subr.mxu0 0.0
    %2114 = vmatpush2.msra.mxu0 0.0
    %2115 = vmatprep.subr.mxu0 0.0
    %2116 = vmatpush2.msra.mxu0 0.0
    %2117 = vmatprep.subr.mxu0 0.0
    %2118 = vmatpush2.msra.mxu0 0.0
    %2119 = vmatprep.subr.mxu0 0.0
    %2120 = vmatpush2.msra.mxu0 0.0
    %2121 = vmatprep.mubr.f32.mxu0 0.0
    %2122 = vmatmul.mubr.f32.gmra.mxu0 %v2055
    %v2123 = vpop.f32.mrf.mxu0
    %v2124 = vadd.f32 0.0, %v2123
    %v2125 = vpop.f32.mrf.mxu0
    %2126 = vdwg.mxu0
    %v2128 = vrot.slane %v2124, 6
    %v2130 = vadd.f32 %v1371, %v2128
    %v2131 = vxor.u32 %v2130, 2147483648
    %v2132 = vmul.f32 %v2131, 1.442695
    %v2133 = vpow.pop %v2132
    %v2134 = vadd.f32 %v2133, 1.0
    %v2135 = vrcp.pop %v2134
    %v2136 = vmul.f32 1.0, %v2135
    %v2137 = vadd.f32 %v2124, %v1475
    %v2139 = vrot.slane %v2137, 6
    %2140 = vrot.lane.b32.xlu0 %v2139, 64
    %v2141 = vpop.permute.xlu0 %2140
    %v2143 = vmul.f32 %v2136, %v2141
    %2145 = vrot.lane.b32.xlu0 %v2143, 64
    %v2146 = vpop.permute.xlu0 %2145
    %v2148 = vadd.f32 %v1371, %v2146
    %v2149 = vtanh.pop %v2148
    %v2150 = vsub.f32 1.0, %v2136
    %2152 = vrot.lane.b32.xlu0 %v2149, 96
    %v2153 = vpop.permute.xlu0 %2152
    %v2155 = vmul.f32 %v2150, %v2153
    %v2156 = vrot.slane %v2049, 6
    %v2158 = vmul.f32 %v2136, %v2156
    %v2159 = vadd.f32 %v2155, %v2158
    %2161 = vrot.lane.b32.xlu0 %v2159, 96
    %v2162 = vpop.permute.xlu0 %2161
    %2164 = vst.msk [vmem:[#allocation2 + $0xa] sm:$0xc] %vm1717, %v2162
    %v2165 = vrot.slane %v2159, 2
    %2166 = vrot.lane.b32.xlu0 %v2165, 96
    %v2167 = vpop.permute.xlu0 %2166
    %v2168 = vsel %vm331, %v2167, 0
    %2170 = vmatprep.subr.mxu0 0.0
    %2171 = vmatpush1.msra.mxu0 0.0
    %2172 = vmatprep.subr.mxu0 0.0
    %2173 = vmatpush1.msra.mxu0 0.0
    %2174 = vmatprep.subr.mxu0 0.0
    %2175 = vmatpush1.msra.mxu0 0.0
    %2176 = vmatprep.subr.mxu0 0.0
    %2177 = vmatpush1.msra.mxu0 0.0
    %2178 = vmatprep.subr.mxu0 0.0
    %2179 = vmatpush1.msra.mxu0 0.0
    %2180 = vmatprep.subr.mxu0 0.0
    %2181 = vmatpush1.msra.mxu0 0.0
    %2182 = vmatprep.subr.mxu0 0.0
    %2183 = vmatpush1.msra.mxu0 0.0
    %2184 = vmatprep.subr.mxu0 0.0
    %2185 = vmatpush1.msra.mxu0 0.0
    %2186 = vmatprep.subr.mxu0 0.0
    %2187 = vmatpush1.msra.mxu0 0.0
    %2188 = vmatprep.subr.mxu0 0.0
    %2189 = vmatpush1.msra.mxu0 0.0
    %2190 = vmatprep.subr.mxu0 0.0
    %2191 = vmatpush1.msra.mxu0 0.0
    %2192 = vmatprep.subr.mxu0 0.0
    %2193 = vmatpush1.msra.mxu0 0.0
    %2194 = vmatprep.subr.mxu0 0.0
    %2195 = vmatpush1.msra.mxu0 %v1384
    %2196 = vmatprep.subr.mxu0 0.0
    %2197 = vmatpush1.msra.mxu0 %v1383
    %2198 = vmatprep.subr.mxu0 0.0
    %2199 = vmatpush1.msra.mxu0 %v1382
    %2200 = vmatprep.subr.mxu0 0.0
    %2201 = vmatpush1.msra.mxu0 %v1381
    %2202 = vmatprep.subr.mxu0 0.0
    %2203 = vmatpush2.msra.mxu0 0.0
    %2204 = vmatprep.subr.mxu0 0.0
    %2205 = vmatpush2.msra.mxu0 0.0
    %2206 = vmatprep.subr.mxu0 0.0
    %2207 = vmatpush2.msra.mxu0 0.0
    %2208 = vmatprep.subr.mxu0 0.0
    %2209 = vmatpush2.msra.mxu0 0.0
    %2210 = vmatprep.subr.mxu0 0.0
    %2211 = vmatpush2.msra.mxu0 0.0
    %2212 = vmatprep.subr.mxu0 0.0
    %2213 = vmatpush2.msra.mxu0 0.0
    %2214 = vmatprep.subr.mxu0 0.0
    %2215 = vmatpush2.msra.mxu0 0.0
    %2216 = vmatprep.subr.mxu0 0.0
    %2217 = vmatpush2.msra.mxu0 0.0
    %2218 = vmatprep.subr.mxu0 0.0
    %2219 = vmatpush2.msra.mxu0 0.0
    %2220 = vmatprep.subr.mxu0 0.0
    %2221 = vmatpush2.msra.mxu0 0.0
    %2222 = vmatprep.subr.mxu0 0.0
    %2223 = vmatpush2.msra.mxu0 0.0
    %2224 = vmatprep.subr.mxu0 0.0
    %2225 = vmatpush2.msra.mxu0 0.0
    %2226 = vmatprep.subr.mxu0 0.0
    %2227 = vmatpush2.msra.mxu0 0.0
    %2228 = vmatprep.subr.mxu0 0.0
    %2229 = vmatpush2.msra.mxu0 0.0
    %2230 = vmatprep.subr.mxu0 0.0
    %2231 = vmatpush2.msra.mxu0 0.0
    %2232 = vmatprep.subr.mxu0 0.0
    %2233 = vmatpush2.msra.mxu0 0.0
    %2234 = vmatprep.mubr.f32.mxu0 0.0
    %2235 = vmatmul.mubr.f32.gmra.mxu0 %v2168
    %v2236 = vpop.f32.mrf.mxu0
    %v2237 = vadd.f32 0.0, %v2236
    %v2238 = vpop.f32.mrf.mxu0
    %2239 = vdwg.mxu0
    %v2241 = vrot.slane %v2237, 4
    %v2243 = vadd.f32 %v1371, %v2241
    %v2244 = vxor.u32 %v2243, 2147483648
    %v2245 = vmul.f32 %v2244, 1.442695
    %v2246 = vpow.pop %v2245
    %v2247 = vadd.f32 %v2246, 1.0
    %v2248 = vrcp.pop %v2247
    %v2249 = vmul.f32 1.0, %v2248
    %v2250 = vadd.f32 %v2237, %v1475
    %v2252 = vrot.slane %v2250, 4
    %2253 = vrot.lane.b32.xlu0 %v2252, 64
    %v2254 = vpop.permute.xlu0 %2253
    %v2256 = vmul.f32 %v2249, %v2254
    %2258 = vrot.lane.b32.xlu0 %v2256, 64
    %v2259 = vpop.permute.xlu0 %2258
    %v2261 = vadd.f32 %v1371, %v2259
    %v2262 = vtanh.pop %v2261
    %v2263 = vsub.f32 1.0, %v2249
    %2265 = vrot.lane.b32.xlu0 %v2262, 96
    %v2266 = vpop.permute.xlu0 %2265
    %v2268 = vmul.f32 %v2263, %v2266
    %v2269 = vrot.slane %v2159, 6
    %v2271 = vmul.f32 %v2249, %v2269
    %v2272 = vadd.f32 %v2268, %v2271
    %2274 = vrot.lane.b32.xlu0 %v2272, 96
    %v2275 = vpop.permute.xlu0 %2274
    %2277 = vst.msk [vmem:[#allocation2 + $0xa] sm:$0x30] %vm1831, %v2275
    %v2278 = vld [vmem:[#allocation2] sm:$0xff]
    %v2279 = vld [vmem:[#allocation2 + $0x8] sm:$0xff]
    %v2280 = vld [vmem:[%s13] sm:$0xff]
    %v2281 = vld [vmem:[%s13 + $0x8] sm:$0xff]
    %v2282 = vld [vmem:[%s13 + $0x10] sm:$0xff]
    %v2283 = vld [vmem:[%s13 + $0x18] sm:$0xff]
    %v2284 = vld [vmem:[%s14] sm:$0x1]
    %v2286 = vlaneseq
    %v2287 = vshrl.u32 %v2286, 7
    %v2288 = vsub.s32 0, %v2287
    %v2289 = vrot.slane %v2284, %v2288
    %v2292 = vsel %vm331, %v2278, 0
    %v2295 = vsel %vm331, %v2279, 0
    %2297 = vmatprep.subr.mxu0 0.0
    %2298 = vmatpush1.msra.mxu0 0.0
    %2299 = vmatprep.subr.mxu0 0.0
    %2300 = vmatpush1.msra.mxu0 0.0
    %2301 = vmatprep.subr.mxu0 0.0
    %2302 = vmatpush1.msra.mxu0 0.0
    %2303 = vmatprep.subr.mxu0 0.0
    %2304 = vmatpush1.msra.mxu0 0.0
    %2305 = vmatprep.subr.mxu0 0.0
    %2306 = vmatpush1.msra.mxu0 0.0
    %2307 = vmatprep.subr.mxu0 0.0
    %2308 = vmatpush1.msra.mxu0 0.0
    %2309 = vmatprep.subr.mxu0 0.0
    %2310 = vmatpush1.msra.mxu0 0.0
    %2311 = vmatprep.subr.mxu0 0.0
    %2312 = vmatpush1.msra.mxu0 0.0
    %2313 = vmatprep.subr.mxu0 0.0
    %2314 = vmatpush1.msra.mxu0 0.0
    %2315 = vmatprep.subr.mxu0 0.0
    %2316 = vmatpush1.msra.mxu0 0.0
    %2317 = vmatprep.subr.mxu0 0.0
    %2318 = vmatpush1.msra.mxu0 0.0
    %2319 = vmatprep.subr.mxu0 0.0
    %2320 = vmatpush1.msra.mxu0 0.0
    %2321 = vmatprep.subr.mxu0 0.0
    %2322 = vmatpush1.msra.mxu0 %v2283
    %2323 = vmatprep.subr.mxu0 0.0
    %2324 = vmatpush1.msra.mxu0 %v2282
    %2325 = vmatprep.subr.mxu0 0.0
    %2326 = vmatpush1.msra.mxu0 %v2281
    %2327 = vmatprep.subr.mxu0 0.0
    %2328 = vmatpush1.msra.mxu0 %v2280
    %2329 = vmatprep.subr.mxu0 0.0
    %2330 = vmatpush2.msra.mxu0 0.0
    %2331 = vmatprep.subr.mxu0 0.0
    %2332 = vmatpush2.msra.mxu0 0.0
    %2333 = vmatprep.subr.mxu0 0.0
    %2334 = vmatpush2.msra.mxu0 0.0
    %2335 = vmatprep.subr.mxu0 0.0
    %2336 = vmatpush2.msra.mxu0 0.0
    %2337 = vmatprep.subr.mxu0 0.0
    %2338 = vmatpush2.msra.mxu0 0.0
    %2339 = vmatprep.subr.mxu0 0.0
    %2340 = vmatpush2.msra.mxu0 0.0
    %2341 = vmatprep.subr.mxu0 0.0
    %2342 = vmatpush2.msra.mxu0 0.0
    %2343 = vmatprep.subr.mxu0 0.0
    %2344 = vmatpush2.msra.mxu0 0.0
    %2345 = vmatprep.subr.mxu0 0.0
    %2346 = vmatpush2.msra.mxu0 0.0
    %2347 = vmatprep.subr.mxu0 0.0
    %2348 = vmatpush2.msra.mxu0 0.0
    %2349 = vmatprep.subr.mxu0 0.0
    %2350 = vmatpush2.msra.mxu0 0.0
    %2351 = vmatprep.subr.mxu0 0.0
    %2352 = vmatpush2.msra.mxu0 0.0
    %2353 = vmatprep.subr.mxu0 0.0
    %2354 = vmatpush2.msra.mxu0 0.0
    %2355 = vmatprep.subr.mxu0 0.0
    %2356 = vmatpush2.msra.mxu0 0.0
    %2357 = vmatprep.subr.mxu0 0.0
    %2358 = vmatpush2.msra.mxu0 0.0
    %2359 = vmatprep.subr.mxu0 0.0
    %2360 = vmatpush2.msra.mxu0 0.0
    %2361 = vmatprep.mubr.f32.mxu0 0.0
    %2362 = vmatmul.mubr.f32.gmra.mxu0 %v2292
    %v2363 = vpop.f32.mrf.mxu0
    %v2364 = vadd.f32 %v2289, %v2363
    %v2365 = vpop.f32.mrf.mxu0
    %2366 = vmatprep.mubr.f32.mxu0 0.0
    %2367 = vmatmul.mubr.f32.gmra.mxu0 %v2295
    %v2368 = vpop.f32.mrf.mxu0
    %v2369 = vadd.f32 %v2289, %v2368
    %v2370 = vpop.f32.mrf.mxu0
    %2371 = vdwg.mxu0
    %2372 = vst.msk [vmem:[%s15] sm:$0xff] %vm147, %v2364
    %2373 = vst.msk [vmem:[%s15 + $0x8] sm:$0xff] %vm147, %v2369
    // Predicated region
    $region90: #{netg_forward.1} parent=1 // pred_check
      _
    $region91: #{netg_forward.1} parent=1 // pred_check_branch
      %2375 = sbr.rel (0) target = $region93
    $region92: #{netg_forward.1} parent=1 // pred_region
      _
    $region93: #{netg_forward.1} parent=1 // pred_fallthru
      _
    // Predicated region
    $region94: #{netg_forward.1} parent=1 // pred_check
      _
    $region95: #{netg_forward.1} parent=1 // pred_check_branch
      %2377 = sbr.rel (0) target = $region97
    $region96: #{netg_forward.1} parent=1 // pred_region
      _
    $region97: #{netg_forward.1} parent=1 // pred_fallthru
      _
    %2378 = vsyncpa [#allocation4], 1
    %2379 = vsyncpa [#allocation6], 1
    %2380 = vsyncpa [#allocation9], 1
    %2381 = vsyncpa [#allocation12], 1

</llo_original>
